<compile_context>
chip_gen: v7x
topology: tpu7x:2x2x1
jax: 0.10.0
libtpu: 0.0.40
codegen_flags: <defaults>
</compile_context>

<pallas_src>
import numpy as np
import jax
import jax.numpy as jnp
from jax.experimental import pallas as pl
from jax.experimental.pallas import tpu as pltpu

# ---- static problem sizes implied by the module -----------------------------
H_IN = 32                        # input spatial size (forced by Linear(1350, 10))
K = 3                            # conv kernel size
C_OUT = 6                        # conv output channels
H_CONV = H_IN - K + 1            # 30
H_POOL = H_CONV // 2             # 15
FC_IN = C_OUT * H_POOL * H_POOL  # 1350
FC_OUT = 10
LANES_CONV = C_OUT * H_CONV      # 180  (channels packed along lanes)
LANES_POOL = C_OUT * H_POOL      # 90
FC_COLS = H_POOL * FC_OUT        # 150  (columns of the FC matmul: h*10 + n)
KROWS = K * H_IN                 # 96   (rows of the im2col conv weight matrix)

_HP = jax.lax.Precision.HIGHEST


def _dot(a, b):
    # f32 MXU matmul at full precision (multi-pass); all matmuls here are tiny.
    return jnp.dot(a, b, preferred_element_type=jnp.float32, precision=_HP)


# -----------------------------------------------------------------------------
# Single fused kernel:
#   conv2d(1->6, 3x3, valid) + relu + maxpool(2,2) + fc(1350 -> 10)
# -----------------------------------------------------------------------------
def net_kernel(x_ref, wconv_ref, bconv_ref, sel_e_ref, sel_o_ref,
               wfc_ref, diag_ref, col_ref, bfc_ref, o_ref, pool_scr):
    # x_ref    : (32, 32)   f32 VMEM  input image (N=1, C_in=1)
    # wconv_ref: (96, 180)  f32 VMEM  im2col conv weights; row = di*32+jj,
    #                                 col = c*30+j, value = w[c,di,jj-j]
    # bconv_ref: (1, 180)   f32 VMEM  conv bias, replicated per channel block
    # sel_e_ref: (180, 90)  f32 VMEM  0/1 column-pool selector (j == 2w)
    # sel_o_ref: (180, 90)  f32 VMEM  0/1 column-pool selector (j == 2w+1)
    # wfc_ref  : (90, 150)  f32 VMEM  fc weight, row = c*15+w, col = h*10+n
    # diag_ref : (15, 150)  f32 VMEM  0/1 diagonal mask (row h' keeps cols h==h')
    # col_ref  : (150, 10)  f32 VMEM  0/1 collapse matrix (h*10+m, n) = (m==n)
    # bfc_ref  : (1, 10)    f32 VMEM  fc bias
    # o_ref    : (1, 10)    f32 VMEM  output logits
    # pool_scr : (30, 90)   f32 VMEM  scratch for sublane-strided row pooling
    x = x_ref[...]                                   # (32, 32)
    wc = wconv_ref[...]                              # (96, 180)

    # ---- 3x3 valid conv on the MXU: one matmul per row-shift di.
    # conv[i, c*30+j] = sum_{di,dj} x[i+di, j+dj] * w[c, di, dj]
    acc = _dot(x[0:H_CONV, :], wc[0 * H_IN:1 * H_IN, :])
    acc = acc + _dot(x[1:1 + H_CONV, :], wc[1 * H_IN:2 * H_IN, :])
    acc = acc + _dot(x[2:2 + H_CONV, :], wc[2 * H_IN:3 * H_IN, :])
    conv = jnp.maximum(acc + bconv_ref[...], 0.0)    # (30, 180), ReLU

    # ---- 2x2 max-pool.
    # Column pairs (within each channel's 30-lane block) via two 0/1-selector
    # matmuls on the MXU -> (30, 90), col = c*15 + w.
    pc = jnp.maximum(_dot(conv, sel_e_ref[...]), _dot(conv, sel_o_ref[...]))
    # Row pairs via sublane-strided reads from VMEM scratch (no selection
    # matrices, no extra matmuls) -> (15, 90), row = h, col = c*15 + w.
    pool_scr[...] = pc
    pooled = jnp.maximum(pool_scr[pl.ds(0, H_POOL, stride=2), :],
                         pool_scr[pl.ds(1, H_POOL, stride=2), :])
    # (ReLU after max-pool of non-negative values is a no-op -> removed.)

    # ---- fully connected on the MXU with a lane-dense weight:
    #   g[h', h*10+n] = sum_{c,w} pooled[h', c*15+w] * W[n, c*225+h*15+w]
    # keep only the h'==h diagonal (4-vreg mask), sum over rows, then collapse
    # the 150 (h, n) columns to 10 outputs with one tiny 0/1 matmul.
    g = _dot(pooled, wfc_ref[...])                                  # (15, 150)
    s = jnp.sum(g * diag_ref[...], axis=0, keepdims=True)           # (1, 150)
    y = _dot(s, col_ref[...]) + bfc_ref[...]                        # (1, 10)
    o_ref[...] = y


# -----------------------------------------------------------------------------
# Wrapper-side layout plumbing (weights/selectors only; no activation compute).
# -----------------------------------------------------------------------------
def _build_conv_matrix(w_conv):
    # (6,1,3,3) -> (96, 180): M[di*32+jj, c*30+j] = w[c,0,di,jj-j] if 0<=jj-j<3.
    di = np.arange(KROWS) // H_IN
    jj = np.arange(KROWS) % H_IN
    c = np.arange(LANES_CONV) // H_CONV
    j = np.arange(LANES_CONV) % H_CONV
    dj = jj[:, None] - j[None, :]                     # (96, 180), static
    valid = (dj >= 0) & (dj < K)
    djc = np.clip(dj, 0, K - 1)
    taps = w_conv[:, 0, :, :]                         # (6, 3, 3)
    gathered = taps[c[None, :], di[:, None], djc]     # (96, 180)
    return jnp.where(jnp.asarray(valid), gathered, 0.0).astype(jnp.float32)


def _pool_col_selectors():
    # (180, 90) 0/1 block-diagonal selectors: within each channel's 30-lane
    # block, pick column 2w (even) / 2w+1 (odd) for pooled column w.
    rows = np.arange(LANES_CONV)                      # c*30 + j
    cols = np.arange(LANES_POOL)                      # c*15 + w
    same_c = (rows[:, None] // H_CONV) == (cols[None, :] // H_POOL)
    jr = rows[:, None] % H_CONV
    wc = cols[None, :] % H_POOL
    sel_e = (same_c & (jr == 2 * wc)).astype(np.float32)
    sel_o = (same_c & (jr == 2 * wc + 1)).astype(np.float32)
    return sel_e, sel_o


def _build_fc_matrix(w_fc):
    # (10, 1350) -> (90, 150): row = c*15 + w, col = h*10 + n,
    # value = W[n, c*225 + h*15 + w]  (torch channel-major flatten order).
    return (w_fc.reshape(FC_OUT, C_OUT, H_POOL, H_POOL)
            .transpose(1, 3, 2, 0)
            .reshape(LANES_POOL, FC_COLS)
            .astype(jnp.float32))


def _fc_diag_mask():
    # (15, 150): mask[h', h*10+n] = (h' == h)
    hp = np.arange(H_POOL)[:, None]
    h_of_col = (np.arange(FC_COLS) // FC_OUT)[None, :]
    return (hp == h_of_col).astype(np.float32)


def _fc_collapse():
    # (150, 10): R[h*10+m, n] = (m == n)
    m_of_row = (np.arange(FC_COLS) % FC_OUT)[:, None]
    n = np.arange(FC_OUT)[None, :]
    return (m_of_row == n).astype(np.float32)


def net_forward(x, w_conv, b_conv, w_fc, b_fc):
    # x: (1, 1, 32, 32) NCHW, w_conv: (6, 1, 3, 3), b_conv: (6,)
    # w_fc: (10, 1350), b_fc: (10,)
    x2d = x.reshape(H_IN, H_IN).astype(jnp.float32)
    wconv_mat = _build_conv_matrix(w_conv)                         # (96, 180)
    bconv_row = b_conv[np.arange(LANES_CONV) // H_CONV][None, :]   # (1, 180)
    bconv_row = bconv_row.astype(jnp.float32)
    sel_e_np, sel_o_np = _pool_col_selectors()                     # (180, 90) x2
    wfc_mat = _build_fc_matrix(w_fc)                               # (90, 150)
    diag_np = _fc_diag_mask()                                      # (15, 150)
    col_np = _fc_collapse()                                        # (150, 10)
    bfc_row = b_fc.reshape(1, FC_OUT).astype(jnp.float32)          # (1, 10)

    vmem = pl.BlockSpec(memory_space=pltpu.MemorySpace.VMEM)
    # Single grid point (batch hard-coded to 1 by x.view(1,-1)); a batched
    # variant would add a leading "parallel" grid axis (review item 7).
    return pl.pallas_call(
        net_kernel,
        out_shape=jax.ShapeDtypeStruct((1, FC_OUT), jnp.float32),
        in_specs=[vmem] * 9,
        out_specs=vmem,
        scratch_shapes=[pltpu.VMEM((H_CONV, LANES_POOL), jnp.float32)],
    )(x2d, wconv_mat, bconv_row,
      jnp.asarray(sel_e_np), jnp.asarray(sel_o_np),
      wfc_mat, jnp.asarray(diag_np), jnp.asarray(col_np), bfc_row)


# -----------------------------------------------------------------------------
# Host-side (numpy) reference of the exact same forward pass, for validation
# -----------------------------------------------------------------------------
def reference_forward_np(x, w_conv, b_conv, w_fc, b_fc):
    x = np.asarray(x, np.float32)
    w_conv = np.asarray(w_conv, np.float32)
    b_conv = np.asarray(b_conv, np.float32)
    w_fc = np.asarray(w_fc, np.float32)
    b_fc = np.asarray(b_fc, np.float32)

    conv = np.zeros((C_OUT, H_CONV, H_CONV), np.float32)
    img = x[0, 0]
    for c in range(C_OUT):
        acc = np.full((H_CONV, H_CONV), b_conv[c], np.float32)
        for di in range(K):
            for dj in range(K):
                acc += w_conv[c, 0, di, dj] * img[di:di + H_CONV, dj:dj + H_CONV]
        conv[c] = acc
    conv = np.maximum(conv, 0.0)
    pooled = conv.reshape(C_OUT, H_POOL, 2, H_POOL, 2).max(axis=(2, 4))
    pooled = np.maximum(pooled, 0.0)
    flat = pooled.reshape(1, FC_IN)
    return flat @ w_fc.T + b_fc[None, :]


if __name__ == "__main__":
    key = jax.random.PRNGKey(0)
    k1, k2, k3, k4, k5 = jax.random.split(key, 5)

    # Deterministic synthetic parameters (shapes from Net.__init__)
    w_conv = jax.random.normal(k1, (C_OUT, 1, K, K), jnp.float32) * 0.1
    b_conv = jax.random.normal(k2, (C_OUT,), jnp.float32) * 0.1
    w_fc = jax.random.normal(k3, (FC_OUT, FC_IN), jnp.float32) * 0.05
    b_fc = jax.random.normal(k4, (FC_OUT,), jnp.float32) * 0.05

    # Input: NCHW (1, 1, 32, 32) -- the only shape consistent with fc1(1350, 10)
    x = jax.random.normal(k5, (1, 1, H_IN, H_IN), jnp.float32)

    fwd = jax.jit(net_forward)
    out = jax.block_until_ready(fwd(x, w_conv, b_conv, w_fc, b_fc))

    ref = reference_forward_np(x, w_conv, b_conv, w_fc, b_fc)
    assert out.shape == (1, FC_OUT), out.shape
    err = float(np.max(np.abs(np.asarray(out) - ref)))
    assert np.allclose(np.asarray(out), ref, atol=2e-3, rtol=2e-3), err
    print("KERNEL_OK")
</pallas_src>

<mosaic_0001>
module attributes {stable_mosaic.version = 11 : i64} {
  func.func @net_kernel(%arg0: memref<32x32xf32, #tpu.memory_space<vmem>>, %arg1: memref<96x180xf32, #tpu.memory_space<vmem>>, %arg2: memref<1x180xf32, #tpu.memory_space<vmem>>, %arg3: memref<180x90xf32, #tpu.memory_space<vmem>>, %arg4: memref<180x90xf32, #tpu.memory_space<vmem>>, %arg5: memref<90x150xf32, #tpu.memory_space<vmem>>, %arg6: memref<15x150xf32, #tpu.memory_space<vmem>>, %arg7: memref<150x10xf32, #tpu.memory_space<vmem>>, %arg8: memref<1x10xf32, #tpu.memory_space<vmem>>, %arg9: memref<1x10xf32, #tpu.memory_space<vmem>>, %arg10: memref<30x90xf32, #tpu.memory_space<vmem>>) attributes {dimension_semantics = [], scalar_prefetch = 0 : i64, scratch_operands = 1 : i64, tpu.core_type = #tpu.core_type<tc>} {
    %c0 = arith.constant 0 : index
    %c0_0 = arith.constant 0 : index
    %0 = vector.load %arg0[%c0, %c0_0] : memref<32x32xf32, #tpu.memory_space<vmem>>, vector<32x32xf32>
    %c0_1 = arith.constant 0 : index
    %c0_2 = arith.constant 0 : index
    %1 = vector.load %arg1[%c0_1, %c0_2] : memref<96x180xf32, #tpu.memory_space<vmem>>, vector<96x180xf32>
    %2 = vector.extract_strided_slice %0 {offsets = [0, 0], sizes = [30, 32], strides = [1, 1]} : vector<32x32xf32> to vector<30x32xf32>
    %3 = vector.extract_strided_slice %1 {offsets = [0, 0], sizes = [32, 180], strides = [1, 1]} : vector<96x180xf32> to vector<32x180xf32>
    %cst = arith.constant dense<0.000000e+00> : vector<30x180xf32>
    %4 = tpu.matmul %2, %3, %cst {dimension_numbers = #tpu.dot_dimension_numbers<[1], [0], [0], [1], [0, 0, 1, 1], [], []>, precision = #tpu.contract_precision<fp32>} : vector<30x32xf32>, vector<32x180xf32>, vector<30x180xf32> -> vector<30x180xf32>
    %5 = vector.extract_strided_slice %0 {offsets = [1, 0], sizes = [30, 32], strides = [1, 1]} : vector<32x32xf32> to vector<30x32xf32>
    %6 = vector.extract_strided_slice %1 {offsets = [32, 0], sizes = [32, 180], strides = [1, 1]} : vector<96x180xf32> to vector<32x180xf32>
    %cst_3 = arith.constant dense<0.000000e+00> : vector<30x180xf32>
    %7 = tpu.matmul %5, %6, %cst_3 {dimension_numbers = #tpu.dot_dimension_numbers<[1], [0], [0], [1], [0, 0, 1, 1], [], []>, precision = #tpu.contract_precision<fp32>} : vector<30x32xf32>, vector<32x180xf32>, vector<30x180xf32> -> vector<30x180xf32>
    %8 = arith.addf %4, %7 : vector<30x180xf32>
    %9 = vector.extract_strided_slice %0 {offsets = [2, 0], sizes = [30, 32], strides = [1, 1]} : vector<32x32xf32> to vector<30x32xf32>
    %10 = vector.extract_strided_slice %1 {offsets = [64, 0], sizes = [32, 180], strides = [1, 1]} : vector<96x180xf32> to vector<32x180xf32>
    %cst_4 = arith.constant dense<0.000000e+00> : vector<30x180xf32>
    %11 = tpu.matmul %9, %10, %cst_4 {dimension_numbers = #tpu.dot_dimension_numbers<[1], [0], [0], [1], [0, 0, 1, 1], [], []>, precision = #tpu.contract_precision<fp32>} : vector<30x32xf32>, vector<32x180xf32>, vector<30x180xf32> -> vector<30x180xf32>
    %12 = arith.addf %8, %11 : vector<30x180xf32>
    %c0_5 = arith.constant 0 : index
    %c0_6 = arith.constant 0 : index
    %13 = vector.load %arg2[%c0_5, %c0_6] : memref<1x180xf32, #tpu.memory_space<vmem>>, vector<1x180xf32>
    %14 = vector.broadcast %13 : vector<1x180xf32> to vector<30x180xf32>
    %15 = arith.addf %12, %14 : vector<30x180xf32>
    %cst_7 = arith.constant 0.000000e+00 : f32
    %16 = vector.broadcast %cst_7 : f32 to vector<30x180xf32>
    %17 = arith.maximumf %15, %16 : vector<30x180xf32>
    %c0_8 = arith.constant 0 : index
    %c0_9 = arith.constant 0 : index
    %18 = vector.load %arg3[%c0_8, %c0_9] : memref<180x90xf32, #tpu.memory_space<vmem>>, vector<180x90xf32>
    %cst_10 = arith.constant dense<0.000000e+00> : vector<30x90xf32>
    %19 = tpu.matmul %17, %18, %cst_10 {dimension_numbers = #tpu.dot_dimension_numbers<[1], [0], [0], [1], [0, 0, 1, 1], [], []>, precision = #tpu.contract_precision<fp32>} : vector<30x180xf32>, vector<180x90xf32>, vector<30x90xf32> -> vector<30x90xf32>
    %c0_11 = arith.constant 0 : index
    %c0_12 = arith.constant 0 : index
    %20 = vector.load %arg4[%c0_11, %c0_12] : memref<180x90xf32, #tpu.memory_space<vmem>>, vector<180x90xf32>
    %cst_13 = arith.constant dense<0.000000e+00> : vector<30x90xf32>
    %21 = tpu.matmul %17, %20, %cst_13 {dimension_numbers = #tpu.dot_dimension_numbers<[1], [0], [0], [1], [0, 0, 1, 1], [], []>, precision = #tpu.contract_precision<fp32>} : vector<30x180xf32>, vector<180x90xf32>, vector<30x90xf32> -> vector<30x90xf32>
    %22 = arith.maximumf %19, %21 : vector<30x90xf32>
    %c0_14 = arith.constant 0 : index
    %c0_15 = arith.constant 0 : index
    %23 = vector.load %arg10[%c0_14, %c0_15] : memref<30x90xf32, #tpu.memory_space<vmem>>, vector<30x90xf32>
    tpu.vector_store %arg10[%c0_14, %c0_15], %22 {strides = array<i32>} : memref<30x90xf32, #tpu.memory_space<vmem>>, vector<30x90xf32>,
    %c0_16 = arith.constant 0 : index
    %c0_17 = arith.constant 0 : index
    %24 = tpu.strided_load %arg10[%c0_16, %c0_17] {strides = array<i32: 2, 1>} : memref<30x90xf32, #tpu.memory_space<vmem>>, vector<15x90xf32>
    %c1 = arith.constant 1 : index
    %c0_18 = arith.constant 0 : index
    %25 = tpu.strided_load %arg10[%c1, %c0_18] {strides = array<i32: 2, 1>} : memref<30x90xf32, #tpu.memory_space<vmem>>, vector<15x90xf32>
    %26 = arith.maximumf %24, %25 : vector<15x90xf32>
    %c0_19 = arith.constant 0 : index
    %c0_20 = arith.constant 0 : index
    %27 = vector.load %arg5[%c0_19, %c0_20] : memref<90x150xf32, #tpu.memory_space<vmem>>, vector<90x150xf32>
    %cst_21 = arith.constant dense<0.000000e+00> : vector<15x150xf32>
    %28 = tpu.matmul %26, %27, %cst_21 {dimension_numbers = #tpu.dot_dimension_numbers<[1], [0], [0], [1], [0, 0, 1, 1], [], []>, precision = #tpu.contract_precision<fp32>} : vector<15x90xf32>, vector<90x150xf32>, vector<15x150xf32> -> vector<15x150xf32>
    %c0_22 = arith.constant 0 : index
    %c0_23 = arith.constant 0 : index
    %29 = vector.load %arg6[%c0_22, %c0_23] : memref<15x150xf32, #tpu.memory_space<vmem>>, vector<15x150xf32>
    %30 = arith.mulf %28, %29 : vector<15x150xf32>
    %cst_24 = arith.constant dense<0.000000e+00> : vector<150xf32>
    %31 = vector.multi_reduction <add>, %30, %cst_24 [0] : vector<15x150xf32> to vector<150xf32>
    %32 = vector.shape_cast %31 : vector<150xf32> to vector<1x150xf32>
    %c0_25 = arith.constant 0 : index
    %c0_26 = arith.constant 0 : index
    %33 = vector.load %arg7[%c0_25, %c0_26] : memref<150x10xf32, #tpu.memory_space<vmem>>, vector<150x10xf32>
    %cst_27 = arith.constant dense<0.000000e+00> : vector<1x10xf32>
    %34 = tpu.matmul %32, %33, %cst_27 {dimension_numbers = #tpu.dot_dimension_numbers<[1], [0], [0], [1], [0, 0, 1, 1], [], []>, precision = #tpu.contract_precision<fp32>} : vector<1x150xf32>, vector<150x10xf32>, vector<1x10xf32> -> vector<1x10xf32>
    %c0_28 = arith.constant 0 : index
    %c0_29 = arith.constant 0 : index
    %35 = vector.load %arg8[%c0_28, %c0_29] : memref<1x10xf32, #tpu.memory_space<vmem>>, vector<1x10xf32>
    %36 = arith.addf %34, %35 : vector<1x10xf32>
    %c0_30 = arith.constant 0 : index
    %c0_31 = arith.constant 0 : index
    %37 = vector.load %arg9[%c0_30, %c0_31] : memref<1x10xf32, #tpu.memory_space<vmem>>, vector<1x10xf32>
    tpu.vector_store %arg9[%c0_30, %c0_31], %36 {strides = array<i32>} : memref<1x10xf32, #tpu.memory_space<vmem>>, vector<1x10xf32>,
    return
  }
}

</mosaic_0001>

<llo_original>
// kernel: net_forward.1
$region0: #{net_forward.1}
  #allocation0 [shape = 'u32[]', space=smem, size = 0x4, offset = 0x4, fixed_abs, tag = 'smem constant byte address 0x4 - core index']
  #allocation1 [shape = 'u32[144,128]{1,0:T(1,128)}', space=vmem, size = 0x12000, scoped, tag = 'internal scratch']
  #allocation2 [shape = 'f32[30,90]{1,0:T(8,128)}', space=vmem, size = 0x4000, scoped, tag = 'scratch operand']
  %s0 = inlined_call_operand.vmem [shape: f32[32,32], index: 0, kind: input, shape index: {}]
  %s1 = inlined_call_operand.vmem [shape: f32[96,180], index: 1, kind: input, shape index: {}]
  %s2 = inlined_call_operand.vmem [shape: f32[1,180], index: 2, kind: input, shape index: {}]
  %s3 = inlined_call_operand.vmem [shape: f32[180,90], index: 3, kind: input, shape index: {}]
  %s4 = inlined_call_operand.vmem [shape: f32[180,90], index: 4, kind: input, shape index: {}]
  %s5 = inlined_call_operand.vmem [shape: f32[90,150], index: 5, kind: input, shape index: {}]
  %s6 = inlined_call_operand.vmem [shape: f32[15,150], index: 6, kind: input, shape index: {}]
  %s7 = inlined_call_operand.vmem [shape: f32[150,10], index: 7, kind: input, shape index: {}]
  %s8 = inlined_call_operand.vmem [shape: f32[1,10], index: 8, kind: input, shape index: {}]
  %s9 = inlined_call_operand.hbm [shape: f32[1,10], index: 9, kind: output, shape index: {}]
  %s10 = sld [smem:[#allocation0]]
  $region46: #{net_forward.1} parent=0
    _
  %s12 = ssub.s32 1, %s10
  %s13 = scalar_select 0, %s12, %s10
  $region1: #{net_forward.1} parent=0
    #allocation3 [shape = 'u8[512]{0}', space=vmem, size = 0x400, scoped, tag = 'output window, operand 0, single buffered']
    #allocation4 [shape = 's32[1]{0}', space=sflag, size = 0x4, scoped, tag = 'scoped memory for net_forward.1']
    %14 = vsyncpa [#allocation4], 0
    // Predicated region
    $region2: #{net_forward.1} parent=1 // pred_check
      _
    $region3: #{net_forward.1} parent=1 // pred_check_branch
      %16 = sbr.rel (0) target = $region5
    $region4: #{net_forward.1} parent=1 // pred_region
      _
    $region5: #{net_forward.1} parent=1 // pred_fallthru
      _
    // Predicated region
    $region6: #{net_forward.1} parent=1 // pred_check
      _
    $region7: #{net_forward.1} parent=1 // pred_check_branch
      %18 = sbr.rel (0) target = $region9
    $region8: #{net_forward.1} parent=1 // pred_region
      _
    $region9: #{net_forward.1} parent=1 // pred_fallthru
      _
    // Predicated region
    $region10: #{net_forward.1} parent=1 // pred_check
      _
    $region11: #{net_forward.1} parent=1 // pred_check_branch
      %20 = sbr.rel (0) target = $region13
    $region12: #{net_forward.1} parent=1 // pred_region
      _
    $region13: #{net_forward.1} parent=1 // pred_fallthru
      _
    // Predicated region
    $region14: #{net_forward.1} parent=1 // pred_check
      _
    $region15: #{net_forward.1} parent=1 // pred_check_branch
      %22 = sbr.rel (0) target = $region17
    $region16: #{net_forward.1} parent=1 // pred_region
      _
    $region17: #{net_forward.1} parent=1 // pred_fallthru
      _
    // Predicated region
    $region18: #{net_forward.1} parent=1 // pred_check
      _
    $region19: #{net_forward.1} parent=1 // pred_check_branch
      %24 = sbr.rel (0) target = $region21
    $region20: #{net_forward.1} parent=1 // pred_region
      _
    $region21: #{net_forward.1} parent=1 // pred_fallthru
      _
    // Predicated region
    $region22: #{net_forward.1} parent=1 // pred_check
      _
    $region23: #{net_forward.1} parent=1 // pred_check_branch
      %26 = sbr.rel (0) target = $region25
    $region24: #{net_forward.1} parent=1 // pred_region
      _
    $region25: #{net_forward.1} parent=1 // pred_fallthru
      _
    // Predicated region
    $region26: #{net_forward.1} parent=1 // pred_check
      _
    $region27: #{net_forward.1} parent=1 // pred_check_branch
      %28 = sbr.rel (0) target = $region29
    $region28: #{net_forward.1} parent=1 // pred_region
      _
    $region29: #{net_forward.1} parent=1 // pred_fallthru
      _
    // Predicated region
    $region30: #{net_forward.1} parent=1 // pred_check
      _
    $region31: #{net_forward.1} parent=1 // pred_check_branch
      %30 = sbr.rel (0) target = $region33
    $region32: #{net_forward.1} parent=1 // pred_region
      _
    $region33: #{net_forward.1} parent=1 // pred_fallthru
      _
    // Predicated region
    $region34: #{net_forward.1} parent=1 // pred_check
      _
    $region35: #{net_forward.1} parent=1 // pred_check_branch
      %32 = sbr.rel (0) target = $region37
    $region36: #{net_forward.1} parent=1 // pred_region
      _
    $region37: #{net_forward.1} parent=1 // pred_fallthru
      _
    %v33 = vld [vmem:[%s0] sm:$0xff]
    %v34 = vld [vmem:[%s0 + $0x8] sm:$0xff]
    %v35 = vld [vmem:[%s0 + $0x10] sm:$0xff]
    %v36 = vld [vmem:[%s0 + $0x18] sm:$0xff]
    %v37 = vld [vmem:[%s1] sm:$0xff]
    %v38 = vld [vmem:[%s1 + $0x8] sm:$0xff]
    %v39 = vld [vmem:[%s1 + $0x10] sm:$0xff]
    %v40 = vld [vmem:[%s1 + $0x18] sm:$0xff]
    %v41 = vld [vmem:[%s1 + $0x20] sm:$0xff]
    %v42 = vld [vmem:[%s1 + $0x28] sm:$0xff]
    %v43 = vld [vmem:[%s1 + $0x30] sm:$0xff]
    %v44 = vld [vmem:[%s1 + $0x38] sm:$0xff]
    %v45 = vld [vmem:[%s1 + $0x40] sm:$0xff]
    %v46 = vld [vmem:[%s1 + $0x48] sm:$0xff]
    %v47 = vld [vmem:[%s1 + $0x50] sm:$0xff]
    %v48 = vld [vmem:[%s1 + $0x58] sm:$0xff]
    %v49 = vld [vmem:[%s1 + $0x60] sm:$0xff]
    %v50 = vld [vmem:[%s1 + $0x68] sm:$0xff]
    %v51 = vld [vmem:[%s1 + $0x70] sm:$0xff]
    %v52 = vld [vmem:[%s1 + $0x78] sm:$0xff]
    %v53 = vld [vmem:[%s1 + $0x80] sm:$0xff]
    %v54 = vld [vmem:[%s1 + $0x88] sm:$0xff]
    %v55 = vld [vmem:[%s1 + $0x90] sm:$0xff]
    %v56 = vld [vmem:[%s1 + $0x98] sm:$0xff]
    %v57 = vld [vmem:[%s1 + $0xa0] sm:$0xff]
    %v58 = vld [vmem:[%s1 + $0xa8] sm:$0xff]
    %v59 = vld [vmem:[%s1 + $0xb0] sm:$0xff]
    %v60 = vld [vmem:[%s1 + $0xb8] sm:$0xff]
    %vm65 = vcmask 1046528
    %v66 = vrot.slane %v33, 1
    %v67 = vrot.slane %v34, 1
    %v68 = vsel %vm65, %v66, %v67
    %v69 = vrot.slane %v35, 1
    %v70 = vsel %vm65, %v67, %v69
    %v71 = vrot.slane %v36, 1
    %v72 = vsel %vm65, %v69, %v71
    %vm73 = vcmask 261120
    %v74 = vsel %vm73, %v68, 0
    %v76 = vsel %vm73, %v70, 0
    %v78 = vsel %vm73, %v72, 0
    %v80 = vsel %vm73, %v71, 0
    %v82 = vand.u32 %v46, 4294901760
    %83 = vmatprep.subr.mxu0 %v82
    %v84 = vand.u32 %v45, 4294901760
    %85 = vmatpush1.msra.mxu0 %v84
    %v86 = vand.u32 %v48, 4294901760
    %87 = vmatprep.subr.mxu0 %v86
    %v88 = vand.u32 %v47, 4294901760
    %89 = vmatpush1.msra.mxu0 %v88
    %v90 = vand.u32 %v50, 4294901760
    %91 = vmatprep.subr.mxu0 %v90
    %v92 = vand.u32 %v49, 4294901760
    %93 = vmatpush1.msra.mxu0 %v92
    %v94 = vand.u32 %v52, 4294901760
    %95 = vmatprep.subr.mxu0 %v94
    %v96 = vand.u32 %v51, 4294901760
    %97 = vmatpush1.msra.mxu0 %v96
    %98 = vmatprep.subr.mxu0 0.0
    %99 = vmatpush1.msra.mxu0 0.0
    %100 = vmatprep.subr.mxu0 0.0
    %101 = vmatpush1.msra.mxu0 0.0
    %102 = vmatprep.subr.mxu0 0.0
    %103 = vmatpush1.msra.mxu0 0.0
    %104 = vmatprep.subr.mxu0 0.0
    %105 = vmatpush1.msra.mxu0 0.0
    %106 = vmatprep.subr.mxu0 0.0
    %107 = vmatpush1.msra.mxu0 0.0
    %108 = vmatprep.subr.mxu0 0.0
    %109 = vmatpush1.msra.mxu0 0.0
    %110 = vmatprep.subr.mxu0 0.0
    %111 = vmatpush1.msra.mxu0 0.0
    %112 = vmatprep.subr.mxu0 0.0
    %113 = vmatpush1.msra.mxu0 0.0
    %114 = vmatprep.subr.mxu0 0.0
    %115 = vmatpush1.msra.mxu0 0.0
    %116 = vmatprep.subr.mxu0 0.0
    %117 = vmatpush1.msra.mxu0 0.0
    %118 = vmatprep.subr.mxu0 0.0
    %119 = vmatpush1.msra.mxu0 0.0
    %120 = vmatprep.subr.mxu0 0.0
    %121 = vmatpush1.msra.mxu0 0.0
    %122 = vmatprep.subr.mxu0 0.0
    %123 = vmatpush1.msra.mxu0 0.0
    %124 = vmatprep.subr.mxu0 0.0
    %125 = vmatpush1.msra.mxu0 0.0
    %126 = vmatprep.subr.mxu0 0.0
    %127 = vmatpush1.msra.mxu0 0.0
    %128 = vmatprep.subr.mxu0 0.0
    %129 = vmatpush1.msra.mxu0 0.0
    %130 = vmatprep.subr.mxu0 0.0
    %131 = vmatpush1.msra.mxu0 0.0
    %132 = vmatprep.subr.mxu0 0.0
    %133 = vmatpush1.msra.mxu0 0.0
    %134 = vmatprep.subr.mxu0 0.0
    %135 = vmatpush1.msra.mxu0 0.0
    %136 = vmatprep.subr.mxu0 0.0
    %137 = vmatpush1.msra.mxu0 0.0
    %138 = vmatprep.subr.mxu0 0.0
    %139 = vmatpush1.msra.mxu0 0.0
    %140 = vmatprep.subr.mxu0 0.0
    %141 = vmatpush1.msra.mxu0 0.0
    %142 = vmatprep.subr.mxu0 0.0
    %143 = vmatpush1.msra.mxu0 0.0
    %144 = vmatprep.subr.mxu0 0.0
    %145 = vmatpush1.msra.mxu0 0.0
    %146 = vmatprep.subr.mxu0 0.0
    %147 = vmatpush1.msra.mxu0 0.0
    %148 = vmatprep.subr.mxu0 0.0
    %149 = vmatpush1.msra.mxu0 0.0
    %150 = vmatprep.subr.mxu0 0.0
    %151 = vmatpush1.msra.mxu0 0.0
    %152 = vmatprep.subr.mxu0 0.0
    %153 = vmatpush1.msra.mxu0 0.0
    %154 = vmatprep.mubr.f32.mxu0 0.0
    %v155 = vand.u32 %v74, 4294901760
    %v156 = vsub.f32 %v74, %v155
    %v157 = vand.u32 %v156, 4294901760
    %v158 = vsub.f32 %v156, %v157
    %v159 = vand.u32 %v158, 4294901760
    %160 = vmatmul.mubr.f32.gmra.mrb[0].mxu0 %v159
    %v161 = vpop.f32.mrb[0].mxu0
    %v162 = vadd.f32 0.0, %v161
    %v163 = vpop.f32.mrb[0].mxu0
    %v164 = vadd.f32 0.0, %v163
    %165 = vmatprep.mubr.f32.mxu0 0.0
    %v166 = vand.u32 %v76, 4294901760
    %v167 = vsub.f32 %v76, %v166
    %v168 = vand.u32 %v167, 4294901760
    %v169 = vsub.f32 %v167, %v168
    %v170 = vand.u32 %v169, 4294901760
    %171 = vmatmul.mubr.f32.gmra.mrb[0].mxu0 %v170
    %v172 = vpop.f32.mrb[0].mxu0
    %v173 = vadd.f32 0.0, %v172
    %v174 = vpop.f32.mrb[0].mxu0
    %v175 = vadd.f32 0.0, %v174
    %176 = vmatprep.mubr.f32.mxu0 0.0
    %v177 = vand.u32 %v78, 4294901760
    %v178 = vsub.f32 %v78, %v177
    %v179 = vand.u32 %v178, 4294901760
    %v180 = vsub.f32 %v178, %v179
    %v181 = vand.u32 %v180, 4294901760
    %182 = vmatmul.mubr.f32.gmra.mrb[0].mxu0 %v181
    %v183 = vpop.f32.mrb[0].mxu0
    %v184 = vadd.f32 0.0, %v183
    %v185 = vpop.f32.mrb[0].mxu0
    %v186 = vadd.f32 0.0, %v185
    %187 = vmatprep.mubr.f32.mxu0 0.0
    %v188 = vand.u32 %v80, 4294901760
    %v189 = vsub.f32 %v80, %v188
    %v190 = vand.u32 %v189, 4294901760
    %v191 = vsub.f32 %v189, %v190
    %v192 = vand.u32 %v191, 4294901760
    %193 = vmatmul.mubr.f32.gmra.mrb[0].mxu0 %v192
    %v194 = vpop.f32.mrb[0].mxu0
    %v195 = vadd.f32 0.0, %v194
    %v196 = vpop.f32.mrb[0].mxu0
    %v197 = vadd.f32 0.0, %v196
    %198 = vdwg.mxu0
    %v199 = vand.u32 %v46, 4294901760
    %v200 = vsub.f32 %v46, %v199
    %v201 = vand.u32 %v200, 4294901760
    %v202 = vsub.f32 %v200, %v201
    %v203 = vand.u32 %v202, 4294901760
    %204 = vmatprep.subr.mxu0 %v203
    %v205 = vand.u32 %v45, 4294901760
    %v206 = vsub.f32 %v45, %v205
    %v207 = vand.u32 %v206, 4294901760
    %v208 = vsub.f32 %v206, %v207
    %v209 = vand.u32 %v208, 4294901760
    %210 = vmatpush1.msra.mxu0 %v209
    %v211 = vand.u32 %v48, 4294901760
    %v212 = vsub.f32 %v48, %v211
    %v213 = vand.u32 %v212, 4294901760
    %v214 = vsub.f32 %v212, %v213
    %v215 = vand.u32 %v214, 4294901760
    %216 = vmatprep.subr.mxu0 %v215
    %v217 = vand.u32 %v47, 4294901760
    %v218 = vsub.f32 %v47, %v217
    %v219 = vand.u32 %v218, 4294901760
    %v220 = vsub.f32 %v218, %v219
    %v221 = vand.u32 %v220, 4294901760
    %222 = vmatpush1.msra.mxu0 %v221
    %v223 = vand.u32 %v50, 4294901760
    %v224 = vsub.f32 %v50, %v223
    %v225 = vand.u32 %v224, 4294901760
    %v226 = vsub.f32 %v224, %v225
    %v227 = vand.u32 %v226, 4294901760
    %228 = vmatprep.subr.mxu0 %v227
    %v229 = vand.u32 %v49, 4294901760
    %v230 = vsub.f32 %v49, %v229
    %v231 = vand.u32 %v230, 4294901760
    %v232 = vsub.f32 %v230, %v231
    %v233 = vand.u32 %v232, 4294901760
    %234 = vmatpush1.msra.mxu0 %v233
    %v235 = vand.u32 %v52, 4294901760
    %v236 = vsub.f32 %v52, %v235
    %v237 = vand.u32 %v236, 4294901760
    %v238 = vsub.f32 %v236, %v237
    %v239 = vand.u32 %v238, 4294901760
    %240 = vmatprep.subr.mxu0 %v239
    %v241 = vand.u32 %v51, 4294901760
    %v242 = vsub.f32 %v51, %v241
    %v243 = vand.u32 %v242, 4294901760
    %v244 = vsub.f32 %v242, %v243
    %v245 = vand.u32 %v244, 4294901760
    %246 = vmatpush1.msra.mxu0 %v245
    %247 = vmatprep.subr.mxu0 0.0
    %248 = vmatpush1.msra.mxu0 0.0
    %249 = vmatprep.subr.mxu0 0.0
    %250 = vmatpush1.msra.mxu0 0.0
    %251 = vmatprep.subr.mxu0 0.0
    %252 = vmatpush1.msra.mxu0 0.0
    %253 = vmatprep.subr.mxu0 0.0
    %254 = vmatpush1.msra.mxu0 0.0
    %255 = vmatprep.subr.mxu0 0.0
    %256 = vmatpush1.msra.mxu0 0.0
    %257 = vmatprep.subr.mxu0 0.0
    %258 = vmatpush1.msra.mxu0 0.0
    %259 = vmatprep.subr.mxu0 0.0
    %260 = vmatpush1.msra.mxu0 0.0
    %261 = vmatprep.subr.mxu0 0.0
    %262 = vmatpush1.msra.mxu0 0.0
    %263 = vmatprep.subr.mxu0 0.0
    %264 = vmatpush1.msra.mxu0 0.0
    %265 = vmatprep.subr.mxu0 0.0
    %266 = vmatpush1.msra.mxu0 0.0
    %267 = vmatprep.subr.mxu0 0.0
    %268 = vmatpush1.msra.mxu0 0.0
    %269 = vmatprep.subr.mxu0 0.0
    %270 = vmatpush1.msra.mxu0 0.0
    %271 = vmatprep.subr.mxu0 0.0
    %272 = vmatpush1.msra.mxu0 0.0
    %273 = vmatprep.subr.mxu0 0.0
    %274 = vmatpush1.msra.mxu0 0.0
    %275 = vmatprep.subr.mxu0 0.0
    %276 = vmatpush1.msra.mxu0 0.0
    %277 = vmatprep.subr.mxu0 0.0
    %278 = vmatpush1.msra.mxu0 0.0
    %279 = vmatprep.subr.mxu0 0.0
    %280 = vmatpush1.msra.mxu0 0.0
    %281 = vmatprep.subr.mxu0 0.0
    %282 = vmatpush1.msra.mxu0 0.0
    %283 = vmatprep.subr.mxu0 0.0
    %284 = vmatpush1.msra.mxu0 0.0
    %285 = vmatprep.subr.mxu0 0.0
    %286 = vmatpush1.msra.mxu0 0.0
    %287 = vmatprep.subr.mxu0 0.0
    %288 = vmatpush1.msra.mxu0 0.0
    %289 = vmatprep.subr.mxu0 0.0
    %290 = vmatpush1.msra.mxu0 0.0
    %291 = vmatprep.subr.mxu0 0.0
    %292 = vmatpush1.msra.mxu0 0.0
    %293 = vmatprep.subr.mxu0 0.0
    %294 = vmatpush1.msra.mxu0 0.0
    %295 = vmatprep.subr.mxu0 0.0
    %296 = vmatpush1.msra.mxu0 0.0
    %297 = vmatprep.subr.mxu0 0.0
    %298 = vmatpush1.msra.mxu0 0.0
    %299 = vmatprep.subr.mxu0 0.0
    %300 = vmatpush1.msra.mxu0 0.0
    %301 = vmatprep.subr.mxu0 0.0
    %302 = vmatpush1.msra.mxu0 0.0
    %303 = vmatprep.mubr.f32.mxu0 0.0
    %v304 = vand.u32 %v74, 4294901760
    %305 = vmatmul.mubr.f32.gmra.mrb[0].mxu0 %v304
    %v306 = vpop.f32.mrb[0].mxu0
    %v307 = vadd.f32 %v162, %v306
    %v308 = vpop.f32.mrb[0].mxu0
    %v309 = vadd.f32 %v164, %v308
    %310 = vmatprep.mubr.f32.mxu0 0.0
    %v311 = vand.u32 %v76, 4294901760
    %312 = vmatmul.mubr.f32.gmra.mrb[0].mxu0 %v311
    %v313 = vpop.f32.mrb[0].mxu0
    %v314 = vadd.f32 %v173, %v313
    %v315 = vpop.f32.mrb[0].mxu0
    %v316 = vadd.f32 %v175, %v315
    %317 = vmatprep.mubr.f32.mxu0 0.0
    %v318 = vand.u32 %v78, 4294901760
    %319 = vmatmul.mubr.f32.gmra.mrb[0].mxu0 %v318
    %v320 = vpop.f32.mrb[0].mxu0
    %v321 = vadd.f32 %v184, %v320
    %v322 = vpop.f32.mrb[0].mxu0
    %v323 = vadd.f32 %v186, %v322
    %324 = vmatprep.mubr.f32.mxu0 0.0
    %v325 = vand.u32 %v80, 4294901760
    %326 = vmatmul.mubr.f32.gmra.mrb[0].mxu0 %v325
    %v327 = vpop.f32.mrb[0].mxu0
    %v328 = vadd.f32 %v195, %v327
    %v329 = vpop.f32.mrb[0].mxu0
    %v330 = vadd.f32 %v197, %v329
    %331 = vdwg.mxu0
    %v332 = vand.u32 %v46, 4294901760
    %v333 = vsub.f32 %v46, %v332
    %334 = vmatprep.subr.mxu0 %v333
    %v335 = vand.u32 %v45, 4294901760
    %v336 = vsub.f32 %v45, %v335
    %337 = vmatpush1.msra.mxu0 %v336
    %v338 = vand.u32 %v48, 4294901760
    %v339 = vsub.f32 %v48, %v338
    %340 = vmatprep.subr.mxu0 %v339
    %v341 = vand.u32 %v47, 4294901760
    %v342 = vsub.f32 %v47, %v341
    %343 = vmatpush1.msra.mxu0 %v342
    %v344 = vand.u32 %v50, 4294901760
    %v345 = vsub.f32 %v50, %v344
    %346 = vmatprep.subr.mxu0 %v345
    %v347 = vand.u32 %v49, 4294901760
    %v348 = vsub.f32 %v49, %v347
    %349 = vmatpush1.msra.mxu0 %v348
    %v350 = vand.u32 %v52, 4294901760
    %v351 = vsub.f32 %v52, %v350
    %352 = vmatprep.subr.mxu0 %v351
    %v353 = vand.u32 %v51, 4294901760
    %v354 = vsub.f32 %v51, %v353
    %355 = vmatpush1.msra.mxu0 %v354
    %356 = vmatprep.subr.mxu0 0.0
    %357 = vmatpush1.msra.mxu0 0.0
    %358 = vmatprep.subr.mxu0 0.0
    %359 = vmatpush1.msra.mxu0 0.0
    %360 = vmatprep.subr.mxu0 0.0
    %361 = vmatpush1.msra.mxu0 0.0
    %362 = vmatprep.subr.mxu0 0.0
    %363 = vmatpush1.msra.mxu0 0.0
    %364 = vmatprep.subr.mxu0 0.0
    %365 = vmatpush1.msra.mxu0 0.0
    %366 = vmatprep.subr.mxu0 0.0
    %367 = vmatpush1.msra.mxu0 0.0
    %368 = vmatprep.subr.mxu0 0.0
    %369 = vmatpush1.msra.mxu0 0.0
    %370 = vmatprep.subr.mxu0 0.0
    %371 = vmatpush1.msra.mxu0 0.0
    %372 = vmatprep.subr.mxu0 0.0
    %373 = vmatpush1.msra.mxu0 0.0
    %374 = vmatprep.subr.mxu0 0.0
    %375 = vmatpush1.msra.mxu0 0.0
    %376 = vmatprep.subr.mxu0 0.0
    %377 = vmatpush1.msra.mxu0 0.0
    %378 = vmatprep.subr.mxu0 0.0
    %379 = vmatpush1.msra.mxu0 0.0
    %380 = vmatprep.subr.mxu0 0.0
    %381 = vmatpush1.msra.mxu0 0.0
    %382 = vmatprep.subr.mxu0 0.0
    %383 = vmatpush1.msra.mxu0 0.0
    %384 = vmatprep.subr.mxu0 0.0
    %385 = vmatpush1.msra.mxu0 0.0
    %386 = vmatprep.subr.mxu0 0.0
    %387 = vmatpush1.msra.mxu0 0.0
    %388 = vmatprep.subr.mxu0 0.0
    %389 = vmatpush1.msra.mxu0 0.0
    %390 = vmatprep.subr.mxu0 0.0
    %391 = vmatpush1.msra.mxu0 0.0
    %392 = vmatprep.subr.mxu0 0.0
    %393 = vmatpush1.msra.mxu0 0.0
    %394 = vmatprep.subr.mxu0 0.0
    %395 = vmatpush1.msra.mxu0 0.0
    %396 = vmatprep.subr.mxu0 0.0
    %397 = vmatpush1.msra.mxu0 0.0
    %398 = vmatprep.subr.mxu0 0.0
    %399 = vmatpush1.msra.mxu0 0.0
    %400 = vmatprep.subr.mxu0 0.0
    %401 = vmatpush1.msra.mxu0 0.0
    %402 = vmatprep.subr.mxu0 0.0
    %403 = vmatpush1.msra.mxu0 0.0
    %404 = vmatprep.subr.mxu0 0.0
    %405 = vmatpush1.msra.mxu0 0.0
    %406 = vmatprep.subr.mxu0 0.0
    %407 = vmatpush1.msra.mxu0 0.0
    %408 = vmatprep.subr.mxu0 0.0
    %409 = vmatpush1.msra.mxu0 0.0
    %410 = vmatprep.subr.mxu0 0.0
    %411 = vmatpush1.msra.mxu0 0.0
    %412 = vmatprep.mubr.f32.mxu0 0.0
    %v413 = vand.u32 %v74, 4294901760
    %v414 = vsub.f32 %v74, %v413
    %415 = vmatmul.mubr.f32.gmra.mrb[0].mxu0 %v414
    %v416 = vpop.f32.mrb[0].mxu0
    %v417 = vadd.f32 %v307, %v416
    %v418 = vpop.f32.mrb[0].mxu0
    %v419 = vadd.f32 %v309, %v418
    %420 = vmatprep.mubr.f32.mxu0 0.0
    %v421 = vand.u32 %v76, 4294901760
    %v422 = vsub.f32 %v76, %v421
    %423 = vmatmul.mubr.f32.gmra.mrb[0].mxu0 %v422
    %v424 = vpop.f32.mrb[0].mxu0
    %v425 = vadd.f32 %v314, %v424
    %v426 = vpop.f32.mrb[0].mxu0
    %v427 = vadd.f32 %v316, %v426
    %428 = vmatprep.mubr.f32.mxu0 0.0
    %v429 = vand.u32 %v78, 4294901760
    %v430 = vsub.f32 %v78, %v429
    %431 = vmatmul.mubr.f32.gmra.mrb[0].mxu0 %v430
    %v432 = vpop.f32.mrb[0].mxu0
    %v433 = vadd.f32 %v321, %v432
    %v434 = vpop.f32.mrb[0].mxu0
    %v435 = vadd.f32 %v323, %v434
    %436 = vmatprep.mubr.f32.mxu0 0.0
    %v437 = vand.u32 %v80, 4294901760
    %v438 = vsub.f32 %v80, %v437
    %439 = vmatmul.mubr.f32.gmra.mrb[0].mxu0 %v438
    %v440 = vpop.f32.mrb[0].mxu0
    %v441 = vadd.f32 %v328, %v440
    %v442 = vpop.f32.mrb[0].mxu0
    %v443 = vadd.f32 %v330, %v442
    %444 = vdwg.mxu0
    %v445 = vand.u32 %v46, 4294901760
    %446 = vmatprep.subr.mxu0 %v445
    %v447 = vand.u32 %v45, 4294901760
    %448 = vmatpush1.msra.mxu0 %v447
    %v449 = vand.u32 %v48, 4294901760
    %450 = vmatprep.subr.mxu0 %v449
    %v451 = vand.u32 %v47, 4294901760
    %452 = vmatpush1.msra.mxu0 %v451
    %v453 = vand.u32 %v50, 4294901760
    %454 = vmatprep.subr.mxu0 %v453
    %v455 = vand.u32 %v49, 4294901760
    %456 = vmatpush1.msra.mxu0 %v455
    %v457 = vand.u32 %v52, 4294901760
    %458 = vmatprep.subr.mxu0 %v457
    %v459 = vand.u32 %v51, 4294901760
    %460 = vmatpush1.msra.mxu0 %v459
    %461 = vmatprep.subr.mxu0 0.0
    %462 = vmatpush1.msra.mxu0 0.0
    %463 = vmatprep.subr.mxu0 0.0
    %464 = vmatpush1.msra.mxu0 0.0
    %465 = vmatprep.subr.mxu0 0.0
    %466 = vmatpush1.msra.mxu0 0.0
    %467 = vmatprep.subr.mxu0 0.0
    %468 = vmatpush1.msra.mxu0 0.0
    %469 = vmatprep.subr.mxu0 0.0
    %470 = vmatpush1.msra.mxu0 0.0
    %471 = vmatprep.subr.mxu0 0.0
    %472 = vmatpush1.msra.mxu0 0.0
    %473 = vmatprep.subr.mxu0 0.0
    %474 = vmatpush1.msra.mxu0 0.0
    %475 = vmatprep.subr.mxu0 0.0
    %476 = vmatpush1.msra.mxu0 0.0
    %477 = vmatprep.subr.mxu0 0.0
    %478 = vmatpush1.msra.mxu0 0.0
    %479 = vmatprep.subr.mxu0 0.0
    %480 = vmatpush1.msra.mxu0 0.0
    %481 = vmatprep.subr.mxu0 0.0
    %482 = vmatpush1.msra.mxu0 0.0
    %483 = vmatprep.subr.mxu0 0.0
    %484 = vmatpush1.msra.mxu0 0.0
    %485 = vmatprep.subr.mxu0 0.0
    %486 = vmatpush1.msra.mxu0 0.0
    %487 = vmatprep.subr.mxu0 0.0
    %488 = vmatpush1.msra.mxu0 0.0
    %489 = vmatprep.subr.mxu0 0.0
    %490 = vmatpush1.msra.mxu0 0.0
    %491 = vmatprep.subr.mxu0 0.0
    %492 = vmatpush1.msra.mxu0 0.0
    %493 = vmatprep.subr.mxu0 0.0
    %494 = vmatpush1.msra.mxu0 0.0
    %495 = vmatprep.subr.mxu0 0.0
    %496 = vmatpush1.msra.mxu0 0.0
    %497 = vmatprep.subr.mxu0 0.0
    %498 = vmatpush1.msra.mxu0 0.0
    %499 = vmatprep.subr.mxu0 0.0
    %500 = vmatpush1.msra.mxu0 0.0
    %501 = vmatprep.subr.mxu0 0.0
    %502 = vmatpush1.msra.mxu0 0.0
    %503 = vmatprep.subr.mxu0 0.0
    %504 = vmatpush1.msra.mxu0 0.0
    %505 = vmatprep.subr.mxu0 0.0
    %506 = vmatpush1.msra.mxu0 0.0
    %507 = vmatprep.subr.mxu0 0.0
    %508 = vmatpush1.msra.mxu0 0.0
    %509 = vmatprep.subr.mxu0 0.0
    %510 = vmatpush1.msra.mxu0 0.0
    %511 = vmatprep.subr.mxu0 0.0
    %512 = vmatpush1.msra.mxu0 0.0
    %513 = vmatprep.subr.mxu0 0.0
    %514 = vmatpush1.msra.mxu0 0.0
    %515 = vmatprep.subr.mxu0 0.0
    %516 = vmatpush1.msra.mxu0 0.0
    %517 = vmatprep.mubr.f32.mxu0 0.0
    %v518 = vand.u32 %v74, 4294901760
    %v519 = vsub.f32 %v74, %v518
    %v520 = vand.u32 %v519, 4294901760
    %521 = vmatmul.mubr.f32.gmra.mrb[0].mxu0 %v520
    %v522 = vpop.f32.mrb[0].mxu0
    %v523 = vadd.f32 %v417, %v522
    %v524 = vpop.f32.mrb[0].mxu0
    %v525 = vadd.f32 %v419, %v524
    %526 = vmatprep.mubr.f32.mxu0 0.0
    %v527 = vand.u32 %v76, 4294901760
    %v528 = vsub.f32 %v76, %v527
    %v529 = vand.u32 %v528, 4294901760
    %530 = vmatmul.mubr.f32.gmra.mrb[0].mxu0 %v529
    %v531 = vpop.f32.mrb[0].mxu0
    %v532 = vadd.f32 %v425, %v531
    %v533 = vpop.f32.mrb[0].mxu0
    %v534 = vadd.f32 %v427, %v533
    %535 = vmatprep.mubr.f32.mxu0 0.0
    %v536 = vand.u32 %v78, 4294901760
    %v537 = vsub.f32 %v78, %v536
    %v538 = vand.u32 %v537, 4294901760
    %539 = vmatmul.mubr.f32.gmra.mrb[0].mxu0 %v538
    %v540 = vpop.f32.mrb[0].mxu0
    %v541 = vadd.f32 %v433, %v540
    %v542 = vpop.f32.mrb[0].mxu0
    %v543 = vadd.f32 %v435, %v542
    %544 = vmatprep.mubr.f32.mxu0 0.0
    %v545 = vand.u32 %v80, 4294901760
    %v546 = vsub.f32 %v80, %v545
    %v547 = vand.u32 %v546, 4294901760
    %548 = vmatmul.mubr.f32.gmra.mrb[0].mxu0 %v547
    %v549 = vpop.f32.mrb[0].mxu0
    %v550 = vadd.f32 %v441, %v549
    %v551 = vpop.f32.mrb[0].mxu0
    %v552 = vadd.f32 %v443, %v551
    %553 = vdwg.mxu0
    %v554 = vand.u32 %v46, 4294901760
    %v555 = vsub.f32 %v46, %v554
    %v556 = vand.u32 %v555, 4294901760
    %557 = vmatprep.subr.mxu0 %v556
    %v558 = vand.u32 %v45, 4294901760
    %v559 = vsub.f32 %v45, %v558
    %v560 = vand.u32 %v559, 4294901760
    %561 = vmatpush1.msra.mxu0 %v560
    %v562 = vand.u32 %v48, 4294901760
    %v563 = vsub.f32 %v48, %v562
    %v564 = vand.u32 %v563, 4294901760
    %565 = vmatprep.subr.mxu0 %v564
    %v566 = vand.u32 %v47, 4294901760
    %v567 = vsub.f32 %v47, %v566
    %v568 = vand.u32 %v567, 4294901760
    %569 = vmatpush1.msra.mxu0 %v568
    %v570 = vand.u32 %v50, 4294901760
    %v571 = vsub.f32 %v50, %v570
    %v572 = vand.u32 %v571, 4294901760
    %573 = vmatprep.subr.mxu0 %v572
    %v574 = vand.u32 %v49, 4294901760
    %v575 = vsub.f32 %v49, %v574
    %v576 = vand.u32 %v575, 4294901760
    %577 = vmatpush1.msra.mxu0 %v576
    %v578 = vand.u32 %v52, 4294901760
    %v579 = vsub.f32 %v52, %v578
    %v580 = vand.u32 %v579, 4294901760
    %581 = vmatprep.subr.mxu0 %v580
    %v582 = vand.u32 %v51, 4294901760
    %v583 = vsub.f32 %v51, %v582
    %v584 = vand.u32 %v583, 4294901760
    %585 = vmatpush1.msra.mxu0 %v584
    %586 = vmatprep.subr.mxu0 0.0
    %587 = vmatpush1.msra.mxu0 0.0
    %588 = vmatprep.subr.mxu0 0.0
    %589 = vmatpush1.msra.mxu0 0.0
    %590 = vmatprep.subr.mxu0 0.0
    %591 = vmatpush1.msra.mxu0 0.0
    %592 = vmatprep.subr.mxu0 0.0
    %593 = vmatpush1.msra.mxu0 0.0
    %594 = vmatprep.subr.mxu0 0.0
    %595 = vmatpush1.msra.mxu0 0.0
    %596 = vmatprep.subr.mxu0 0.0
    %597 = vmatpush1.msra.mxu0 0.0
    %598 = vmatprep.subr.mxu0 0.0
    %599 = vmatpush1.msra.mxu0 0.0
    %600 = vmatprep.subr.mxu0 0.0
    %601 = vmatpush1.msra.mxu0 0.0
    %602 = vmatprep.subr.mxu0 0.0
    %603 = vmatpush1.msra.mxu0 0.0
    %604 = vmatprep.subr.mxu0 0.0
    %605 = vmatpush1.msra.mxu0 0.0
    %606 = vmatprep.subr.mxu0 0.0
    %607 = vmatpush1.msra.mxu0 0.0
    %608 = vmatprep.subr.mxu0 0.0
    %609 = vmatpush1.msra.mxu0 0.0
    %610 = vmatprep.subr.mxu0 0.0
    %611 = vmatpush1.msra.mxu0 0.0
    %612 = vmatprep.subr.mxu0 0.0
    %613 = vmatpush1.msra.mxu0 0.0
    %614 = vmatprep.subr.mxu0 0.0
    %615 = vmatpush1.msra.mxu0 0.0
    %616 = vmatprep.subr.mxu0 0.0
    %617 = vmatpush1.msra.mxu0 0.0
    %618 = vmatprep.subr.mxu0 0.0
    %619 = vmatpush1.msra.mxu0 0.0
    %620 = vmatprep.subr.mxu0 0.0
    %621 = vmatpush1.msra.mxu0 0.0
    %622 = vmatprep.subr.mxu0 0.0
    %623 = vmatpush1.msra.mxu0 0.0
    %624 = vmatprep.subr.mxu0 0.0
    %625 = vmatpush1.msra.mxu0 0.0
    %626 = vmatprep.subr.mxu0 0.0
    %627 = vmatpush1.msra.mxu0 0.0
    %628 = vmatprep.subr.mxu0 0.0
    %629 = vmatpush1.msra.mxu0 0.0
    %630 = vmatprep.subr.mxu0 0.0
    %631 = vmatpush1.msra.mxu0 0.0
    %632 = vmatprep.subr.mxu0 0.0
    %633 = vmatpush1.msra.mxu0 0.0
    %634 = vmatprep.subr.mxu0 0.0
    %635 = vmatpush1.msra.mxu0 0.0
    %636 = vmatprep.subr.mxu0 0.0
    %637 = vmatpush1.msra.mxu0 0.0
    %638 = vmatprep.subr.mxu0 0.0
    %639 = vmatpush1.msra.mxu0 0.0
    %640 = vmatprep.subr.mxu0 0.0
    %641 = vmatpush1.msra.mxu0 0.0
    %642 = vmatprep.mubr.f32.mxu0 0.0
    %v643 = vand.u32 %v74, 4294901760
    %644 = vmatmul.mubr.f32.gmra.mrb[0].mxu0 %v643
    %v645 = vpop.f32.mrb[0].mxu0
    %v646 = vadd.f32 %v523, %v645
    %v647 = vpop.f32.mrb[0].mxu0
    %v648 = vadd.f32 %v525, %v647
    %649 = vmatprep.mubr.f32.mxu0 0.0
    %v650 = vand.u32 %v76, 4294901760
    %651 = vmatmul.mubr.f32.gmra.mrb[0].mxu0 %v650
    %v652 = vpop.f32.mrb[0].mxu0
    %v653 = vadd.f32 %v532, %v652
    %v654 = vpop.f32.mrb[0].mxu0
    %v655 = vadd.f32 %v534, %v654
    %656 = vmatprep.mubr.f32.mxu0 0.0
    %v657 = vand.u32 %v78, 4294901760
    %658 = vmatmul.mubr.f32.gmra.mrb[0].mxu0 %v657
    %v659 = vpop.f32.mrb[0].mxu0
    %v660 = vadd.f32 %v541, %v659
    %v661 = vpop.f32.mrb[0].mxu0
    %v662 = vadd.f32 %v543, %v661
    %663 = vmatprep.mubr.f32.mxu0 0.0
    %v664 = vand.u32 %v80, 4294901760
    %665 = vmatmul.mubr.f32.gmra.mrb[0].mxu0 %v664
    %v666 = vpop.f32.mrb[0].mxu0
    %v667 = vadd.f32 %v550, %v666
    %v668 = vpop.f32.mrb[0].mxu0
    %v669 = vadd.f32 %v552, %v668
    %670 = vdwg.mxu0
    %v671 = vand.u32 %v46, 4294901760
    %672 = vmatprep.subr.mxu0 %v671
    %v673 = vand.u32 %v45, 4294901760
    %674 = vmatpush1.msra.mxu0 %v673
    %v675 = vand.u32 %v48, 4294901760
    %676 = vmatprep.subr.mxu0 %v675
    %v677 = vand.u32 %v47, 4294901760
    %678 = vmatpush1.msra.mxu0 %v677
    %v679 = vand.u32 %v50, 4294901760
    %680 = vmatprep.subr.mxu0 %v679
    %v681 = vand.u32 %v49, 4294901760
    %682 = vmatpush1.msra.mxu0 %v681
    %v683 = vand.u32 %v52, 4294901760
    %684 = vmatprep.subr.mxu0 %v683
    %v685 = vand.u32 %v51, 4294901760
    %686 = vmatpush1.msra.mxu0 %v685
    %687 = vmatprep.subr.mxu0 0.0
    %688 = vmatpush1.msra.mxu0 0.0
    %689 = vmatprep.subr.mxu0 0.0
    %690 = vmatpush1.msra.mxu0 0.0
    %691 = vmatprep.subr.mxu0 0.0
    %692 = vmatpush1.msra.mxu0 0.0
    %693 = vmatprep.subr.mxu0 0.0
    %694 = vmatpush1.msra.mxu0 0.0
    %695 = vmatprep.subr.mxu0 0.0
    %696 = vmatpush1.msra.mxu0 0.0
    %697 = vmatprep.subr.mxu0 0.0
    %698 = vmatpush1.msra.mxu0 0.0
    %699 = vmatprep.subr.mxu0 0.0
    %700 = vmatpush1.msra.mxu0 0.0
    %701 = vmatprep.subr.mxu0 0.0
    %702 = vmatpush1.msra.mxu0 0.0
    %703 = vmatprep.subr.mxu0 0.0
    %704 = vmatpush1.msra.mxu0 0.0
    %705 = vmatprep.subr.mxu0 0.0
    %706 = vmatpush1.msra.mxu0 0.0
    %707 = vmatprep.subr.mxu0 0.0
    %708 = vmatpush1.msra.mxu0 0.0
    %709 = vmatprep.subr.mxu0 0.0
    %710 = vmatpush1.msra.mxu0 0.0
    %711 = vmatprep.subr.mxu0 0.0
    %712 = vmatpush1.msra.mxu0 0.0
    %713 = vmatprep.subr.mxu0 0.0
    %714 = vmatpush1.msra.mxu0 0.0
    %715 = vmatprep.subr.mxu0 0.0
    %716 = vmatpush1.msra.mxu0 0.0
    %717 = vmatprep.subr.mxu0 0.0
    %718 = vmatpush1.msra.mxu0 0.0
    %719 = vmatprep.subr.mxu0 0.0
    %720 = vmatpush1.msra.mxu0 0.0
    %721 = vmatprep.subr.mxu0 0.0
    %722 = vmatpush1.msra.mxu0 0.0
    %723 = vmatprep.subr.mxu0 0.0
    %724 = vmatpush1.msra.mxu0 0.0
    %725 = vmatprep.subr.mxu0 0.0
    %726 = vmatpush1.msra.mxu0 0.0
    %727 = vmatprep.subr.mxu0 0.0
    %728 = vmatpush1.msra.mxu0 0.0
    %729 = vmatprep.subr.mxu0 0.0
    %730 = vmatpush1.msra.mxu0 0.0
    %731 = vmatprep.subr.mxu0 0.0
    %732 = vmatpush1.msra.mxu0 0.0
    %733 = vmatprep.subr.mxu0 0.0
    %734 = vmatpush1.msra.mxu0 0.0
    %735 = vmatprep.subr.mxu0 0.0
    %736 = vmatpush1.msra.mxu0 0.0
    %737 = vmatprep.subr.mxu0 0.0
    %738 = vmatpush1.msra.mxu0 0.0
    %739 = vmatprep.subr.mxu0 0.0
    %740 = vmatpush1.msra.mxu0 0.0
    %741 = vmatprep.subr.mxu0 0.0
    %742 = vmatpush1.msra.mxu0 0.0
    %743 = vmatprep.mubr.f32.mxu0 0.0
    %v744 = vand.u32 %v74, 4294901760
    %745 = vmatmul.mubr.f32.gmra.mrb[0].mxu0 %v744
    %v746 = vpop.f32.mrb[0].mxu0
    %v747 = vadd.f32 %v646, %v746
    %v748 = vpop.f32.mrb[0].mxu0
    %v749 = vadd.f32 %v648, %v748
    %750 = vmatprep.mubr.f32.mxu0 0.0
    %v751 = vand.u32 %v76, 4294901760
    %752 = vmatmul.mubr.f32.gmra.mrb[0].mxu0 %v751
    %v753 = vpop.f32.mrb[0].mxu0
    %v754 = vadd.f32 %v653, %v753
    %v755 = vpop.f32.mrb[0].mxu0
    %v756 = vadd.f32 %v655, %v755
    %757 = vmatprep.mubr.f32.mxu0 0.0
    %v758 = vand.u32 %v78, 4294901760
    %759 = vmatmul.mubr.f32.gmra.mrb[0].mxu0 %v758
    %v760 = vpop.f32.mrb[0].mxu0
    %v761 = vadd.f32 %v660, %v760
    %v762 = vpop.f32.mrb[0].mxu0
    %v763 = vadd.f32 %v662, %v762
    %764 = vmatprep.mubr.f32.mxu0 0.0
    %v765 = vand.u32 %v80, 4294901760
    %766 = vmatmul.mubr.f32.gmra.mrb[0].mxu0 %v765
    %v767 = vpop.f32.mrb[0].mxu0
    %v768 = vadd.f32 %v667, %v767
    %v769 = vpop.f32.mrb[0].mxu0
    %v770 = vadd.f32 %v669, %v769
    %771 = vdwg.mxu0
    %v772 = vsel %vm73, %v33, 0
    %v774 = vsel %vm73, %v34, 0
    %v776 = vsel %vm73, %v35, 0
    %v778 = vsel %vm73, %v36, 0
    %v780 = vand.u32 %v38, 4294901760
    %781 = vmatprep.subr.mxu0 %v780
    %v782 = vand.u32 %v37, 4294901760
    %783 = vmatpush1.msra.mxu0 %v782
    %v784 = vand.u32 %v40, 4294901760
    %785 = vmatprep.subr.mxu0 %v784
    %v786 = vand.u32 %v39, 4294901760
    %787 = vmatpush1.msra.mxu0 %v786
    %v788 = vand.u32 %v42, 4294901760
    %789 = vmatprep.subr.mxu0 %v788
    %v790 = vand.u32 %v41, 4294901760
    %791 = vmatpush1.msra.mxu0 %v790
    %v792 = vand.u32 %v44, 4294901760
    %793 = vmatprep.subr.mxu0 %v792
    %v794 = vand.u32 %v43, 4294901760
    %795 = vmatpush1.msra.mxu0 %v794
    %796 = vmatprep.subr.mxu0 0.0
    %797 = vmatpush1.msra.mxu0 0.0
    %798 = vmatprep.subr.mxu0 0.0
    %799 = vmatpush1.msra.mxu0 0.0
    %800 = vmatprep.subr.mxu0 0.0
    %801 = vmatpush1.msra.mxu0 0.0
    %802 = vmatprep.subr.mxu0 0.0
    %803 = vmatpush1.msra.mxu0 0.0
    %804 = vmatprep.subr.mxu0 0.0
    %805 = vmatpush1.msra.mxu0 0.0
    %806 = vmatprep.subr.mxu0 0.0
    %807 = vmatpush1.msra.mxu0 0.0
    %808 = vmatprep.subr.mxu0 0.0
    %809 = vmatpush1.msra.mxu0 0.0
    %810 = vmatprep.subr.mxu0 0.0
    %811 = vmatpush1.msra.mxu0 0.0
    %812 = vmatprep.subr.mxu0 0.0
    %813 = vmatpush1.msra.mxu0 0.0
    %814 = vmatprep.subr.mxu0 0.0
    %815 = vmatpush1.msra.mxu0 0.0
    %816 = vmatprep.subr.mxu0 0.0
    %817 = vmatpush1.msra.mxu0 0.0
    %818 = vmatprep.subr.mxu0 0.0
    %819 = vmatpush1.msra.mxu0 0.0
    %820 = vmatprep.subr.mxu0 0.0
    %821 = vmatpush1.msra.mxu0 0.0
    %822 = vmatprep.subr.mxu0 0.0
    %823 = vmatpush1.msra.mxu0 0.0
    %824 = vmatprep.subr.mxu0 0.0
    %825 = vmatpush1.msra.mxu0 0.0
    %826 = vmatprep.subr.mxu0 0.0
    %827 = vmatpush1.msra.mxu0 0.0
    %828 = vmatprep.subr.mxu0 0.0
    %829 = vmatpush1.msra.mxu0 0.0
    %830 = vmatprep.subr.mxu0 0.0
    %831 = vmatpush1.msra.mxu0 0.0
    %832 = vmatprep.subr.mxu0 0.0
    %833 = vmatpush1.msra.mxu0 0.0
    %834 = vmatprep.subr.mxu0 0.0
    %835 = vmatpush1.msra.mxu0 0.0
    %836 = vmatprep.subr.mxu0 0.0
    %837 = vmatpush1.msra.mxu0 0.0
    %838 = vmatprep.subr.mxu0 0.0
    %839 = vmatpush1.msra.mxu0 0.0
    %840 = vmatprep.subr.mxu0 0.0
    %841 = vmatpush1.msra.mxu0 0.0
    %842 = vmatprep.subr.mxu0 0.0
    %843 = vmatpush1.msra.mxu0 0.0
    %844 = vmatprep.subr.mxu0 0.0
    %845 = vmatpush1.msra.mxu0 0.0
    %846 = vmatprep.subr.mxu0 0.0
    %847 = vmatpush1.msra.mxu0 0.0
    %848 = vmatprep.subr.mxu0 0.0
    %849 = vmatpush1.msra.mxu0 0.0
    %850 = vmatprep.subr.mxu0 0.0
    %851 = vmatpush1.msra.mxu0 0.0
    %852 = vmatprep.mubr.f32.mxu0 0.0
    %v853 = vand.u32 %v772, 4294901760
    %v854 = vsub.f32 %v772, %v853
    %v855 = vand.u32 %v854, 4294901760
    %v856 = vsub.f32 %v854, %v855
    %v857 = vand.u32 %v856, 4294901760
    %858 = vmatmul.mubr.f32.gmra.mrb[0].mxu0 %v857
    %v859 = vpop.f32.mrb[0].mxu0
    %v860 = vadd.f32 %v747, %v859
    %v861 = vpop.f32.mrb[0].mxu0
    %v862 = vadd.f32 %v749, %v861
    %863 = vmatprep.mubr.f32.mxu0 0.0
    %v864 = vand.u32 %v774, 4294901760
    %v865 = vsub.f32 %v774, %v864
    %v866 = vand.u32 %v865, 4294901760
    %v867 = vsub.f32 %v865, %v866
    %v868 = vand.u32 %v867, 4294901760
    %869 = vmatmul.mubr.f32.gmra.mrb[0].mxu0 %v868
    %v870 = vpop.f32.mrb[0].mxu0
    %v871 = vadd.f32 %v754, %v870
    %v872 = vpop.f32.mrb[0].mxu0
    %v873 = vadd.f32 %v756, %v872
    %874 = vmatprep.mubr.f32.mxu0 0.0
    %v875 = vand.u32 %v776, 4294901760
    %v876 = vsub.f32 %v776, %v875
    %v877 = vand.u32 %v876, 4294901760
    %v878 = vsub.f32 %v876, %v877
    %v879 = vand.u32 %v878, 4294901760
    %880 = vmatmul.mubr.f32.gmra.mrb[0].mxu0 %v879
    %v881 = vpop.f32.mrb[0].mxu0
    %v882 = vadd.f32 %v761, %v881
    %v883 = vpop.f32.mrb[0].mxu0
    %v884 = vadd.f32 %v763, %v883
    %885 = vmatprep.mubr.f32.mxu0 0.0
    %v886 = vand.u32 %v778, 4294901760
    %v887 = vsub.f32 %v778, %v886
    %v888 = vand.u32 %v887, 4294901760
    %v889 = vsub.f32 %v887, %v888
    %v890 = vand.u32 %v889, 4294901760
    %891 = vmatmul.mubr.f32.gmra.mrb[0].mxu0 %v890
    %v892 = vpop.f32.mrb[0].mxu0
    %v893 = vadd.f32 %v768, %v892
    %v894 = vpop.f32.mrb[0].mxu0
    %v895 = vadd.f32 %v770, %v894
    %896 = vdwg.mxu0
    %v897 = vand.u32 %v38, 4294901760
    %v898 = vsub.f32 %v38, %v897
    %v899 = vand.u32 %v898, 4294901760
    %v900 = vsub.f32 %v898, %v899
    %v901 = vand.u32 %v900, 4294901760
    %902 = vmatprep.subr.mxu0 %v901
    %v903 = vand.u32 %v37, 4294901760
    %v904 = vsub.f32 %v37, %v903
    %v905 = vand.u32 %v904, 4294901760
    %v906 = vsub.f32 %v904, %v905
    %v907 = vand.u32 %v906, 4294901760
    %908 = vmatpush1.msra.mxu0 %v907
    %v909 = vand.u32 %v40, 4294901760
    %v910 = vsub.f32 %v40, %v909
    %v911 = vand.u32 %v910, 4294901760
    %v912 = vsub.f32 %v910, %v911
    %v913 = vand.u32 %v912, 4294901760
    %914 = vmatprep.subr.mxu0 %v913
    %v915 = vand.u32 %v39, 4294901760
    %v916 = vsub.f32 %v39, %v915
    %v917 = vand.u32 %v916, 4294901760
    %v918 = vsub.f32 %v916, %v917
    %v919 = vand.u32 %v918, 4294901760
    %920 = vmatpush1.msra.mxu0 %v919
    %v921 = vand.u32 %v42, 4294901760
    %v922 = vsub.f32 %v42, %v921
    %v923 = vand.u32 %v922, 4294901760
    %v924 = vsub.f32 %v922, %v923
    %v925 = vand.u32 %v924, 4294901760
    %926 = vmatprep.subr.mxu0 %v925
    %v927 = vand.u32 %v41, 4294901760
    %v928 = vsub.f32 %v41, %v927
    %v929 = vand.u32 %v928, 4294901760
    %v930 = vsub.f32 %v928, %v929
    %v931 = vand.u32 %v930, 4294901760
    %932 = vmatpush1.msra.mxu0 %v931
    %v933 = vand.u32 %v44, 4294901760
    %v934 = vsub.f32 %v44, %v933
    %v935 = vand.u32 %v934, 4294901760
    %v936 = vsub.f32 %v934, %v935
    %v937 = vand.u32 %v936, 4294901760
    %938 = vmatprep.subr.mxu0 %v937
    %v939 = vand.u32 %v43, 4294901760
    %v940 = vsub.f32 %v43, %v939
    %v941 = vand.u32 %v940, 4294901760
    %v942 = vsub.f32 %v940, %v941
    %v943 = vand.u32 %v942, 4294901760
    %944 = vmatpush1.msra.mxu0 %v943
    %945 = vmatprep.subr.mxu0 0.0
    %946 = vmatpush1.msra.mxu0 0.0
    %947 = vmatprep.subr.mxu0 0.0
    %948 = vmatpush1.msra.mxu0 0.0
    %949 = vmatprep.subr.mxu0 0.0
    %950 = vmatpush1.msra.mxu0 0.0
    %951 = vmatprep.subr.mxu0 0.0
    %952 = vmatpush1.msra.mxu0 0.0
    %953 = vmatprep.subr.mxu0 0.0
    %954 = vmatpush1.msra.mxu0 0.0
    %955 = vmatprep.subr.mxu0 0.0
    %956 = vmatpush1.msra.mxu0 0.0
    %957 = vmatprep.subr.mxu0 0.0
    %958 = vmatpush1.msra.mxu0 0.0
    %959 = vmatprep.subr.mxu0 0.0
    %960 = vmatpush1.msra.mxu0 0.0
    %961 = vmatprep.subr.mxu0 0.0
    %962 = vmatpush1.msra.mxu0 0.0
    %963 = vmatprep.subr.mxu0 0.0
    %964 = vmatpush1.msra.mxu0 0.0
    %965 = vmatprep.subr.mxu0 0.0
    %966 = vmatpush1.msra.mxu0 0.0
    %967 = vmatprep.subr.mxu0 0.0
    %968 = vmatpush1.msra.mxu0 0.0
    %969 = vmatprep.subr.mxu0 0.0
    %970 = vmatpush1.msra.mxu0 0.0
    %971 = vmatprep.subr.mxu0 0.0
    %972 = vmatpush1.msra.mxu0 0.0
    %973 = vmatprep.subr.mxu0 0.0
    %974 = vmatpush1.msra.mxu0 0.0
    %975 = vmatprep.subr.mxu0 0.0
    %976 = vmatpush1.msra.mxu0 0.0
    %977 = vmatprep.subr.mxu0 0.0
    %978 = vmatpush1.msra.mxu0 0.0
    %979 = vmatprep.subr.mxu0 0.0
    %980 = vmatpush1.msra.mxu0 0.0
    %981 = vmatprep.subr.mxu0 0.0
    %982 = vmatpush1.msra.mxu0 0.0
    %983 = vmatprep.subr.mxu0 0.0
    %984 = vmatpush1.msra.mxu0 0.0
    %985 = vmatprep.subr.mxu0 0.0
    %986 = vmatpush1.msra.mxu0 0.0
    %987 = vmatprep.subr.mxu0 0.0
    %988 = vmatpush1.msra.mxu0 0.0
    %989 = vmatprep.subr.mxu0 0.0
    %990 = vmatpush1.msra.mxu0 0.0
    %991 = vmatprep.subr.mxu0 0.0
    %992 = vmatpush1.msra.mxu0 0.0
    %993 = vmatprep.subr.mxu0 0.0
    %994 = vmatpush1.msra.mxu0 0.0
    %995 = vmatprep.subr.mxu0 0.0
    %996 = vmatpush1.msra.mxu0 0.0
    %997 = vmatprep.subr.mxu0 0.0
    %998 = vmatpush1.msra.mxu0 0.0
    %999 = vmatprep.subr.mxu0 0.0
    %1000 = vmatpush1.msra.mxu0 0.0
    %1001 = vmatprep.mubr.f32.mxu0 0.0
    %v1002 = vand.u32 %v772, 4294901760
    %1003 = vmatmul.mubr.f32.gmra.mrb[0].mxu0 %v1002
    %v1004 = vpop.f32.mrb[0].mxu0
    %v1005 = vadd.f32 %v860, %v1004
    %v1006 = vpop.f32.mrb[0].mxu0
    %v1007 = vadd.f32 %v862, %v1006
    %1008 = vmatprep.mubr.f32.mxu0 0.0
    %v1009 = vand.u32 %v774, 4294901760
    %1010 = vmatmul.mubr.f32.gmra.mrb[0].mxu0 %v1009
    %v1011 = vpop.f32.mrb[0].mxu0
    %v1012 = vadd.f32 %v871, %v1011
    %v1013 = vpop.f32.mrb[0].mxu0
    %v1014 = vadd.f32 %v873, %v1013
    %1015 = vmatprep.mubr.f32.mxu0 0.0
    %v1016 = vand.u32 %v776, 4294901760
    %1017 = vmatmul.mubr.f32.gmra.mrb[0].mxu0 %v1016
    %v1018 = vpop.f32.mrb[0].mxu0
    %v1019 = vadd.f32 %v882, %v1018
    %v1020 = vpop.f32.mrb[0].mxu0
    %v1021 = vadd.f32 %v884, %v1020
    %1022 = vmatprep.mubr.f32.mxu0 0.0
    %v1023 = vand.u32 %v778, 4294901760
    %1024 = vmatmul.mubr.f32.gmra.mrb[0].mxu0 %v1023
    %v1025 = vpop.f32.mrb[0].mxu0
    %v1026 = vadd.f32 %v893, %v1025
    %v1027 = vpop.f32.mrb[0].mxu0
    %v1028 = vadd.f32 %v895, %v1027
    %1029 = vdwg.mxu0
    %v1030 = vand.u32 %v38, 4294901760
    %v1031 = vsub.f32 %v38, %v1030
    %1032 = vmatprep.subr.mxu0 %v1031
    %v1033 = vand.u32 %v37, 4294901760
    %v1034 = vsub.f32 %v37, %v1033
    %1035 = vmatpush1.msra.mxu0 %v1034
    %v1036 = vand.u32 %v40, 4294901760
    %v1037 = vsub.f32 %v40, %v1036
    %1038 = vmatprep.subr.mxu0 %v1037
    %v1039 = vand.u32 %v39, 4294901760
    %v1040 = vsub.f32 %v39, %v1039
    %1041 = vmatpush1.msra.mxu0 %v1040
    %v1042 = vand.u32 %v42, 4294901760
    %v1043 = vsub.f32 %v42, %v1042
    %1044 = vmatprep.subr.mxu0 %v1043
    %v1045 = vand.u32 %v41, 4294901760
    %v1046 = vsub.f32 %v41, %v1045
    %1047 = vmatpush1.msra.mxu0 %v1046
    %v1048 = vand.u32 %v44, 4294901760
    %v1049 = vsub.f32 %v44, %v1048
    %1050 = vmatprep.subr.mxu0 %v1049
    %v1051 = vand.u32 %v43, 4294901760
    %v1052 = vsub.f32 %v43, %v1051
    %1053 = vmatpush1.msra.mxu0 %v1052
    %1054 = vmatprep.subr.mxu0 0.0
    %1055 = vmatpush1.msra.mxu0 0.0
    %1056 = vmatprep.subr.mxu0 0.0
    %1057 = vmatpush1.msra.mxu0 0.0
    %1058 = vmatprep.subr.mxu0 0.0
    %1059 = vmatpush1.msra.mxu0 0.0
    %1060 = vmatprep.subr.mxu0 0.0
    %1061 = vmatpush1.msra.mxu0 0.0
    %1062 = vmatprep.subr.mxu0 0.0
    %1063 = vmatpush1.msra.mxu0 0.0
    %1064 = vmatprep.subr.mxu0 0.0
    %1065 = vmatpush1.msra.mxu0 0.0
    %1066 = vmatprep.subr.mxu0 0.0
    %1067 = vmatpush1.msra.mxu0 0.0
    %1068 = vmatprep.subr.mxu0 0.0
    %1069 = vmatpush1.msra.mxu0 0.0
    %1070 = vmatprep.subr.mxu0 0.0
    %1071 = vmatpush1.msra.mxu0 0.0
    %1072 = vmatprep.subr.mxu0 0.0
    %1073 = vmatpush1.msra.mxu0 0.0
    %1074 = vmatprep.subr.mxu0 0.0
    %1075 = vmatpush1.msra.mxu0 0.0
    %1076 = vmatprep.subr.mxu0 0.0
    %1077 = vmatpush1.msra.mxu0 0.0
    %1078 = vmatprep.subr.mxu0 0.0
    %1079 = vmatpush1.msra.mxu0 0.0
    %1080 = vmatprep.subr.mxu0 0.0
    %1081 = vmatpush1.msra.mxu0 0.0
    %1082 = vmatprep.subr.mxu0 0.0
    %1083 = vmatpush1.msra.mxu0 0.0
    %1084 = vmatprep.subr.mxu0 0.0
    %1085 = vmatpush1.msra.mxu0 0.0
    %1086 = vmatprep.subr.mxu0 0.0
    %1087 = vmatpush1.msra.mxu0 0.0
    %1088 = vmatprep.subr.mxu0 0.0
    %1089 = vmatpush1.msra.mxu0 0.0
    %1090 = vmatprep.subr.mxu0 0.0
    %1091 = vmatpush1.msra.mxu0 0.0
    %1092 = vmatprep.subr.mxu0 0.0
    %1093 = vmatpush1.msra.mxu0 0.0
    %1094 = vmatprep.subr.mxu0 0.0
    %1095 = vmatpush1.msra.mxu0 0.0
    %1096 = vmatprep.subr.mxu0 0.0
    %1097 = vmatpush1.msra.mxu0 0.0
    %1098 = vmatprep.subr.mxu0 0.0
    %1099 = vmatpush1.msra.mxu0 0.0
    %1100 = vmatprep.subr.mxu0 0.0
    %1101 = vmatpush1.msra.mxu0 0.0
    %1102 = vmatprep.subr.mxu0 0.0
    %1103 = vmatpush1.msra.mxu0 0.0
    %1104 = vmatprep.subr.mxu0 0.0
    %1105 = vmatpush1.msra.mxu0 0.0
    %1106 = vmatprep.subr.mxu0 0.0
    %1107 = vmatpush1.msra.mxu0 0.0
    %1108 = vmatprep.subr.mxu0 0.0
    %1109 = vmatpush1.msra.mxu0 0.0
    %1110 = vmatprep.mubr.f32.mxu0 0.0
    %v1111 = vand.u32 %v772, 4294901760
    %v1112 = vsub.f32 %v772, %v1111
    %1113 = vmatmul.mubr.f32.gmra.mrb[0].mxu0 %v1112
    %v1114 = vpop.f32.mrb[0].mxu0
    %v1115 = vadd.f32 %v1005, %v1114
    %v1116 = vpop.f32.mrb[0].mxu0
    %v1117 = vadd.f32 %v1007, %v1116
    %1118 = vmatprep.mubr.f32.mxu0 0.0
    %v1119 = vand.u32 %v774, 4294901760
    %v1120 = vsub.f32 %v774, %v1119
    %1121 = vmatmul.mubr.f32.gmra.mrb[0].mxu0 %v1120
    %v1122 = vpop.f32.mrb[0].mxu0
    %v1123 = vadd.f32 %v1012, %v1122
    %v1124 = vpop.f32.mrb[0].mxu0
    %v1125 = vadd.f32 %v1014, %v1124
    %1126 = vmatprep.mubr.f32.mxu0 0.0
    %v1127 = vand.u32 %v776, 4294901760
    %v1128 = vsub.f32 %v776, %v1127
    %1129 = vmatmul.mubr.f32.gmra.mrb[0].mxu0 %v1128
    %v1130 = vpop.f32.mrb[0].mxu0
    %v1131 = vadd.f32 %v1019, %v1130
    %v1132 = vpop.f32.mrb[0].mxu0
    %v1133 = vadd.f32 %v1021, %v1132
    %1134 = vmatprep.mubr.f32.mxu0 0.0
    %v1135 = vand.u32 %v778, 4294901760
    %v1136 = vsub.f32 %v778, %v1135
    %1137 = vmatmul.mubr.f32.gmra.mrb[0].mxu0 %v1136
    %v1138 = vpop.f32.mrb[0].mxu0
    %v1139 = vadd.f32 %v1026, %v1138
    %v1140 = vpop.f32.mrb[0].mxu0
    %v1141 = vadd.f32 %v1028, %v1140
    %1142 = vdwg.mxu0
    %v1143 = vand.u32 %v38, 4294901760
    %1144 = vmatprep.subr.mxu0 %v1143
    %v1145 = vand.u32 %v37, 4294901760
    %1146 = vmatpush1.msra.mxu0 %v1145
    %v1147 = vand.u32 %v40, 4294901760
    %1148 = vmatprep.subr.mxu0 %v1147
    %v1149 = vand.u32 %v39, 4294901760
    %1150 = vmatpush1.msra.mxu0 %v1149
    %v1151 = vand.u32 %v42, 4294901760
    %1152 = vmatprep.subr.mxu0 %v1151
    %v1153 = vand.u32 %v41, 4294901760
    %1154 = vmatpush1.msra.mxu0 %v1153
    %v1155 = vand.u32 %v44, 4294901760
    %1156 = vmatprep.subr.mxu0 %v1155
    %v1157 = vand.u32 %v43, 4294901760
    %1158 = vmatpush1.msra.mxu0 %v1157
    %1159 = vmatprep.subr.mxu0 0.0
    %1160 = vmatpush1.msra.mxu0 0.0
    %1161 = vmatprep.subr.mxu0 0.0
    %1162 = vmatpush1.msra.mxu0 0.0
    %1163 = vmatprep.subr.mxu0 0.0
    %1164 = vmatpush1.msra.mxu0 0.0
    %1165 = vmatprep.subr.mxu0 0.0
    %1166 = vmatpush1.msra.mxu0 0.0
    %1167 = vmatprep.subr.mxu0 0.0
    %1168 = vmatpush1.msra.mxu0 0.0
    %1169 = vmatprep.subr.mxu0 0.0
    %1170 = vmatpush1.msra.mxu0 0.0
    %1171 = vmatprep.subr.mxu0 0.0
    %1172 = vmatpush1.msra.mxu0 0.0
    %1173 = vmatprep.subr.mxu0 0.0
    %1174 = vmatpush1.msra.mxu0 0.0
    %1175 = vmatprep.subr.mxu0 0.0
    %1176 = vmatpush1.msra.mxu0 0.0
    %1177 = vmatprep.subr.mxu0 0.0
    %1178 = vmatpush1.msra.mxu0 0.0
    %1179 = vmatprep.subr.mxu0 0.0
    %1180 = vmatpush1.msra.mxu0 0.0
    %1181 = vmatprep.subr.mxu0 0.0
    %1182 = vmatpush1.msra.mxu0 0.0
    %1183 = vmatprep.subr.mxu0 0.0
    %1184 = vmatpush1.msra.mxu0 0.0
    %1185 = vmatprep.subr.mxu0 0.0
    %1186 = vmatpush1.msra.mxu0 0.0
    %1187 = vmatprep.subr.mxu0 0.0
    %1188 = vmatpush1.msra.mxu0 0.0
    %1189 = vmatprep.subr.mxu0 0.0
    %1190 = vmatpush1.msra.mxu0 0.0
    %1191 = vmatprep.subr.mxu0 0.0
    %1192 = vmatpush1.msra.mxu0 0.0
    %1193 = vmatprep.subr.mxu0 0.0
    %1194 = vmatpush1.msra.mxu0 0.0
    %1195 = vmatprep.subr.mxu0 0.0
    %1196 = vmatpush1.msra.mxu0 0.0
    %1197 = vmatprep.subr.mxu0 0.0
    %1198 = vmatpush1.msra.mxu0 0.0
    %1199 = vmatprep.subr.mxu0 0.0
    %1200 = vmatpush1.msra.mxu0 0.0
    %1201 = vmatprep.subr.mxu0 0.0
    %1202 = vmatpush1.msra.mxu0 0.0
    %1203 = vmatprep.subr.mxu0 0.0
    %1204 = vmatpush1.msra.mxu0 0.0
    %1205 = vmatprep.subr.mxu0 0.0
    %1206 = vmatpush1.msra.mxu0 0.0
    %1207 = vmatprep.subr.mxu0 0.0
    %1208 = vmatpush1.msra.mxu0 0.0
    %1209 = vmatprep.subr.mxu0 0.0
    %1210 = vmatpush1.msra.mxu0 0.0
    %1211 = vmatprep.subr.mxu0 0.0
    %1212 = vmatpush1.msra.mxu0 0.0
    %1213 = vmatprep.subr.mxu0 0.0
    %1214 = vmatpush1.msra.mxu0 0.0
    %1215 = vmatprep.mubr.f32.mxu0 0.0
    %v1216 = vand.u32 %v772, 4294901760
    %v1217 = vsub.f32 %v772, %v1216
    %v1218 = vand.u32 %v1217, 4294901760
    %1219 = vmatmul.mubr.f32.gmra.mrb[0].mxu0 %v1218
    %v1220 = vpop.f32.mrb[0].mxu0
    %v1221 = vadd.f32 %v1115, %v1220
    %v1222 = vpop.f32.mrb[0].mxu0
    %v1223 = vadd.f32 %v1117, %v1222
    %1224 = vmatprep.mubr.f32.mxu0 0.0
    %v1225 = vand.u32 %v774, 4294901760
    %v1226 = vsub.f32 %v774, %v1225
    %v1227 = vand.u32 %v1226, 4294901760
    %1228 = vmatmul.mubr.f32.gmra.mrb[0].mxu0 %v1227
    %v1229 = vpop.f32.mrb[0].mxu0
    %v1230 = vadd.f32 %v1123, %v1229
    %v1231 = vpop.f32.mrb[0].mxu0
    %v1232 = vadd.f32 %v1125, %v1231
    %1233 = vmatprep.mubr.f32.mxu0 0.0
    %v1234 = vand.u32 %v776, 4294901760
    %v1235 = vsub.f32 %v776, %v1234
    %v1236 = vand.u32 %v1235, 4294901760
    %1237 = vmatmul.mubr.f32.gmra.mrb[0].mxu0 %v1236
    %v1238 = vpop.f32.mrb[0].mxu0
    %v1239 = vadd.f32 %v1131, %v1238
    %v1240 = vpop.f32.mrb[0].mxu0
    %v1241 = vadd.f32 %v1133, %v1240
    %1242 = vmatprep.mubr.f32.mxu0 0.0
    %v1243 = vand.u32 %v778, 4294901760
    %v1244 = vsub.f32 %v778, %v1243
    %v1245 = vand.u32 %v1244, 4294901760
    %1246 = vmatmul.mubr.f32.gmra.mrb[0].mxu0 %v1245
    %v1247 = vpop.f32.mrb[0].mxu0
    %v1248 = vadd.f32 %v1139, %v1247
    %v1249 = vpop.f32.mrb[0].mxu0
    %v1250 = vadd.f32 %v1141, %v1249
    %1251 = vdwg.mxu0
    %v1252 = vand.u32 %v38, 4294901760
    %v1253 = vsub.f32 %v38, %v1252
    %v1254 = vand.u32 %v1253, 4294901760
    %1255 = vmatprep.subr.mxu0 %v1254
    %v1256 = vand.u32 %v37, 4294901760
    %v1257 = vsub.f32 %v37, %v1256
    %v1258 = vand.u32 %v1257, 4294901760
    %1259 = vmatpush1.msra.mxu0 %v1258
    %v1260 = vand.u32 %v40, 4294901760
    %v1261 = vsub.f32 %v40, %v1260
    %v1262 = vand.u32 %v1261, 4294901760
    %1263 = vmatprep.subr.mxu0 %v1262
    %v1264 = vand.u32 %v39, 4294901760
    %v1265 = vsub.f32 %v39, %v1264
    %v1266 = vand.u32 %v1265, 4294901760
    %1267 = vmatpush1.msra.mxu0 %v1266
    %v1268 = vand.u32 %v42, 4294901760
    %v1269 = vsub.f32 %v42, %v1268
    %v1270 = vand.u32 %v1269, 4294901760
    %1271 = vmatprep.subr.mxu0 %v1270
    %v1272 = vand.u32 %v41, 4294901760
    %v1273 = vsub.f32 %v41, %v1272
    %v1274 = vand.u32 %v1273, 4294901760
    %1275 = vmatpush1.msra.mxu0 %v1274
    %v1276 = vand.u32 %v44, 4294901760
    %v1277 = vsub.f32 %v44, %v1276
    %v1278 = vand.u32 %v1277, 4294901760
    %1279 = vmatprep.subr.mxu0 %v1278
    %v1280 = vand.u32 %v43, 4294901760
    %v1281 = vsub.f32 %v43, %v1280
    %v1282 = vand.u32 %v1281, 4294901760
    %1283 = vmatpush1.msra.mxu0 %v1282
    %1284 = vmatprep.subr.mxu0 0.0
    %1285 = vmatpush1.msra.mxu0 0.0
    %1286 = vmatprep.subr.mxu0 0.0
    %1287 = vmatpush1.msra.mxu0 0.0
    %1288 = vmatprep.subr.mxu0 0.0
    %1289 = vmatpush1.msra.mxu0 0.0
    %1290 = vmatprep.subr.mxu0 0.0
    %1291 = vmatpush1.msra.mxu0 0.0
    %1292 = vmatprep.subr.mxu0 0.0
    %1293 = vmatpush1.msra.mxu0 0.0
    %1294 = vmatprep.subr.mxu0 0.0
    %1295 = vmatpush1.msra.mxu0 0.0
    %1296 = vmatprep.subr.mxu0 0.0
    %1297 = vmatpush1.msra.mxu0 0.0
    %1298 = vmatprep.subr.mxu0 0.0
    %1299 = vmatpush1.msra.mxu0 0.0
    %1300 = vmatprep.subr.mxu0 0.0
    %1301 = vmatpush1.msra.mxu0 0.0
    %1302 = vmatprep.subr.mxu0 0.0
    %1303 = vmatpush1.msra.mxu0 0.0
    %1304 = vmatprep.subr.mxu0 0.0
    %1305 = vmatpush1.msra.mxu0 0.0
    %1306 = vmatprep.subr.mxu0 0.0
    %1307 = vmatpush1.msra.mxu0 0.0
    %1308 = vmatprep.subr.mxu0 0.0
    %1309 = vmatpush1.msra.mxu0 0.0
    %1310 = vmatprep.subr.mxu0 0.0
    %1311 = vmatpush1.msra.mxu0 0.0
    %1312 = vmatprep.subr.mxu0 0.0
    %1313 = vmatpush1.msra.mxu0 0.0
    %1314 = vmatprep.subr.mxu0 0.0
    %1315 = vmatpush1.msra.mxu0 0.0
    %1316 = vmatprep.subr.mxu0 0.0
    %1317 = vmatpush1.msra.mxu0 0.0
    %1318 = vmatprep.subr.mxu0 0.0
    %1319 = vmatpush1.msra.mxu0 0.0
    %1320 = vmatprep.subr.mxu0 0.0
    %1321 = vmatpush1.msra.mxu0 0.0
    %1322 = vmatprep.subr.mxu0 0.0
    %1323 = vmatpush1.msra.mxu0 0.0
    %1324 = vmatprep.subr.mxu0 0.0
    %1325 = vmatpush1.msra.mxu0 0.0
    %1326 = vmatprep.subr.mxu0 0.0
    %1327 = vmatpush1.msra.mxu0 0.0
    %1328 = vmatprep.subr.mxu0 0.0
    %1329 = vmatpush1.msra.mxu0 0.0
    %1330 = vmatprep.subr.mxu0 0.0
    %1331 = vmatpush1.msra.mxu0 0.0
    %1332 = vmatprep.subr.mxu0 0.0
    %1333 = vmatpush1.msra.mxu0 0.0
    %1334 = vmatprep.subr.mxu0 0.0
    %1335 = vmatpush1.msra.mxu0 0.0
    %1336 = vmatprep.subr.mxu0 0.0
    %1337 = vmatpush1.msra.mxu0 0.0
    %1338 = vmatprep.subr.mxu0 0.0
    %1339 = vmatpush1.msra.mxu0 0.0
    %1340 = vmatprep.mubr.f32.mxu0 0.0
    %v1341 = vand.u32 %v772, 4294901760
    %1342 = vmatmul.mubr.f32.gmra.mrb[0].mxu0 %v1341
    %v1343 = vpop.f32.mrb[0].mxu0
    %v1344 = vadd.f32 %v1221, %v1343
    %v1345 = vpop.f32.mrb[0].mxu0
    %v1346 = vadd.f32 %v1223, %v1345
    %1347 = vmatprep.mubr.f32.mxu0 0.0
    %v1348 = vand.u32 %v774, 4294901760
    %1349 = vmatmul.mubr.f32.gmra.mrb[0].mxu0 %v1348
    %v1350 = vpop.f32.mrb[0].mxu0
    %v1351 = vadd.f32 %v1230, %v1350
    %v1352 = vpop.f32.mrb[0].mxu0
    %v1353 = vadd.f32 %v1232, %v1352
    %1354 = vmatprep.mubr.f32.mxu0 0.0
    %v1355 = vand.u32 %v776, 4294901760
    %1356 = vmatmul.mubr.f32.gmra.mrb[0].mxu0 %v1355
    %v1357 = vpop.f32.mrb[0].mxu0
    %v1358 = vadd.f32 %v1239, %v1357
    %v1359 = vpop.f32.mrb[0].mxu0
    %v1360 = vadd.f32 %v1241, %v1359
    %1361 = vmatprep.mubr.f32.mxu0 0.0
    %v1362 = vand.u32 %v778, 4294901760
    %1363 = vmatmul.mubr.f32.gmra.mrb[0].mxu0 %v1362
    %v1364 = vpop.f32.mrb[0].mxu0
    %v1365 = vadd.f32 %v1248, %v1364
    %v1366 = vpop.f32.mrb[0].mxu0
    %v1367 = vadd.f32 %v1250, %v1366
    %1368 = vdwg.mxu0
    %v1369 = vand.u32 %v38, 4294901760
    %1370 = vmatprep.subr.mxu0 %v1369
    %v1371 = vand.u32 %v37, 4294901760
    %1372 = vmatpush1.msra.mxu0 %v1371
    %v1373 = vand.u32 %v40, 4294901760
    %1374 = vmatprep.subr.mxu0 %v1373
    %v1375 = vand.u32 %v39, 4294901760
    %1376 = vmatpush1.msra.mxu0 %v1375
    %v1377 = vand.u32 %v42, 4294901760
    %1378 = vmatprep.subr.mxu0 %v1377
    %v1379 = vand.u32 %v41, 4294901760
    %1380 = vmatpush1.msra.mxu0 %v1379
    %v1381 = vand.u32 %v44, 4294901760
    %1382 = vmatprep.subr.mxu0 %v1381
    %v1383 = vand.u32 %v43, 4294901760
    %1384 = vmatpush1.msra.mxu0 %v1383
    %1385 = vmatprep.subr.mxu0 0.0
    %1386 = vmatpush1.msra.mxu0 0.0
    %1387 = vmatprep.subr.mxu0 0.0
    %1388 = vmatpush1.msra.mxu0 0.0
    %1389 = vmatprep.subr.mxu0 0.0
    %1390 = vmatpush1.msra.mxu0 0.0
    %1391 = vmatprep.subr.mxu0 0.0
    %1392 = vmatpush1.msra.mxu0 0.0
    %1393 = vmatprep.subr.mxu0 0.0
    %1394 = vmatpush1.msra.mxu0 0.0
    %1395 = vmatprep.subr.mxu0 0.0
    %1396 = vmatpush1.msra.mxu0 0.0
    %1397 = vmatprep.subr.mxu0 0.0
    %1398 = vmatpush1.msra.mxu0 0.0
    %1399 = vmatprep.subr.mxu0 0.0
    %1400 = vmatpush1.msra.mxu0 0.0
    %1401 = vmatprep.subr.mxu0 0.0
    %1402 = vmatpush1.msra.mxu0 0.0
    %1403 = vmatprep.subr.mxu0 0.0
    %1404 = vmatpush1.msra.mxu0 0.0
    %1405 = vmatprep.subr.mxu0 0.0
    %1406 = vmatpush1.msra.mxu0 0.0
    %1407 = vmatprep.subr.mxu0 0.0
    %1408 = vmatpush1.msra.mxu0 0.0
    %1409 = vmatprep.subr.mxu0 0.0
    %1410 = vmatpush1.msra.mxu0 0.0
    %1411 = vmatprep.subr.mxu0 0.0
    %1412 = vmatpush1.msra.mxu0 0.0
    %1413 = vmatprep.subr.mxu0 0.0
    %1414 = vmatpush1.msra.mxu0 0.0
    %1415 = vmatprep.subr.mxu0 0.0
    %1416 = vmatpush1.msra.mxu0 0.0
    %1417 = vmatprep.subr.mxu0 0.0
    %1418 = vmatpush1.msra.mxu0 0.0
    %1419 = vmatprep.subr.mxu0 0.0
    %1420 = vmatpush1.msra.mxu0 0.0
    %1421 = vmatprep.subr.mxu0 0.0
    %1422 = vmatpush1.msra.mxu0 0.0
    %1423 = vmatprep.subr.mxu0 0.0
    %1424 = vmatpush1.msra.mxu0 0.0
    %1425 = vmatprep.subr.mxu0 0.0
    %1426 = vmatpush1.msra.mxu0 0.0
    %1427 = vmatprep.subr.mxu0 0.0
    %1428 = vmatpush1.msra.mxu0 0.0
    %1429 = vmatprep.subr.mxu0 0.0
    %1430 = vmatpush1.msra.mxu0 0.0
    %1431 = vmatprep.subr.mxu0 0.0
    %1432 = vmatpush1.msra.mxu0 0.0
    %1433 = vmatprep.subr.mxu0 0.0
    %1434 = vmatpush1.msra.mxu0 0.0
    %1435 = vmatprep.subr.mxu0 0.0
    %1436 = vmatpush1.msra.mxu0 0.0
    %1437 = vmatprep.subr.mxu0 0.0
    %1438 = vmatpush1.msra.mxu0 0.0
    %1439 = vmatprep.subr.mxu0 0.0
    %1440 = vmatpush1.msra.mxu0 0.0
    %1441 = vmatprep.mubr.f32.mxu0 0.0
    %v1442 = vand.u32 %v772, 4294901760
    %1443 = vmatmul.mubr.f32.gmra.mrb[0].mxu0 %v1442
    %v1444 = vpop.f32.mrb[0].mxu0
    %v1445 = vadd.f32 %v1344, %v1444
    %v1446 = vpop.f32.mrb[0].mxu0
    %v1447 = vadd.f32 %v1346, %v1446
    %1448 = vmatprep.mubr.f32.mxu0 0.0
    %v1449 = vand.u32 %v774, 4294901760
    %1450 = vmatmul.mubr.f32.gmra.mrb[0].mxu0 %v1449
    %v1451 = vpop.f32.mrb[0].mxu0
    %v1452 = vadd.f32 %v1351, %v1451
    %v1453 = vpop.f32.mrb[0].mxu0
    %v1454 = vadd.f32 %v1353, %v1453
    %1455 = vmatprep.mubr.f32.mxu0 0.0
    %v1456 = vand.u32 %v776, 4294901760
    %1457 = vmatmul.mubr.f32.gmra.mrb[0].mxu0 %v1456
    %v1458 = vpop.f32.mrb[0].mxu0
    %v1459 = vadd.f32 %v1358, %v1458
    %v1460 = vpop.f32.mrb[0].mxu0
    %v1461 = vadd.f32 %v1360, %v1460
    %1462 = vmatprep.mubr.f32.mxu0 0.0
    %v1463 = vand.u32 %v778, 4294901760
    %1464 = vmatmul.mubr.f32.gmra.mrb[0].mxu0 %v1463
    %v1465 = vpop.f32.mrb[0].mxu0
    %v1466 = vadd.f32 %v1365, %v1465
    %v1467 = vpop.f32.mrb[0].mxu0
    %v1468 = vadd.f32 %v1367, %v1467
    %1469 = vdwg.mxu0
    %vm1470 = vcmask 1045504
    %v1471 = vrot.slane %v33, 2
    %v1472 = vrot.slane %v34, 2
    %v1473 = vsel %vm1470, %v1471, %v1472
    %v1474 = vrot.slane %v35, 2
    %v1475 = vsel %vm1470, %v1472, %v1474
    %v1476 = vrot.slane %v36, 2
    %v1477 = vsel %vm1470, %v1474, %v1476
    %v1478 = vsel %vm73, %v1473, 0
    %v1480 = vsel %vm73, %v1475, 0
    %v1482 = vsel %vm73, %v1477, 0
    %v1484 = vsel %vm73, %v1476, 0
    %v1486 = vand.u32 %v54, 4294901760
    %1487 = vmatprep.subr.mxu0 %v1486
    %v1488 = vand.u32 %v53, 4294901760
    %1489 = vmatpush1.msra.mxu0 %v1488
    %v1490 = vand.u32 %v56, 4294901760
    %1491 = vmatprep.subr.mxu0 %v1490
    %v1492 = vand.u32 %v55, 4294901760
    %1493 = vmatpush1.msra.mxu0 %v1492
    %v1494 = vand.u32 %v58, 4294901760
    %1495 = vmatprep.subr.mxu0 %v1494
    %v1496 = vand.u32 %v57, 4294901760
    %1497 = vmatpush1.msra.mxu0 %v1496
    %v1498 = vand.u32 %v60, 4294901760
    %1499 = vmatprep.subr.mxu0 %v1498
    %v1500 = vand.u32 %v59, 4294901760
    %1501 = vmatpush1.msra.mxu0 %v1500
    %1502 = vmatprep.subr.mxu0 0.0
    %1503 = vmatpush1.msra.mxu0 0.0
    %1504 = vmatprep.subr.mxu0 0.0
    %1505 = vmatpush1.msra.mxu0 0.0
    %1506 = vmatprep.subr.mxu0 0.0
    %1507 = vmatpush1.msra.mxu0 0.0
    %1508 = vmatprep.subr.mxu0 0.0
    %1509 = vmatpush1.msra.mxu0 0.0
    %1510 = vmatprep.subr.mxu0 0.0
    %1511 = vmatpush1.msra.mxu0 0.0
    %1512 = vmatprep.subr.mxu0 0.0
    %1513 = vmatpush1.msra.mxu0 0.0
    %1514 = vmatprep.subr.mxu0 0.0
    %1515 = vmatpush1.msra.mxu0 0.0
    %1516 = vmatprep.subr.mxu0 0.0
    %1517 = vmatpush1.msra.mxu0 0.0
    %1518 = vmatprep.subr.mxu0 0.0
    %1519 = vmatpush1.msra.mxu0 0.0
    %1520 = vmatprep.subr.mxu0 0.0
    %1521 = vmatpush1.msra.mxu0 0.0
    %1522 = vmatprep.subr.mxu0 0.0
    %1523 = vmatpush1.msra.mxu0 0.0
    %1524 = vmatprep.subr.mxu0 0.0
    %1525 = vmatpush1.msra.mxu0 0.0
    %1526 = vmatprep.subr.mxu0 0.0
    %1527 = vmatpush1.msra.mxu0 0.0
    %1528 = vmatprep.subr.mxu0 0.0
    %1529 = vmatpush1.msra.mxu0 0.0
    %1530 = vmatprep.subr.mxu0 0.0
    %1531 = vmatpush1.msra.mxu0 0.0
    %1532 = vmatprep.subr.mxu0 0.0
    %1533 = vmatpush1.msra.mxu0 0.0
    %1534 = vmatprep.subr.mxu0 0.0
    %1535 = vmatpush1.msra.mxu0 0.0
    %1536 = vmatprep.subr.mxu0 0.0
    %1537 = vmatpush1.msra.mxu0 0.0
    %1538 = vmatprep.subr.mxu0 0.0
    %1539 = vmatpush1.msra.mxu0 0.0
    %1540 = vmatprep.subr.mxu0 0.0
    %1541 = vmatpush1.msra.mxu0 0.0
    %1542 = vmatprep.subr.mxu0 0.0
    %1543 = vmatpush1.msra.mxu0 0.0
    %1544 = vmatprep.subr.mxu0 0.0
    %1545 = vmatpush1.msra.mxu0 0.0
    %1546 = vmatprep.subr.mxu0 0.0
    %1547 = vmatpush1.msra.mxu0 0.0
    %1548 = vmatprep.subr.mxu0 0.0
    %1549 = vmatpush1.msra.mxu0 0.0
    %1550 = vmatprep.subr.mxu0 0.0
    %1551 = vmatpush1.msra.mxu0 0.0
    %1552 = vmatprep.subr.mxu0 0.0
    %1553 = vmatpush1.msra.mxu0 0.0
    %1554 = vmatprep.subr.mxu0 0.0
    %1555 = vmatpush1.msra.mxu0 0.0
    %1556 = vmatprep.subr.mxu0 0.0
    %1557 = vmatpush1.msra.mxu0 0.0
    %1558 = vmatprep.mubr.f32.mxu0 0.0
    %v1559 = vand.u32 %v1478, 4294901760
    %v1560 = vsub.f32 %v1478, %v1559
    %v1561 = vand.u32 %v1560, 4294901760
    %v1562 = vsub.f32 %v1560, %v1561
    %v1563 = vand.u32 %v1562, 4294901760
    %1564 = vmatmul.mubr.f32.gmra.mrb[0].mxu0 %v1563
    %v1565 = vpop.f32.mrb[0].mxu0
    %v1566 = vadd.f32 0.0, %v1565
    %v1567 = vpop.f32.mrb[0].mxu0
    %v1568 = vadd.f32 0.0, %v1567
    %1569 = vmatprep.mubr.f32.mxu0 0.0
    %v1570 = vand.u32 %v1480, 4294901760
    %v1571 = vsub.f32 %v1480, %v1570
    %v1572 = vand.u32 %v1571, 4294901760
    %v1573 = vsub.f32 %v1571, %v1572
    %v1574 = vand.u32 %v1573, 4294901760
    %1575 = vmatmul.mubr.f32.gmra.mrb[0].mxu0 %v1574
    %v1576 = vpop.f32.mrb[0].mxu0
    %v1577 = vadd.f32 0.0, %v1576
    %v1578 = vpop.f32.mrb[0].mxu0
    %v1579 = vadd.f32 0.0, %v1578
    %1580 = vmatprep.mubr.f32.mxu0 0.0
    %v1581 = vand.u32 %v1482, 4294901760
    %v1582 = vsub.f32 %v1482, %v1581
    %v1583 = vand.u32 %v1582, 4294901760
    %v1584 = vsub.f32 %v1582, %v1583
    %v1585 = vand.u32 %v1584, 4294901760
    %1586 = vmatmul.mubr.f32.gmra.mrb[0].mxu0 %v1585
    %v1587 = vpop.f32.mrb[0].mxu0
    %v1588 = vadd.f32 0.0, %v1587
    %v1589 = vpop.f32.mrb[0].mxu0
    %v1590 = vadd.f32 0.0, %v1589
    %1591 = vmatprep.mubr.f32.mxu0 0.0
    %v1592 = vand.u32 %v1484, 4294901760
    %v1593 = vsub.f32 %v1484, %v1592
    %v1594 = vand.u32 %v1593, 4294901760
    %v1595 = vsub.f32 %v1593, %v1594
    %v1596 = vand.u32 %v1595, 4294901760
    %1597 = vmatmul.mubr.f32.gmra.mrb[0].mxu0 %v1596
    %v1598 = vpop.f32.mrb[0].mxu0
    %v1599 = vadd.f32 0.0, %v1598
    %v1600 = vpop.f32.mrb[0].mxu0
    %v1601 = vadd.f32 0.0, %v1600
    %1602 = vdwg.mxu0
    %v1603 = vand.u32 %v54, 4294901760
    %v1604 = vsub.f32 %v54, %v1603
    %v1605 = vand.u32 %v1604, 4294901760
    %v1606 = vsub.f32 %v1604, %v1605
    %v1607 = vand.u32 %v1606, 4294901760
    %1608 = vmatprep.subr.mxu0 %v1607
    %v1609 = vand.u32 %v53, 4294901760
    %v1610 = vsub.f32 %v53, %v1609
    %v1611 = vand.u32 %v1610, 4294901760
    %v1612 = vsub.f32 %v1610, %v1611
    %v1613 = vand.u32 %v1612, 4294901760
    %1614 = vmatpush1.msra.mxu0 %v1613
    %v1615 = vand.u32 %v56, 4294901760
    %v1616 = vsub.f32 %v56, %v1615
    %v1617 = vand.u32 %v1616, 4294901760
    %v1618 = vsub.f32 %v1616, %v1617
    %v1619 = vand.u32 %v1618, 4294901760
    %1620 = vmatprep.subr.mxu0 %v1619
    %v1621 = vand.u32 %v55, 4294901760
    %v1622 = vsub.f32 %v55, %v1621
    %v1623 = vand.u32 %v1622, 4294901760
    %v1624 = vsub.f32 %v1622, %v1623
    %v1625 = vand.u32 %v1624, 4294901760
    %1626 = vmatpush1.msra.mxu0 %v1625
    %v1627 = vand.u32 %v58, 4294901760
    %v1628 = vsub.f32 %v58, %v1627
    %v1629 = vand.u32 %v1628, 4294901760
    %v1630 = vsub.f32 %v1628, %v1629
    %v1631 = vand.u32 %v1630, 4294901760
    %1632 = vmatprep.subr.mxu0 %v1631
    %v1633 = vand.u32 %v57, 4294901760
    %v1634 = vsub.f32 %v57, %v1633
    %v1635 = vand.u32 %v1634, 4294901760
    %v1636 = vsub.f32 %v1634, %v1635
    %v1637 = vand.u32 %v1636, 4294901760
    %1638 = vmatpush1.msra.mxu0 %v1637
    %v1639 = vand.u32 %v60, 4294901760
    %v1640 = vsub.f32 %v60, %v1639
    %v1641 = vand.u32 %v1640, 4294901760
    %v1642 = vsub.f32 %v1640, %v1641
    %v1643 = vand.u32 %v1642, 4294901760
    %1644 = vmatprep.subr.mxu0 %v1643
    %v1645 = vand.u32 %v59, 4294901760
    %v1646 = vsub.f32 %v59, %v1645
    %v1647 = vand.u32 %v1646, 4294901760
    %v1648 = vsub.f32 %v1646, %v1647
    %v1649 = vand.u32 %v1648, 4294901760
    %1650 = vmatpush1.msra.mxu0 %v1649
    %1651 = vmatprep.subr.mxu0 0.0
    %1652 = vmatpush1.msra.mxu0 0.0
    %1653 = vmatprep.subr.mxu0 0.0
    %1654 = vmatpush1.msra.mxu0 0.0
    %1655 = vmatprep.subr.mxu0 0.0
    %1656 = vmatpush1.msra.mxu0 0.0
    %1657 = vmatprep.subr.mxu0 0.0
    %1658 = vmatpush1.msra.mxu0 0.0
    %1659 = vmatprep.subr.mxu0 0.0
    %1660 = vmatpush1.msra.mxu0 0.0
    %1661 = vmatprep.subr.mxu0 0.0
    %1662 = vmatpush1.msra.mxu0 0.0
    %1663 = vmatprep.subr.mxu0 0.0
    %1664 = vmatpush1.msra.mxu0 0.0
    %1665 = vmatprep.subr.mxu0 0.0
    %1666 = vmatpush1.msra.mxu0 0.0
    %1667 = vmatprep.subr.mxu0 0.0
    %1668 = vmatpush1.msra.mxu0 0.0
    %1669 = vmatprep.subr.mxu0 0.0
    %1670 = vmatpush1.msra.mxu0 0.0
    %1671 = vmatprep.subr.mxu0 0.0
    %1672 = vmatpush1.msra.mxu0 0.0
    %1673 = vmatprep.subr.mxu0 0.0
    %1674 = vmatpush1.msra.mxu0 0.0
    %1675 = vmatprep.subr.mxu0 0.0
    %1676 = vmatpush1.msra.mxu0 0.0
    %1677 = vmatprep.subr.mxu0 0.0
    %1678 = vmatpush1.msra.mxu0 0.0
    %1679 = vmatprep.subr.mxu0 0.0
    %1680 = vmatpush1.msra.mxu0 0.0
    %1681 = vmatprep.subr.mxu0 0.0
    %1682 = vmatpush1.msra.mxu0 0.0
    %1683 = vmatprep.subr.mxu0 0.0
    %1684 = vmatpush1.msra.mxu0 0.0
    %1685 = vmatprep.subr.mxu0 0.0
    %1686 = vmatpush1.msra.mxu0 0.0
    %1687 = vmatprep.subr.mxu0 0.0
    %1688 = vmatpush1.msra.mxu0 0.0
    %1689 = vmatprep.subr.mxu0 0.0
    %1690 = vmatpush1.msra.mxu0 0.0
    %1691 = vmatprep.subr.mxu0 0.0
    %1692 = vmatpush1.msra.mxu0 0.0
    %1693 = vmatprep.subr.mxu0 0.0
    %1694 = vmatpush1.msra.mxu0 0.0
    %1695 = vmatprep.subr.mxu0 0.0
    %1696 = vmatpush1.msra.mxu0 0.0
    %1697 = vmatprep.subr.mxu0 0.0
    %1698 = vmatpush1.msra.mxu0 0.0
    %1699 = vmatprep.subr.mxu0 0.0
    %1700 = vmatpush1.msra.mxu0 0.0
    %1701 = vmatprep.subr.mxu0 0.0
    %1702 = vmatpush1.msra.mxu0 0.0
    %1703 = vmatprep.subr.mxu0 0.0
    %1704 = vmatpush1.msra.mxu0 0.0
    %1705 = vmatprep.subr.mxu0 0.0
    %1706 = vmatpush1.msra.mxu0 0.0
    %1707 = vmatprep.mubr.f32.mxu0 0.0
    %v1708 = vand.u32 %v1478, 4294901760
    %1709 = vmatmul.mubr.f32.gmra.mrb[0].mxu0 %v1708
    %v1710 = vpop.f32.mrb[0].mxu0
    %v1711 = vadd.f32 %v1566, %v1710
    %v1712 = vpop.f32.mrb[0].mxu0
    %v1713 = vadd.f32 %v1568, %v1712
    %1714 = vmatprep.mubr.f32.mxu0 0.0
    %v1715 = vand.u32 %v1480, 4294901760
    %1716 = vmatmul.mubr.f32.gmra.mrb[0].mxu0 %v1715
    %v1717 = vpop.f32.mrb[0].mxu0
    %v1718 = vadd.f32 %v1577, %v1717
    %v1719 = vpop.f32.mrb[0].mxu0
    %v1720 = vadd.f32 %v1579, %v1719
    %1721 = vmatprep.mubr.f32.mxu0 0.0
    %v1722 = vand.u32 %v1482, 4294901760
    %1723 = vmatmul.mubr.f32.gmra.mrb[0].mxu0 %v1722
    %v1724 = vpop.f32.mrb[0].mxu0
    %v1725 = vadd.f32 %v1588, %v1724
    %v1726 = vpop.f32.mrb[0].mxu0
    %v1727 = vadd.f32 %v1590, %v1726
    %1728 = vmatprep.mubr.f32.mxu0 0.0
    %v1729 = vand.u32 %v1484, 4294901760
    %1730 = vmatmul.mubr.f32.gmra.mrb[0].mxu0 %v1729
    %v1731 = vpop.f32.mrb[0].mxu0
    %v1732 = vadd.f32 %v1599, %v1731
    %v1733 = vpop.f32.mrb[0].mxu0
    %v1734 = vadd.f32 %v1601, %v1733
    %1735 = vdwg.mxu0
    %v1736 = vand.u32 %v54, 4294901760
    %v1737 = vsub.f32 %v54, %v1736
    %1738 = vmatprep.subr.mxu0 %v1737
    %v1739 = vand.u32 %v53, 4294901760
    %v1740 = vsub.f32 %v53, %v1739
    %1741 = vmatpush1.msra.mxu0 %v1740
    %v1742 = vand.u32 %v56, 4294901760
    %v1743 = vsub.f32 %v56, %v1742
    %1744 = vmatprep.subr.mxu0 %v1743
    %v1745 = vand.u32 %v55, 4294901760
    %v1746 = vsub.f32 %v55, %v1745
    %1747 = vmatpush1.msra.mxu0 %v1746
    %v1748 = vand.u32 %v58, 4294901760
    %v1749 = vsub.f32 %v58, %v1748
    %1750 = vmatprep.subr.mxu0 %v1749
    %v1751 = vand.u32 %v57, 4294901760
    %v1752 = vsub.f32 %v57, %v1751
    %1753 = vmatpush1.msra.mxu0 %v1752
    %v1754 = vand.u32 %v60, 4294901760
    %v1755 = vsub.f32 %v60, %v1754
    %1756 = vmatprep.subr.mxu0 %v1755
    %v1757 = vand.u32 %v59, 4294901760
    %v1758 = vsub.f32 %v59, %v1757
    %1759 = vmatpush1.msra.mxu0 %v1758
    %1760 = vmatprep.subr.mxu0 0.0
    %1761 = vmatpush1.msra.mxu0 0.0
    %1762 = vmatprep.subr.mxu0 0.0
    %1763 = vmatpush1.msra.mxu0 0.0
    %1764 = vmatprep.subr.mxu0 0.0
    %1765 = vmatpush1.msra.mxu0 0.0
    %1766 = vmatprep.subr.mxu0 0.0
    %1767 = vmatpush1.msra.mxu0 0.0
    %1768 = vmatprep.subr.mxu0 0.0
    %1769 = vmatpush1.msra.mxu0 0.0
    %1770 = vmatprep.subr.mxu0 0.0
    %1771 = vmatpush1.msra.mxu0 0.0
    %1772 = vmatprep.subr.mxu0 0.0
    %1773 = vmatpush1.msra.mxu0 0.0
    %1774 = vmatprep.subr.mxu0 0.0
    %1775 = vmatpush1.msra.mxu0 0.0
    %1776 = vmatprep.subr.mxu0 0.0
    %1777 = vmatpush1.msra.mxu0 0.0
    %1778 = vmatprep.subr.mxu0 0.0
    %1779 = vmatpush1.msra.mxu0 0.0
    %1780 = vmatprep.subr.mxu0 0.0
    %1781 = vmatpush1.msra.mxu0 0.0
    %1782 = vmatprep.subr.mxu0 0.0
    %1783 = vmatpush1.msra.mxu0 0.0
    %1784 = vmatprep.subr.mxu0 0.0
    %1785 = vmatpush1.msra.mxu0 0.0
    %1786 = vmatprep.subr.mxu0 0.0
    %1787 = vmatpush1.msra.mxu0 0.0
    %1788 = vmatprep.subr.mxu0 0.0
    %1789 = vmatpush1.msra.mxu0 0.0
    %1790 = vmatprep.subr.mxu0 0.0
    %1791 = vmatpush1.msra.mxu0 0.0
    %1792 = vmatprep.subr.mxu0 0.0
    %1793 = vmatpush1.msra.mxu0 0.0
    %1794 = vmatprep.subr.mxu0 0.0
    %1795 = vmatpush1.msra.mxu0 0.0
    %1796 = vmatprep.subr.mxu0 0.0
    %1797 = vmatpush1.msra.mxu0 0.0
    %1798 = vmatprep.subr.mxu0 0.0
    %1799 = vmatpush1.msra.mxu0 0.0
    %1800 = vmatprep.subr.mxu0 0.0
    %1801 = vmatpush1.msra.mxu0 0.0
    %1802 = vmatprep.subr.mxu0 0.0
    %1803 = vmatpush1.msra.mxu0 0.0
    %1804 = vmatprep.subr.mxu0 0.0
    %1805 = vmatpush1.msra.mxu0 0.0
    %1806 = vmatprep.subr.mxu0 0.0
    %1807 = vmatpush1.msra.mxu0 0.0
    %1808 = vmatprep.subr.mxu0 0.0
    %1809 = vmatpush1.msra.mxu0 0.0
    %1810 = vmatprep.subr.mxu0 0.0
    %1811 = vmatpush1.msra.mxu0 0.0
    %1812 = vmatprep.subr.mxu0 0.0
    %1813 = vmatpush1.msra.mxu0 0.0
    %1814 = vmatprep.subr.mxu0 0.0
    %1815 = vmatpush1.msra.mxu0 0.0
    %1816 = vmatprep.mubr.f32.mxu0 0.0
    %v1817 = vand.u32 %v1478, 4294901760
    %v1818 = vsub.f32 %v1478, %v1817
    %1819 = vmatmul.mubr.f32.gmra.mrb[0].mxu0 %v1818
    %v1820 = vpop.f32.mrb[0].mxu0
    %v1821 = vadd.f32 %v1711, %v1820
    %v1822 = vpop.f32.mrb[0].mxu0
    %v1823 = vadd.f32 %v1713, %v1822
    %1824 = vmatprep.mubr.f32.mxu0 0.0
    %v1825 = vand.u32 %v1480, 4294901760
    %v1826 = vsub.f32 %v1480, %v1825
    %1827 = vmatmul.mubr.f32.gmra.mrb[0].mxu0 %v1826
    %v1828 = vpop.f32.mrb[0].mxu0
    %v1829 = vadd.f32 %v1718, %v1828
    %v1830 = vpop.f32.mrb[0].mxu0
    %v1831 = vadd.f32 %v1720, %v1830
    %1832 = vmatprep.mubr.f32.mxu0 0.0
    %v1833 = vand.u32 %v1482, 4294901760
    %v1834 = vsub.f32 %v1482, %v1833
    %1835 = vmatmul.mubr.f32.gmra.mrb[0].mxu0 %v1834
    %v1836 = vpop.f32.mrb[0].mxu0
    %v1837 = vadd.f32 %v1725, %v1836
    %v1838 = vpop.f32.mrb[0].mxu0
    %v1839 = vadd.f32 %v1727, %v1838
    %1840 = vmatprep.mubr.f32.mxu0 0.0
    %v1841 = vand.u32 %v1484, 4294901760
    %v1842 = vsub.f32 %v1484, %v1841
    %1843 = vmatmul.mubr.f32.gmra.mrb[0].mxu0 %v1842
    %v1844 = vpop.f32.mrb[0].mxu0
    %v1845 = vadd.f32 %v1732, %v1844
    %v1846 = vpop.f32.mrb[0].mxu0
    %v1847 = vadd.f32 %v1734, %v1846
    %1848 = vdwg.mxu0
    %v1849 = vand.u32 %v54, 4294901760
    %1850 = vmatprep.subr.mxu0 %v1849
    %v1851 = vand.u32 %v53, 4294901760
    %1852 = vmatpush1.msra.mxu0 %v1851
    %v1853 = vand.u32 %v56, 4294901760
    %1854 = vmatprep.subr.mxu0 %v1853
    %v1855 = vand.u32 %v55, 4294901760
    %1856 = vmatpush1.msra.mxu0 %v1855
    %v1857 = vand.u32 %v58, 4294901760
    %1858 = vmatprep.subr.mxu0 %v1857
    %v1859 = vand.u32 %v57, 4294901760
    %1860 = vmatpush1.msra.mxu0 %v1859
    %v1861 = vand.u32 %v60, 4294901760
    %1862 = vmatprep.subr.mxu0 %v1861
    %v1863 = vand.u32 %v59, 4294901760
    %1864 = vmatpush1.msra.mxu0 %v1863
    %1865 = vmatprep.subr.mxu0 0.0
    %1866 = vmatpush1.msra.mxu0 0.0
    %1867 = vmatprep.subr.mxu0 0.0
    %1868 = vmatpush1.msra.mxu0 0.0
    %1869 = vmatprep.subr.mxu0 0.0
    %1870 = vmatpush1.msra.mxu0 0.0
    %1871 = vmatprep.subr.mxu0 0.0
    %1872 = vmatpush1.msra.mxu0 0.0
    %1873 = vmatprep.subr.mxu0 0.0
    %1874 = vmatpush1.msra.mxu0 0.0
    %1875 = vmatprep.subr.mxu0 0.0
    %1876 = vmatpush1.msra.mxu0 0.0
    %1877 = vmatprep.subr.mxu0 0.0
    %1878 = vmatpush1.msra.mxu0 0.0
    %1879 = vmatprep.subr.mxu0 0.0
    %1880 = vmatpush1.msra.mxu0 0.0
    %1881 = vmatprep.subr.mxu0 0.0
    %1882 = vmatpush1.msra.mxu0 0.0
    %1883 = vmatprep.subr.mxu0 0.0
    %1884 = vmatpush1.msra.mxu0 0.0
    %1885 = vmatprep.subr.mxu0 0.0
    %1886 = vmatpush1.msra.mxu0 0.0
    %1887 = vmatprep.subr.mxu0 0.0
    %1888 = vmatpush1.msra.mxu0 0.0
    %1889 = vmatprep.subr.mxu0 0.0
    %1890 = vmatpush1.msra.mxu0 0.0
    %1891 = vmatprep.subr.mxu0 0.0
    %1892 = vmatpush1.msra.mxu0 0.0
    %1893 = vmatprep.subr.mxu0 0.0
    %1894 = vmatpush1.msra.mxu0 0.0
    %1895 = vmatprep.subr.mxu0 0.0
    %1896 = vmatpush1.msra.mxu0 0.0
    %1897 = vmatprep.subr.mxu0 0.0
    %1898 = vmatpush1.msra.mxu0 0.0
    %1899 = vmatprep.subr.mxu0 0.0
    %1900 = vmatpush1.msra.mxu0 0.0
    %1901 = vmatprep.subr.mxu0 0.0
    %1902 = vmatpush1.msra.mxu0 0.0
    %1903 = vmatprep.subr.mxu0 0.0
    %1904 = vmatpush1.msra.mxu0 0.0
    %1905 = vmatprep.subr.mxu0 0.0
    %1906 = vmatpush1.msra.mxu0 0.0
    %1907 = vmatprep.subr.mxu0 0.0
    %1908 = vmatpush1.msra.mxu0 0.0
    %1909 = vmatprep.subr.mxu0 0.0
    %1910 = vmatpush1.msra.mxu0 0.0
    %1911 = vmatprep.subr.mxu0 0.0
    %1912 = vmatpush1.msra.mxu0 0.0
    %1913 = vmatprep.subr.mxu0 0.0
    %1914 = vmatpush1.msra.mxu0 0.0
    %1915 = vmatprep.subr.mxu0 0.0
    %1916 = vmatpush1.msra.mxu0 0.0
    %1917 = vmatprep.subr.mxu0 0.0
    %1918 = vmatpush1.msra.mxu0 0.0
    %1919 = vmatprep.subr.mxu0 0.0
    %1920 = vmatpush1.msra.mxu0 0.0
    %1921 = vmatprep.mubr.f32.mxu0 0.0
    %v1922 = vand.u32 %v1478, 4294901760
    %v1923 = vsub.f32 %v1478, %v1922
    %v1924 = vand.u32 %v1923, 4294901760
    %1925 = vmatmul.mubr.f32.gmra.mrb[0].mxu0 %v1924
    %v1926 = vpop.f32.mrb[0].mxu0
    %v1927 = vadd.f32 %v1821, %v1926
    %v1928 = vpop.f32.mrb[0].mxu0
    %v1929 = vadd.f32 %v1823, %v1928
    %1930 = vmatprep.mubr.f32.mxu0 0.0
    %v1931 = vand.u32 %v1480, 4294901760
    %v1932 = vsub.f32 %v1480, %v1931
    %v1933 = vand.u32 %v1932, 4294901760
    %1934 = vmatmul.mubr.f32.gmra.mrb[0].mxu0 %v1933
    %v1935 = vpop.f32.mrb[0].mxu0
    %v1936 = vadd.f32 %v1829, %v1935
    %v1937 = vpop.f32.mrb[0].mxu0
    %v1938 = vadd.f32 %v1831, %v1937
    %1939 = vmatprep.mubr.f32.mxu0 0.0
    %v1940 = vand.u32 %v1482, 4294901760
    %v1941 = vsub.f32 %v1482, %v1940
    %v1942 = vand.u32 %v1941, 4294901760
    %1943 = vmatmul.mubr.f32.gmra.mrb[0].mxu0 %v1942
    %v1944 = vpop.f32.mrb[0].mxu0
    %v1945 = vadd.f32 %v1837, %v1944
    %v1946 = vpop.f32.mrb[0].mxu0
    %v1947 = vadd.f32 %v1839, %v1946
    %1948 = vmatprep.mubr.f32.mxu0 0.0
    %v1949 = vand.u32 %v1484, 4294901760
    %v1950 = vsub.f32 %v1484, %v1949
    %v1951 = vand.u32 %v1950, 4294901760
    %1952 = vmatmul.mubr.f32.gmra.mrb[0].mxu0 %v1951
    %v1953 = vpop.f32.mrb[0].mxu0
    %v1954 = vadd.f32 %v1845, %v1953
    %v1955 = vpop.f32.mrb[0].mxu0
    %v1956 = vadd.f32 %v1847, %v1955
    %1957 = vdwg.mxu0
    %v1958 = vand.u32 %v54, 4294901760
    %v1959 = vsub.f32 %v54, %v1958
    %v1960 = vand.u32 %v1959, 4294901760
    %1961 = vmatprep.subr.mxu0 %v1960
    %v1962 = vand.u32 %v53, 4294901760
    %v1963 = vsub.f32 %v53, %v1962
    %v1964 = vand.u32 %v1963, 4294901760
    %1965 = vmatpush1.msra.mxu0 %v1964
    %v1966 = vand.u32 %v56, 4294901760
    %v1967 = vsub.f32 %v56, %v1966
    %v1968 = vand.u32 %v1967, 4294901760
    %1969 = vmatprep.subr.mxu0 %v1968
    %v1970 = vand.u32 %v55, 4294901760
    %v1971 = vsub.f32 %v55, %v1970
    %v1972 = vand.u32 %v1971, 4294901760
    %1973 = vmatpush1.msra.mxu0 %v1972
    %v1974 = vand.u32 %v58, 4294901760
    %v1975 = vsub.f32 %v58, %v1974
    %v1976 = vand.u32 %v1975, 4294901760
    %1977 = vmatprep.subr.mxu0 %v1976
    %v1978 = vand.u32 %v57, 4294901760
    %v1979 = vsub.f32 %v57, %v1978
    %v1980 = vand.u32 %v1979, 4294901760
    %1981 = vmatpush1.msra.mxu0 %v1980
    %v1982 = vand.u32 %v60, 4294901760
    %v1983 = vsub.f32 %v60, %v1982
    %v1984 = vand.u32 %v1983, 4294901760
    %1985 = vmatprep.subr.mxu0 %v1984
    %v1986 = vand.u32 %v59, 4294901760
    %v1987 = vsub.f32 %v59, %v1986
    %v1988 = vand.u32 %v1987, 4294901760
    %1989 = vmatpush1.msra.mxu0 %v1988
    %1990 = vmatprep.subr.mxu0 0.0
    %1991 = vmatpush1.msra.mxu0 0.0
    %1992 = vmatprep.subr.mxu0 0.0
    %1993 = vmatpush1.msra.mxu0 0.0
    %1994 = vmatprep.subr.mxu0 0.0
    %1995 = vmatpush1.msra.mxu0 0.0
    %1996 = vmatprep.subr.mxu0 0.0
    %1997 = vmatpush1.msra.mxu0 0.0
    %1998 = vmatprep.subr.mxu0 0.0
    %1999 = vmatpush1.msra.mxu0 0.0
    %2000 = vmatprep.subr.mxu0 0.0
    %2001 = vmatpush1.msra.mxu0 0.0
    %2002 = vmatprep.subr.mxu0 0.0
    %2003 = vmatpush1.msra.mxu0 0.0
    %2004 = vmatprep.subr.mxu0 0.0
    %2005 = vmatpush1.msra.mxu0 0.0
    %2006 = vmatprep.subr.mxu0 0.0
    %2007 = vmatpush1.msra.mxu0 0.0
    %2008 = vmatprep.subr.mxu0 0.0
    %2009 = vmatpush1.msra.mxu0 0.0
    %2010 = vmatprep.subr.mxu0 0.0
    %2011 = vmatpush1.msra.mxu0 0.0
    %2012 = vmatprep.subr.mxu0 0.0
    %2013 = vmatpush1.msra.mxu0 0.0
    %2014 = vmatprep.subr.mxu0 0.0
    %2015 = vmatpush1.msra.mxu0 0.0
    %2016 = vmatprep.subr.mxu0 0.0
    %2017 = vmatpush1.msra.mxu0 0.0
    %2018 = vmatprep.subr.mxu0 0.0
    %2019 = vmatpush1.msra.mxu0 0.0
    %2020 = vmatprep.subr.mxu0 0.0
    %2021 = vmatpush1.msra.mxu0 0.0
    %2022 = vmatprep.subr.mxu0 0.0
    %2023 = vmatpush1.msra.mxu0 0.0
    %2024 = vmatprep.subr.mxu0 0.0
    %2025 = vmatpush1.msra.mxu0 0.0
    %2026 = vmatprep.subr.mxu0 0.0
    %2027 = vmatpush1.msra.mxu0 0.0
    %2028 = vmatprep.subr.mxu0 0.0
    %2029 = vmatpush1.msra.mxu0 0.0
    %2030 = vmatprep.subr.mxu0 0.0
    %2031 = vmatpush1.msra.mxu0 0.0
    %2032 = vmatprep.subr.mxu0 0.0
    %2033 = vmatpush1.msra.mxu0 0.0
    %2034 = vmatprep.subr.mxu0 0.0
    %2035 = vmatpush1.msra.mxu0 0.0
    %2036 = vmatprep.subr.mxu0 0.0
    %2037 = vmatpush1.msra.mxu0 0.0
    %2038 = vmatprep.subr.mxu0 0.0
    %2039 = vmatpush1.msra.mxu0 0.0
    %2040 = vmatprep.subr.mxu0 0.0
    %2041 = vmatpush1.msra.mxu0 0.0
    %2042 = vmatprep.subr.mxu0 0.0
    %2043 = vmatpush1.msra.mxu0 0.0
    %2044 = vmatprep.subr.mxu0 0.0
    %2045 = vmatpush1.msra.mxu0 0.0
    %2046 = vmatprep.mubr.f32.mxu0 0.0
    %v2047 = vand.u32 %v1478, 4294901760
    %2048 = vmatmul.mubr.f32.gmra.mrb[0].mxu0 %v2047
    %v2049 = vpop.f32.mrb[0].mxu0
    %v2050 = vadd.f32 %v1927, %v2049
    %v2051 = vpop.f32.mrb[0].mxu0
    %v2052 = vadd.f32 %v1929, %v2051
    %2053 = vmatprep.mubr.f32.mxu0 0.0
    %v2054 = vand.u32 %v1480, 4294901760
    %2055 = vmatmul.mubr.f32.gmra.mrb[0].mxu0 %v2054
    %v2056 = vpop.f32.mrb[0].mxu0
    %v2057 = vadd.f32 %v1936, %v2056
    %v2058 = vpop.f32.mrb[0].mxu0
    %v2059 = vadd.f32 %v1938, %v2058
    %2060 = vmatprep.mubr.f32.mxu0 0.0
    %v2061 = vand.u32 %v1482, 4294901760
    %2062 = vmatmul.mubr.f32.gmra.mrb[0].mxu0 %v2061
    %v2063 = vpop.f32.mrb[0].mxu0
    %v2064 = vadd.f32 %v1945, %v2063
    %v2065 = vpop.f32.mrb[0].mxu0
    %v2066 = vadd.f32 %v1947, %v2065
    %2067 = vmatprep.mubr.f32.mxu0 0.0
    %v2068 = vand.u32 %v1484, 4294901760
    %2069 = vmatmul.mubr.f32.gmra.mrb[0].mxu0 %v2068
    %v2070 = vpop.f32.mrb[0].mxu0
    %v2071 = vadd.f32 %v1954, %v2070
    %v2072 = vpop.f32.mrb[0].mxu0
    %v2073 = vadd.f32 %v1956, %v2072
    %2074 = vdwg.mxu0
    %v2075 = vand.u32 %v54, 4294901760
    %2076 = vmatprep.subr.mxu0 %v2075
    %v2077 = vand.u32 %v53, 4294901760
    %2078 = vmatpush1.msra.mxu0 %v2077
    %v2079 = vand.u32 %v56, 4294901760
    %2080 = vmatprep.subr.mxu0 %v2079
    %v2081 = vand.u32 %v55, 4294901760
    %2082 = vmatpush1.msra.mxu0 %v2081
    %v2083 = vand.u32 %v58, 4294901760
    %2084 = vmatprep.subr.mxu0 %v2083
    %v2085 = vand.u32 %v57, 4294901760
    %2086 = vmatpush1.msra.mxu0 %v2085
    %v2087 = vand.u32 %v60, 4294901760
    %2088 = vmatprep.subr.mxu0 %v2087
    %v2089 = vand.u32 %v59, 4294901760
    %2090 = vmatpush1.msra.mxu0 %v2089
    %2091 = vmatprep.subr.mxu0 0.0
    %2092 = vmatpush1.msra.mxu0 0.0
    %2093 = vmatprep.subr.mxu0 0.0
    %2094 = vmatpush1.msra.mxu0 0.0
    %2095 = vmatprep.subr.mxu0 0.0
    %2096 = vmatpush1.msra.mxu0 0.0
    %2097 = vmatprep.subr.mxu0 0.0
    %2098 = vmatpush1.msra.mxu0 0.0
    %2099 = vmatprep.subr.mxu0 0.0
    %2100 = vmatpush1.msra.mxu0 0.0
    %2101 = vmatprep.subr.mxu0 0.0
    %2102 = vmatpush1.msra.mxu0 0.0
    %2103 = vmatprep.subr.mxu0 0.0
    %2104 = vmatpush1.msra.mxu0 0.0
    %2105 = vmatprep.subr.mxu0 0.0
    %2106 = vmatpush1.msra.mxu0 0.0
    %2107 = vmatprep.subr.mxu0 0.0
    %2108 = vmatpush1.msra.mxu0 0.0
    %2109 = vmatprep.subr.mxu0 0.0
    %2110 = vmatpush1.msra.mxu0 0.0
    %2111 = vmatprep.subr.mxu0 0.0
    %2112 = vmatpush1.msra.mxu0 0.0
    %2113 = vmatprep.subr.mxu0 0.0
    %2114 = vmatpush1.msra.mxu0 0.0
    %2115 = vmatprep.subr.mxu0 0.0
    %2116 = vmatpush1.msra.mxu0 0.0
    %2117 = vmatprep.subr.mxu0 0.0
    %2118 = vmatpush1.msra.mxu0 0.0
    %2119 = vmatprep.subr.mxu0 0.0
    %2120 = vmatpush1.msra.mxu0 0.0
    %2121 = vmatprep.subr.mxu0 0.0
    %2122 = vmatpush1.msra.mxu0 0.0
    %2123 = vmatprep.subr.mxu0 0.0
    %2124 = vmatpush1.msra.mxu0 0.0
    %2125 = vmatprep.subr.mxu0 0.0
    %2126 = vmatpush1.msra.mxu0 0.0
    %2127 = vmatprep.subr.mxu0 0.0
    %2128 = vmatpush1.msra.mxu0 0.0
    %2129 = vmatprep.subr.mxu0 0.0
    %2130 = vmatpush1.msra.mxu0 0.0
    %2131 = vmatprep.subr.mxu0 0.0
    %2132 = vmatpush1.msra.mxu0 0.0
    %2133 = vmatprep.subr.mxu0 0.0
    %2134 = vmatpush1.msra.mxu0 0.0
    %2135 = vmatprep.subr.mxu0 0.0
    %2136 = vmatpush1.msra.mxu0 0.0
    %2137 = vmatprep.subr.mxu0 0.0
    %2138 = vmatpush1.msra.mxu0 0.0
    %2139 = vmatprep.subr.mxu0 0.0
    %2140 = vmatpush1.msra.mxu0 0.0
    %2141 = vmatprep.subr.mxu0 0.0
    %2142 = vmatpush1.msra.mxu0 0.0
    %2143 = vmatprep.subr.mxu0 0.0
    %2144 = vmatpush1.msra.mxu0 0.0
    %2145 = vmatprep.subr.mxu0 0.0
    %2146 = vmatpush1.msra.mxu0 0.0
    %2147 = vmatprep.mubr.f32.mxu0 0.0
    %v2148 = vand.u32 %v1478, 4294901760
    %2149 = vmatmul.mubr.f32.gmra.mrb[0].mxu0 %v2148
    %v2150 = vpop.f32.mrb[0].mxu0
    %v2151 = vadd.f32 %v2050, %v2150
    %v2152 = vpop.f32.mrb[0].mxu0
    %v2153 = vadd.f32 %v2052, %v2152
    %2154 = vmatprep.mubr.f32.mxu0 0.0
    %v2155 = vand.u32 %v1480, 4294901760
    %2156 = vmatmul.mubr.f32.gmra.mrb[0].mxu0 %v2155
    %v2157 = vpop.f32.mrb[0].mxu0
    %v2158 = vadd.f32 %v2057, %v2157
    %v2159 = vpop.f32.mrb[0].mxu0
    %v2160 = vadd.f32 %v2059, %v2159
    %2161 = vmatprep.mubr.f32.mxu0 0.0
    %v2162 = vand.u32 %v1482, 4294901760
    %2163 = vmatmul.mubr.f32.gmra.mrb[0].mxu0 %v2162
    %v2164 = vpop.f32.mrb[0].mxu0
    %v2165 = vadd.f32 %v2064, %v2164
    %v2166 = vpop.f32.mrb[0].mxu0
    %v2167 = vadd.f32 %v2066, %v2166
    %2168 = vmatprep.mubr.f32.mxu0 0.0
    %v2169 = vand.u32 %v1484, 4294901760
    %2170 = vmatmul.mubr.f32.gmra.mrb[0].mxu0 %v2169
    %v2171 = vpop.f32.mrb[0].mxu0
    %v2172 = vadd.f32 %v2071, %v2171
    %v2173 = vpop.f32.mrb[0].mxu0
    %v2174 = vadd.f32 %v2073, %v2173
    %2175 = vdwg.mxu0
    %v2176 = vadd.f32 %v1445, %v2151
    %v2177 = vadd.f32 %v1447, %v2153
    %v2178 = vadd.f32 %v1452, %v2158
    %v2179 = vadd.f32 %v1454, %v2160
    %v2180 = vadd.f32 %v1459, %v2165
    %v2181 = vadd.f32 %v1461, %v2167
    %v2182 = vadd.f32 %v1466, %v2172
    %v2183 = vadd.f32 %v1468, %v2174
    %v2184 = vld [vmem:[%s2] sm:$0x3]
    %v2186 = vlaneseq
    %v2187 = vshrl.u32 %v2186, 7
    %v2188 = vsub.s32 0, %v2187
    %v2189 = vrot.slane %v2184, %v2188
    %v2190 = vlaneseq
    %v2191 = vshrl.u32 %v2190, 7
    %v2192 = vsub.s32 1, %v2191
    %v2193 = vrot.slane %v2184, %v2192
    %v2196 = vadd.f32 %v2176, %v2189
    %v2197 = vadd.f32 %v2177, %v2193
    %v2198 = vadd.f32 %v2178, %v2189
    %v2199 = vadd.f32 %v2179, %v2193
    %v2200 = vadd.f32 %v2180, %v2189
    %v2201 = vadd.f32 %v2181, %v2193
    %v2202 = vadd.f32 %v2182, %v2189
    %v2203 = vadd.f32 %v2183, %v2193
    %v2204 = vmax.f32 %v2196, 0.0
    %v2205 = vmax.f32 %v2197, 0.0
    %v2206 = vmax.f32 %v2198, 0.0
    %v2207 = vmax.f32 %v2199, 0.0
    %v2208 = vmax.f32 %v2200, 0.0
    %v2209 = vmax.f32 %v2201, 0.0
    %v2210 = vmax.f32 %v2202, 0.0
    %v2211 = vmax.f32 %v2203, 0.0
    %v2212 = vld [vmem:[%s3] sm:$0xff]
    %v2213 = vld [vmem:[%s3 + $0x8] sm:$0xff]
    %v2214 = vld [vmem:[%s3 + $0x10] sm:$0xff]
    %v2215 = vld [vmem:[%s3 + $0x18] sm:$0xff]
    %v2216 = vld [vmem:[%s3 + $0x20] sm:$0xff]
    %v2217 = vld [vmem:[%s3 + $0x28] sm:$0xff]
    %v2218 = vld [vmem:[%s3 + $0x30] sm:$0xff]
    %v2219 = vld [vmem:[%s3 + $0x38] sm:$0xff]
    %v2220 = vld [vmem:[%s3 + $0x40] sm:$0xff]
    %v2221 = vld [vmem:[%s3 + $0x48] sm:$0xff]
    %v2222 = vld [vmem:[%s3 + $0x50] sm:$0xff]
    %v2223 = vld [vmem:[%s3 + $0x58] sm:$0xff]
    %v2224 = vld [vmem:[%s3 + $0x60] sm:$0xff]
    %v2225 = vld [vmem:[%s3 + $0x68] sm:$0xff]
    %v2226 = vld [vmem:[%s3 + $0x70] sm:$0xff]
    %v2227 = vld [vmem:[%s3 + $0x78] sm:$0xff]
    %v2228 = vld [vmem:[%s3 + $0x80] sm:$0xff]
    %v2229 = vld [vmem:[%s3 + $0x88] sm:$0xff]
    %v2230 = vld [vmem:[%s3 + $0x90] sm:$0xff]
    %v2231 = vld [vmem:[%s3 + $0x98] sm:$0xff]
    %v2232 = vld [vmem:[%s3 + $0xa0] sm:$0xff]
    %v2233 = vld [vmem:[%s3 + $0xa8] sm:$0xff]
    %v2234 = vld [vmem:[%s3 + $0xb0] sm:$0xf]
    %vm2235 = vcmask 424960
    %v2237 = vsel %vm2235, %v2205, 0
    %v2240 = vsel %vm2235, %v2207, 0
    %v2243 = vsel %vm2235, %v2209, 0
    %v2246 = vsel %vm2235, %v2211, 0
    %vm2248 = vcmask 1043456
    %v2250 = vsel %vm2248, %v2234, 0
    %2252 = vmatprep.subr.mxu0 0.0
    %v2253 = vand.u32 %v2212, 4294901760
    %2254 = vmatpush1.msra.mxu0 %v2253
    %2255 = vmatprep.subr.mxu0 0.0
    %v2256 = vand.u32 %v2213, 4294901760
    %2257 = vmatpush1.msra.mxu0 %v2256
    %2258 = vmatprep.subr.mxu0 0.0
    %v2259 = vand.u32 %v2214, 4294901760
    %2260 = vmatpush1.msra.mxu0 %v2259
    %2261 = vmatprep.subr.mxu0 0.0
    %v2262 = vand.u32 %v2215, 4294901760
    %2263 = vmatpush1.msra.mxu0 %v2262
    %2264 = vmatprep.subr.mxu0 0.0
    %v2265 = vand.u32 %v2216, 4294901760
    %2266 = vmatpush1.msra.mxu0 %v2265
    %2267 = vmatprep.subr.mxu0 0.0
    %v2268 = vand.u32 %v2217, 4294901760
    %2269 = vmatpush1.msra.mxu0 %v2268
    %2270 = vmatprep.subr.mxu0 0.0
    %v2271 = vand.u32 %v2218, 4294901760
    %2272 = vmatpush1.msra.mxu0 %v2271
    %2273 = vmatprep.subr.mxu0 0.0
    %v2274 = vand.u32 %v2219, 4294901760
    %2275 = vmatpush1.msra.mxu0 %v2274
    %2276 = vmatprep.subr.mxu0 0.0
    %v2277 = vand.u32 %v2220, 4294901760
    %2278 = vmatpush1.msra.mxu0 %v2277
    %2279 = vmatprep.subr.mxu0 0.0
    %v2280 = vand.u32 %v2221, 4294901760
    %2281 = vmatpush1.msra.mxu0 %v2280
    %2282 = vmatprep.subr.mxu0 0.0
    %v2283 = vand.u32 %v2222, 4294901760
    %2284 = vmatpush1.msra.mxu0 %v2283
    %2285 = vmatprep.subr.mxu0 0.0
    %v2286 = vand.u32 %v2223, 4294901760
    %2287 = vmatpush1.msra.mxu0 %v2286
    %2288 = vmatprep.subr.mxu0 0.0
    %v2289 = vand.u32 %v2224, 4294901760
    %2290 = vmatpush1.msra.mxu0 %v2289
    %2291 = vmatprep.subr.mxu0 0.0
    %v2292 = vand.u32 %v2225, 4294901760
    %2293 = vmatpush1.msra.mxu0 %v2292
    %2294 = vmatprep.subr.mxu0 0.0
    %v2295 = vand.u32 %v2226, 4294901760
    %2296 = vmatpush1.msra.mxu0 %v2295
    %2297 = vmatprep.subr.mxu0 0.0
    %v2298 = vand.u32 %v2227, 4294901760
    %2299 = vmatpush1.msra.mxu0 %v2298
    %2300 = vmatprep.subr.mxu0 0.0
    %v2301 = vand.u32 %v2228, 4294901760
    %2302 = vmatpush1.msra.mxu0 %v2301
    %2303 = vmatprep.subr.mxu0 0.0
    %v2304 = vand.u32 %v2229, 4294901760
    %2305 = vmatpush1.msra.mxu0 %v2304
    %2306 = vmatprep.subr.mxu0 0.0
    %v2307 = vand.u32 %v2230, 4294901760
    %2308 = vmatpush1.msra.mxu0 %v2307
    %2309 = vmatprep.subr.mxu0 0.0
    %v2310 = vand.u32 %v2231, 4294901760
    %2311 = vmatpush1.msra.mxu0 %v2310
    %2312 = vmatprep.subr.mxu0 0.0
    %v2313 = vand.u32 %v2232, 4294901760
    %2314 = vmatpush1.msra.mxu0 %v2313
    %2315 = vmatprep.subr.mxu0 0.0
    %v2316 = vand.u32 %v2233, 4294901760
    %2317 = vmatpush1.msra.mxu0 %v2316
    %2318 = vmatprep.subr.mxu0 0.0
    %v2319 = vand.u32 %v2250, 4294901760
    %2320 = vmatpush1.msra.mxu0 %v2319
    %2321 = vmatprep.subr.mxu0 0.0
    %2322 = vmatpush1.msra.mxu0 0.0
    %2323 = vmatprep.subr.mxu0 0.0
    %2324 = vmatpush1.msra.mxu0 0.0
    %2325 = vmatprep.subr.mxu0 0.0
    %2326 = vmatpush1.msra.mxu0 0.0
    %2327 = vmatprep.subr.mxu0 0.0
    %2328 = vmatpush1.msra.mxu0 0.0
    %2329 = vmatprep.subr.mxu0 0.0
    %2330 = vmatpush1.msra.mxu0 0.0
    %2331 = vmatprep.subr.mxu0 0.0
    %2332 = vmatpush1.msra.mxu0 0.0
    %2333 = vmatprep.subr.mxu0 0.0
    %2334 = vmatpush1.msra.mxu0 0.0
    %2335 = vmatprep.subr.mxu0 0.0
    %2336 = vmatpush1.msra.mxu0 0.0
    %2337 = vmatprep.subr.mxu0 0.0
    %2338 = vmatpush1.msra.mxu0 0.0
    %v2339 = vand.u32 %v2237, 4294901760
    %v2340 = vsub.f32 %v2237, %v2339
    %v2341 = vand.u32 %v2340, 4294901760
    %v2342 = vsub.f32 %v2340, %v2341
    %v2343 = vand.u32 %v2342, 4294901760
    %2344 = vmatprep.mubr.f32.mxu0 %v2343
    %v2345 = vand.u32 %v2204, 4294901760
    %v2346 = vsub.f32 %v2204, %v2345
    %v2347 = vand.u32 %v2346, 4294901760
    %v2348 = vsub.f32 %v2346, %v2347
    %v2349 = vand.u32 %v2348, 4294901760
    %2350 = vmatmul.mubr.f32.gmra.mrb[0].mxu0 %v2349
    %v2351 = vpop.f32.mrb[0].mxu0
    %v2352 = vadd.f32 0.0, %v2351
    %v2353 = vpop.f32.mrb[0].mxu0
    %v2354 = vand.u32 %v2240, 4294901760
    %v2355 = vsub.f32 %v2240, %v2354
    %v2356 = vand.u32 %v2355, 4294901760
    %v2357 = vsub.f32 %v2355, %v2356
    %v2358 = vand.u32 %v2357, 4294901760
    %2359 = vmatprep.mubr.f32.mxu0 %v2358
    %v2360 = vand.u32 %v2206, 4294901760
    %v2361 = vsub.f32 %v2206, %v2360
    %v2362 = vand.u32 %v2361, 4294901760
    %v2363 = vsub.f32 %v2361, %v2362
    %v2364 = vand.u32 %v2363, 4294901760
    %2365 = vmatmul.mubr.f32.gmra.mrb[0].mxu0 %v2364
    %v2366 = vpop.f32.mrb[0].mxu0
    %v2367 = vadd.f32 0.0, %v2366
    %v2368 = vpop.f32.mrb[0].mxu0
    %v2369 = vand.u32 %v2243, 4294901760
    %v2370 = vsub.f32 %v2243, %v2369
    %v2371 = vand.u32 %v2370, 4294901760
    %v2372 = vsub.f32 %v2370, %v2371
    %v2373 = vand.u32 %v2372, 4294901760
    %2374 = vmatprep.mubr.f32.mxu0 %v2373
    %v2375 = vand.u32 %v2208, 4294901760
    %v2376 = vsub.f32 %v2208, %v2375
    %v2377 = vand.u32 %v2376, 4294901760
    %v2378 = vsub.f32 %v2376, %v2377
    %v2379 = vand.u32 %v2378, 4294901760
    %2380 = vmatmul.mubr.f32.gmra.mrb[0].mxu0 %v2379
    %v2381 = vpop.f32.mrb[0].mxu0
    %v2382 = vadd.f32 0.0, %v2381
    %v2383 = vpop.f32.mrb[0].mxu0
    %v2384 = vand.u32 %v2246, 4294901760
    %v2385 = vsub.f32 %v2246, %v2384
    %v2386 = vand.u32 %v2385, 4294901760
    %v2387 = vsub.f32 %v2385, %v2386
    %v2388 = vand.u32 %v2387, 4294901760
    %2389 = vmatprep.mubr.f32.mxu0 %v2388
    %v2390 = vand.u32 %v2210, 4294901760
    %v2391 = vsub.f32 %v2210, %v2390
    %v2392 = vand.u32 %v2391, 4294901760
    %v2393 = vsub.f32 %v2391, %v2392
    %v2394 = vand.u32 %v2393, 4294901760
    %2395 = vmatmul.mubr.f32.gmra.mrb[0].mxu0 %v2394
    %v2396 = vpop.f32.mrb[0].mxu0
    %v2397 = vadd.f32 0.0, %v2396
    %v2398 = vpop.f32.mrb[0].mxu0
    %2399 = vdwg.mxu0
    %2400 = vmatprep.subr.mxu0 0.0
    %v2401 = vand.u32 %v2212, 4294901760
    %v2402 = vsub.f32 %v2212, %v2401
    %v2403 = vand.u32 %v2402, 4294901760
    %v2404 = vsub.f32 %v2402, %v2403
    %v2405 = vand.u32 %v2404, 4294901760
    %2406 = vmatpush1.msra.mxu0 %v2405
    %2407 = vmatprep.subr.mxu0 0.0
    %v2408 = vand.u32 %v2213, 4294901760
    %v2409 = vsub.f32 %v2213, %v2408
    %v2410 = vand.u32 %v2409, 4294901760
    %v2411 = vsub.f32 %v2409, %v2410
    %v2412 = vand.u32 %v2411, 4294901760
    %2413 = vmatpush1.msra.mxu0 %v2412
    %2414 = vmatprep.subr.mxu0 0.0
    %v2415 = vand.u32 %v2214, 4294901760
    %v2416 = vsub.f32 %v2214, %v2415
    %v2417 = vand.u32 %v2416, 4294901760
    %v2418 = vsub.f32 %v2416, %v2417
    %v2419 = vand.u32 %v2418, 4294901760
    %2420 = vmatpush1.msra.mxu0 %v2419
    %2421 = vmatprep.subr.mxu0 0.0
    %v2422 = vand.u32 %v2215, 4294901760
    %v2423 = vsub.f32 %v2215, %v2422
    %v2424 = vand.u32 %v2423, 4294901760
    %v2425 = vsub.f32 %v2423, %v2424
    %v2426 = vand.u32 %v2425, 4294901760
    %2427 = vmatpush1.msra.mxu0 %v2426
    %2428 = vmatprep.subr.mxu0 0.0
    %v2429 = vand.u32 %v2216, 4294901760
    %v2430 = vsub.f32 %v2216, %v2429
    %v2431 = vand.u32 %v2430, 4294901760
    %v2432 = vsub.f32 %v2430, %v2431
    %v2433 = vand.u32 %v2432, 4294901760
    %2434 = vmatpush1.msra.mxu0 %v2433
    %2435 = vmatprep.subr.mxu0 0.0
    %v2436 = vand.u32 %v2217, 4294901760
    %v2437 = vsub.f32 %v2217, %v2436
    %v2438 = vand.u32 %v2437, 4294901760
    %v2439 = vsub.f32 %v2437, %v2438
    %v2440 = vand.u32 %v2439, 4294901760
    %2441 = vmatpush1.msra.mxu0 %v2440
    %2442 = vmatprep.subr.mxu0 0.0
    %v2443 = vand.u32 %v2218, 4294901760
    %v2444 = vsub.f32 %v2218, %v2443
    %v2445 = vand.u32 %v2444, 4294901760
    %v2446 = vsub.f32 %v2444, %v2445
    %v2447 = vand.u32 %v2446, 4294901760
    %2448 = vmatpush1.msra.mxu0 %v2447
    %2449 = vmatprep.subr.mxu0 0.0
    %v2450 = vand.u32 %v2219, 4294901760
    %v2451 = vsub.f32 %v2219, %v2450
    %v2452 = vand.u32 %v2451, 4294901760
    %v2453 = vsub.f32 %v2451, %v2452
    %v2454 = vand.u32 %v2453, 4294901760
    %2455 = vmatpush1.msra.mxu0 %v2454
    %2456 = vmatprep.subr.mxu0 0.0
    %v2457 = vand.u32 %v2220, 4294901760
    %v2458 = vsub.f32 %v2220, %v2457
    %v2459 = vand.u32 %v2458, 4294901760
    %v2460 = vsub.f32 %v2458, %v2459
    %v2461 = vand.u32 %v2460, 4294901760
    %2462 = vmatpush1.msra.mxu0 %v2461
    %2463 = vmatprep.subr.mxu0 0.0
    %v2464 = vand.u32 %v2221, 4294901760
    %v2465 = vsub.f32 %v2221, %v2464
    %v2466 = vand.u32 %v2465, 4294901760
    %v2467 = vsub.f32 %v2465, %v2466
    %v2468 = vand.u32 %v2467, 4294901760
    %2469 = vmatpush1.msra.mxu0 %v2468
    %2470 = vmatprep.subr.mxu0 0.0
    %v2471 = vand.u32 %v2222, 4294901760
    %v2472 = vsub.f32 %v2222, %v2471
    %v2473 = vand.u32 %v2472, 4294901760
    %v2474 = vsub.f32 %v2472, %v2473
    %v2475 = vand.u32 %v2474, 4294901760
    %2476 = vmatpush1.msra.mxu0 %v2475
    %2477 = vmatprep.subr.mxu0 0.0
    %v2478 = vand.u32 %v2223, 4294901760
    %v2479 = vsub.f32 %v2223, %v2478
    %v2480 = vand.u32 %v2479, 4294901760
    %v2481 = vsub.f32 %v2479, %v2480
    %v2482 = vand.u32 %v2481, 4294901760
    %2483 = vmatpush1.msra.mxu0 %v2482
    %2484 = vmatprep.subr.mxu0 0.0
    %v2485 = vand.u32 %v2224, 4294901760
    %v2486 = vsub.f32 %v2224, %v2485
    %v2487 = vand.u32 %v2486, 4294901760
    %v2488 = vsub.f32 %v2486, %v2487
    %v2489 = vand.u32 %v2488, 4294901760
    %2490 = vmatpush1.msra.mxu0 %v2489
    %2491 = vmatprep.subr.mxu0 0.0
    %v2492 = vand.u32 %v2225, 4294901760
    %v2493 = vsub.f32 %v2225, %v2492
    %v2494 = vand.u32 %v2493, 4294901760
    %v2495 = vsub.f32 %v2493, %v2494
    %v2496 = vand.u32 %v2495, 4294901760
    %2497 = vmatpush1.msra.mxu0 %v2496
    %2498 = vmatprep.subr.mxu0 0.0
    %v2499 = vand.u32 %v2226, 4294901760
    %v2500 = vsub.f32 %v2226, %v2499
    %v2501 = vand.u32 %v2500, 4294901760
    %v2502 = vsub.f32 %v2500, %v2501
    %v2503 = vand.u32 %v2502, 4294901760
    %2504 = vmatpush1.msra.mxu0 %v2503
    %2505 = vmatprep.subr.mxu0 0.0
    %v2506 = vand.u32 %v2227, 4294901760
    %v2507 = vsub.f32 %v2227, %v2506
    %v2508 = vand.u32 %v2507, 4294901760
    %v2509 = vsub.f32 %v2507, %v2508
    %v2510 = vand.u32 %v2509, 4294901760
    %2511 = vmatpush1.msra.mxu0 %v2510
    %2512 = vmatprep.subr.mxu0 0.0
    %v2513 = vand.u32 %v2228, 4294901760
    %v2514 = vsub.f32 %v2228, %v2513
    %v2515 = vand.u32 %v2514, 4294901760
    %v2516 = vsub.f32 %v2514, %v2515
    %v2517 = vand.u32 %v2516, 4294901760
    %2518 = vmatpush1.msra.mxu0 %v2517
    %2519 = vmatprep.subr.mxu0 0.0
    %v2520 = vand.u32 %v2229, 4294901760
    %v2521 = vsub.f32 %v2229, %v2520
    %v2522 = vand.u32 %v2521, 4294901760
    %v2523 = vsub.f32 %v2521, %v2522
    %v2524 = vand.u32 %v2523, 4294901760
    %2525 = vmatpush1.msra.mxu0 %v2524
    %2526 = vmatprep.subr.mxu0 0.0
    %v2527 = vand.u32 %v2230, 4294901760
    %v2528 = vsub.f32 %v2230, %v2527
    %v2529 = vand.u32 %v2528, 4294901760
    %v2530 = vsub.f32 %v2528, %v2529
    %v2531 = vand.u32 %v2530, 4294901760
    %2532 = vmatpush1.msra.mxu0 %v2531
    %2533 = vmatprep.subr.mxu0 0.0
    %v2534 = vand.u32 %v2231, 4294901760
    %v2535 = vsub.f32 %v2231, %v2534
    %v2536 = vand.u32 %v2535, 4294901760
    %v2537 = vsub.f32 %v2535, %v2536
    %v2538 = vand.u32 %v2537, 4294901760
    %2539 = vmatpush1.msra.mxu0 %v2538
    %2540 = vmatprep.subr.mxu0 0.0
    %v2541 = vand.u32 %v2232, 4294901760
    %v2542 = vsub.f32 %v2232, %v2541
    %v2543 = vand.u32 %v2542, 4294901760
    %v2544 = vsub.f32 %v2542, %v2543
    %v2545 = vand.u32 %v2544, 4294901760
    %2546 = vmatpush1.msra.mxu0 %v2545
    %2547 = vmatprep.subr.mxu0 0.0
    %v2548 = vand.u32 %v2233, 4294901760
    %v2549 = vsub.f32 %v2233, %v2548
    %v2550 = vand.u32 %v2549, 4294901760
    %v2551 = vsub.f32 %v2549, %v2550
    %v2552 = vand.u32 %v2551, 4294901760
    %2553 = vmatpush1.msra.mxu0 %v2552
    %2554 = vmatprep.subr.mxu0 0.0
    %v2555 = vand.u32 %v2250, 4294901760
    %v2556 = vsub.f32 %v2250, %v2555
    %v2557 = vand.u32 %v2556, 4294901760
    %v2558 = vsub.f32 %v2556, %v2557
    %v2559 = vand.u32 %v2558, 4294901760
    %2560 = vmatpush1.msra.mxu0 %v2559
    %2561 = vmatprep.subr.mxu0 0.0
    %2562 = vmatpush1.msra.mxu0 0.0
    %2563 = vmatprep.subr.mxu0 0.0
    %2564 = vmatpush1.msra.mxu0 0.0
    %2565 = vmatprep.subr.mxu0 0.0
    %2566 = vmatpush1.msra.mxu0 0.0
    %2567 = vmatprep.subr.mxu0 0.0
    %2568 = vmatpush1.msra.mxu0 0.0
    %2569 = vmatprep.subr.mxu0 0.0
    %2570 = vmatpush1.msra.mxu0 0.0
    %2571 = vmatprep.subr.mxu0 0.0
    %2572 = vmatpush1.msra.mxu0 0.0
    %2573 = vmatprep.subr.mxu0 0.0
    %2574 = vmatpush1.msra.mxu0 0.0
    %2575 = vmatprep.subr.mxu0 0.0
    %2576 = vmatpush1.msra.mxu0 0.0
    %2577 = vmatprep.subr.mxu0 0.0
    %2578 = vmatpush1.msra.mxu0 0.0
    %v2579 = vand.u32 %v2237, 4294901760
    %2580 = vmatprep.mubr.f32.mxu0 %v2579
    %v2581 = vand.u32 %v2204, 4294901760
    %2582 = vmatmul.mubr.f32.gmra.mrb[0].mxu0 %v2581
    %v2583 = vpop.f32.mrb[0].mxu0
    %v2584 = vadd.f32 %v2352, %v2583
    %v2585 = vpop.f32.mrb[0].mxu0
    %v2586 = vand.u32 %v2240, 4294901760
    %2587 = vmatprep.mubr.f32.mxu0 %v2586
    %v2588 = vand.u32 %v2206, 4294901760
    %2589 = vmatmul.mubr.f32.gmra.mrb[0].mxu0 %v2588
    %v2590 = vpop.f32.mrb[0].mxu0
    %v2591 = vadd.f32 %v2367, %v2590
    %v2592 = vpop.f32.mrb[0].mxu0
    %v2593 = vand.u32 %v2243, 4294901760
    %2594 = vmatprep.mubr.f32.mxu0 %v2593
    %v2595 = vand.u32 %v2208, 4294901760
    %2596 = vmatmul.mubr.f32.gmra.mrb[0].mxu0 %v2595
    %v2597 = vpop.f32.mrb[0].mxu0
    %v2598 = vadd.f32 %v2382, %v2597
    %v2599 = vpop.f32.mrb[0].mxu0
    %v2600 = vand.u32 %v2246, 4294901760
    %2601 = vmatprep.mubr.f32.mxu0 %v2600
    %v2602 = vand.u32 %v2210, 4294901760
    %2603 = vmatmul.mubr.f32.gmra.mrb[0].mxu0 %v2602
    %v2604 = vpop.f32.mrb[0].mxu0
    %v2605 = vadd.f32 %v2397, %v2604
    %v2606 = vpop.f32.mrb[0].mxu0
    %2607 = vdwg.mxu0
    %2608 = vmatprep.subr.mxu0 0.0
    %v2609 = vand.u32 %v2212, 4294901760
    %v2610 = vsub.f32 %v2212, %v2609
    %2611 = vmatpush1.msra.mxu0 %v2610
    %2612 = vmatprep.subr.mxu0 0.0
    %v2613 = vand.u32 %v2213, 4294901760
    %v2614 = vsub.f32 %v2213, %v2613
    %2615 = vmatpush1.msra.mxu0 %v2614
    %2616 = vmatprep.subr.mxu0 0.0
    %v2617 = vand.u32 %v2214, 4294901760
    %v2618 = vsub.f32 %v2214, %v2617
    %2619 = vmatpush1.msra.mxu0 %v2618
    %2620 = vmatprep.subr.mxu0 0.0
    %v2621 = vand.u32 %v2215, 4294901760
    %v2622 = vsub.f32 %v2215, %v2621
    %2623 = vmatpush1.msra.mxu0 %v2622
    %2624 = vmatprep.subr.mxu0 0.0
    %v2625 = vand.u32 %v2216, 4294901760
    %v2626 = vsub.f32 %v2216, %v2625
    %2627 = vmatpush1.msra.mxu0 %v2626
    %2628 = vmatprep.subr.mxu0 0.0
    %v2629 = vand.u32 %v2217, 4294901760
    %v2630 = vsub.f32 %v2217, %v2629
    %2631 = vmatpush1.msra.mxu0 %v2630
    %2632 = vmatprep.subr.mxu0 0.0
    %v2633 = vand.u32 %v2218, 4294901760
    %v2634 = vsub.f32 %v2218, %v2633
    %2635 = vmatpush1.msra.mxu0 %v2634
    %2636 = vmatprep.subr.mxu0 0.0
    %v2637 = vand.u32 %v2219, 4294901760
    %v2638 = vsub.f32 %v2219, %v2637
    %2639 = vmatpush1.msra.mxu0 %v2638
    %2640 = vmatprep.subr.mxu0 0.0
    %v2641 = vand.u32 %v2220, 4294901760
    %v2642 = vsub.f32 %v2220, %v2641
    %2643 = vmatpush1.msra.mxu0 %v2642
    %2644 = vmatprep.subr.mxu0 0.0
    %v2645 = vand.u32 %v2221, 4294901760
    %v2646 = vsub.f32 %v2221, %v2645
    %2647 = vmatpush1.msra.mxu0 %v2646
    %2648 = vmatprep.subr.mxu0 0.0
    %v2649 = vand.u32 %v2222, 4294901760
    %v2650 = vsub.f32 %v2222, %v2649
    %2651 = vmatpush1.msra.mxu0 %v2650
    %2652 = vmatprep.subr.mxu0 0.0
    %v2653 = vand.u32 %v2223, 4294901760
    %v2654 = vsub.f32 %v2223, %v2653
    %2655 = vmatpush1.msra.mxu0 %v2654
    %2656 = vmatprep.subr.mxu0 0.0
    %v2657 = vand.u32 %v2224, 4294901760
    %v2658 = vsub.f32 %v2224, %v2657
    %2659 = vmatpush1.msra.mxu0 %v2658
    %2660 = vmatprep.subr.mxu0 0.0
    %v2661 = vand.u32 %v2225, 4294901760
    %v2662 = vsub.f32 %v2225, %v2661
    %2663 = vmatpush1.msra.mxu0 %v2662
    %2664 = vmatprep.subr.mxu0 0.0
    %v2665 = vand.u32 %v2226, 4294901760
    %v2666 = vsub.f32 %v2226, %v2665
    %2667 = vmatpush1.msra.mxu0 %v2666
    %2668 = vmatprep.subr.mxu0 0.0
    %v2669 = vand.u32 %v2227, 4294901760
    %v2670 = vsub.f32 %v2227, %v2669
    %2671 = vmatpush1.msra.mxu0 %v2670
    %2672 = vmatprep.subr.mxu0 0.0
    %v2673 = vand.u32 %v2228, 4294901760
    %v2674 = vsub.f32 %v2228, %v2673
    %2675 = vmatpush1.msra.mxu0 %v2674
    %2676 = vmatprep.subr.mxu0 0.0
    %v2677 = vand.u32 %v2229, 4294901760
    %v2678 = vsub.f32 %v2229, %v2677
    %2679 = vmatpush1.msra.mxu0 %v2678
    %2680 = vmatprep.subr.mxu0 0.0
    %v2681 = vand.u32 %v2230, 4294901760
    %v2682 = vsub.f32 %v2230, %v2681
    %2683 = vmatpush1.msra.mxu0 %v2682
    %2684 = vmatprep.subr.mxu0 0.0
    %v2685 = vand.u32 %v2231, 4294901760
    %v2686 = vsub.f32 %v2231, %v2685
    %2687 = vmatpush1.msra.mxu0 %v2686
    %2688 = vmatprep.subr.mxu0 0.0
    %v2689 = vand.u32 %v2232, 4294901760
    %v2690 = vsub.f32 %v2232, %v2689
    %2691 = vmatpush1.msra.mxu0 %v2690
    %2692 = vmatprep.subr.mxu0 0.0
    %v2693 = vand.u32 %v2233, 4294901760
    %v2694 = vsub.f32 %v2233, %v2693
    %2695 = vmatpush1.msra.mxu0 %v2694
    %2696 = vmatprep.subr.mxu0 0.0
    %v2697 = vand.u32 %v2250, 4294901760
    %v2698 = vsub.f32 %v2250, %v2697
    %2699 = vmatpush1.msra.mxu0 %v2698
    %2700 = vmatprep.subr.mxu0 0.0
    %2701 = vmatpush1.msra.mxu0 0.0
    %2702 = vmatprep.subr.mxu0 0.0
    %2703 = vmatpush1.msra.mxu0 0.0
    %2704 = vmatprep.subr.mxu0 0.0
    %2705 = vmatpush1.msra.mxu0 0.0
    %2706 = vmatprep.subr.mxu0 0.0
    %2707 = vmatpush1.msra.mxu0 0.0
    %2708 = vmatprep.subr.mxu0 0.0
    %2709 = vmatpush1.msra.mxu0 0.0
    %2710 = vmatprep.subr.mxu0 0.0
    %2711 = vmatpush1.msra.mxu0 0.0
    %2712 = vmatprep.subr.mxu0 0.0
    %2713 = vmatpush1.msra.mxu0 0.0
    %2714 = vmatprep.subr.mxu0 0.0
    %2715 = vmatpush1.msra.mxu0 0.0
    %2716 = vmatprep.subr.mxu0 0.0
    %2717 = vmatpush1.msra.mxu0 0.0
    %v2718 = vand.u32 %v2237, 4294901760
    %v2719 = vsub.f32 %v2237, %v2718
    %2720 = vmatprep.mubr.f32.mxu0 %v2719
    %v2721 = vand.u32 %v2204, 4294901760
    %v2722 = vsub.f32 %v2204, %v2721
    %2723 = vmatmul.mubr.f32.gmra.mrb[0].mxu0 %v2722
    %v2724 = vpop.f32.mrb[0].mxu0
    %v2725 = vadd.f32 %v2584, %v2724
    %v2726 = vpop.f32.mrb[0].mxu0
    %v2727 = vand.u32 %v2240, 4294901760
    %v2728 = vsub.f32 %v2240, %v2727
    %2729 = vmatprep.mubr.f32.mxu0 %v2728
    %v2730 = vand.u32 %v2206, 4294901760
    %v2731 = vsub.f32 %v2206, %v2730
    %2732 = vmatmul.mubr.f32.gmra.mrb[0].mxu0 %v2731
    %v2733 = vpop.f32.mrb[0].mxu0
    %v2734 = vadd.f32 %v2591, %v2733
    %v2735 = vpop.f32.mrb[0].mxu0
    %v2736 = vand.u32 %v2243, 4294901760
    %v2737 = vsub.f32 %v2243, %v2736
    %2738 = vmatprep.mubr.f32.mxu0 %v2737
    %v2739 = vand.u32 %v2208, 4294901760
    %v2740 = vsub.f32 %v2208, %v2739
    %2741 = vmatmul.mubr.f32.gmra.mrb[0].mxu0 %v2740
    %v2742 = vpop.f32.mrb[0].mxu0
    %v2743 = vadd.f32 %v2598, %v2742
    %v2744 = vpop.f32.mrb[0].mxu0
    %v2745 = vand.u32 %v2246, 4294901760
    %v2746 = vsub.f32 %v2246, %v2745
    %2747 = vmatprep.mubr.f32.mxu0 %v2746
    %v2748 = vand.u32 %v2210, 4294901760
    %v2749 = vsub.f32 %v2210, %v2748
    %2750 = vmatmul.mubr.f32.gmra.mrb[0].mxu0 %v2749
    %v2751 = vpop.f32.mrb[0].mxu0
    %v2752 = vadd.f32 %v2605, %v2751
    %v2753 = vpop.f32.mrb[0].mxu0
    %2754 = vdwg.mxu0
    %2755 = vmatprep.subr.mxu0 0.0
    %v2756 = vand.u32 %v2212, 4294901760
    %2757 = vmatpush1.msra.mxu0 %v2756
    %2758 = vmatprep.subr.mxu0 0.0
    %v2759 = vand.u32 %v2213, 4294901760
    %2760 = vmatpush1.msra.mxu0 %v2759
    %2761 = vmatprep.subr.mxu0 0.0
    %v2762 = vand.u32 %v2214, 4294901760
    %2763 = vmatpush1.msra.mxu0 %v2762
    %2764 = vmatprep.subr.mxu0 0.0
    %v2765 = vand.u32 %v2215, 4294901760
    %2766 = vmatpush1.msra.mxu0 %v2765
    %2767 = vmatprep.subr.mxu0 0.0
    %v2768 = vand.u32 %v2216, 4294901760
    %2769 = vmatpush1.msra.mxu0 %v2768
    %2770 = vmatprep.subr.mxu0 0.0
    %v2771 = vand.u32 %v2217, 4294901760
    %2772 = vmatpush1.msra.mxu0 %v2771
    %2773 = vmatprep.subr.mxu0 0.0
    %v2774 = vand.u32 %v2218, 4294901760
    %2775 = vmatpush1.msra.mxu0 %v2774
    %2776 = vmatprep.subr.mxu0 0.0
    %v2777 = vand.u32 %v2219, 4294901760
    %2778 = vmatpush1.msra.mxu0 %v2777
    %2779 = vmatprep.subr.mxu0 0.0
    %v2780 = vand.u32 %v2220, 4294901760
    %2781 = vmatpush1.msra.mxu0 %v2780
    %2782 = vmatprep.subr.mxu0 0.0
    %v2783 = vand.u32 %v2221, 4294901760
    %2784 = vmatpush1.msra.mxu0 %v2783
    %2785 = vmatprep.subr.mxu0 0.0
    %v2786 = vand.u32 %v2222, 4294901760
    %2787 = vmatpush1.msra.mxu0 %v2786
    %2788 = vmatprep.subr.mxu0 0.0
    %v2789 = vand.u32 %v2223, 4294901760
    %2790 = vmatpush1.msra.mxu0 %v2789
    %2791 = vmatprep.subr.mxu0 0.0
    %v2792 = vand.u32 %v2224, 4294901760
    %2793 = vmatpush1.msra.mxu0 %v2792
    %2794 = vmatprep.subr.mxu0 0.0
    %v2795 = vand.u32 %v2225, 4294901760
    %2796 = vmatpush1.msra.mxu0 %v2795
    %2797 = vmatprep.subr.mxu0 0.0
    %v2798 = vand.u32 %v2226, 4294901760
    %2799 = vmatpush1.msra.mxu0 %v2798
    %2800 = vmatprep.subr.mxu0 0.0
    %v2801 = vand.u32 %v2227, 4294901760
    %2802 = vmatpush1.msra.mxu0 %v2801
    %2803 = vmatprep.subr.mxu0 0.0
    %v2804 = vand.u32 %v2228, 4294901760
    %2805 = vmatpush1.msra.mxu0 %v2804
    %2806 = vmatprep.subr.mxu0 0.0
    %v2807 = vand.u32 %v2229, 4294901760
    %2808 = vmatpush1.msra.mxu0 %v2807
    %2809 = vmatprep.subr.mxu0 0.0
    %v2810 = vand.u32 %v2230, 4294901760
    %2811 = vmatpush1.msra.mxu0 %v2810
    %2812 = vmatprep.subr.mxu0 0.0
    %v2813 = vand.u32 %v2231, 4294901760
    %2814 = vmatpush1.msra.mxu0 %v2813
    %2815 = vmatprep.subr.mxu0 0.0
    %v2816 = vand.u32 %v2232, 4294901760
    %2817 = vmatpush1.msra.mxu0 %v2816
    %2818 = vmatprep.subr.mxu0 0.0
    %v2819 = vand.u32 %v2233, 4294901760
    %2820 = vmatpush1.msra.mxu0 %v2819
    %2821 = vmatprep.subr.mxu0 0.0
    %v2822 = vand.u32 %v2250, 4294901760
    %2823 = vmatpush1.msra.mxu0 %v2822
    %2824 = vmatprep.subr.mxu0 0.0
    %2825 = vmatpush1.msra.mxu0 0.0
    %2826 = vmatprep.subr.mxu0 0.0
    %2827 = vmatpush1.msra.mxu0 0.0
    %2828 = vmatprep.subr.mxu0 0.0
    %2829 = vmatpush1.msra.mxu0 0.0
    %2830 = vmatprep.subr.mxu0 0.0
    %2831 = vmatpush1.msra.mxu0 0.0
    %2832 = vmatprep.subr.mxu0 0.0
    %2833 = vmatpush1.msra.mxu0 0.0
    %2834 = vmatprep.subr.mxu0 0.0
    %2835 = vmatpush1.msra.mxu0 0.0
    %2836 = vmatprep.subr.mxu0 0.0
    %2837 = vmatpush1.msra.mxu0 0.0
    %2838 = vmatprep.subr.mxu0 0.0
    %2839 = vmatpush1.msra.mxu0 0.0
    %2840 = vmatprep.subr.mxu0 0.0
    %2841 = vmatpush1.msra.mxu0 0.0
    %v2842 = vand.u32 %v2237, 4294901760
    %v2843 = vsub.f32 %v2237, %v2842
    %v2844 = vand.u32 %v2843, 4294901760
    %2845 = vmatprep.mubr.f32.mxu0 %v2844
    %v2846 = vand.u32 %v2204, 4294901760
    %v2847 = vsub.f32 %v2204, %v2846
    %v2848 = vand.u32 %v2847, 4294901760
    %2849 = vmatmul.mubr.f32.gmra.mrb[0].mxu0 %v2848
    %v2850 = vpop.f32.mrb[0].mxu0
    %v2851 = vadd.f32 %v2725, %v2850
    %v2852 = vpop.f32.mrb[0].mxu0
    %v2853 = vand.u32 %v2240, 4294901760
    %v2854 = vsub.f32 %v2240, %v2853
    %v2855 = vand.u32 %v2854, 4294901760
    %2856 = vmatprep.mubr.f32.mxu0 %v2855
    %v2857 = vand.u32 %v2206, 4294901760
    %v2858 = vsub.f32 %v2206, %v2857
    %v2859 = vand.u32 %v2858, 4294901760
    %2860 = vmatmul.mubr.f32.gmra.mrb[0].mxu0 %v2859
    %v2861 = vpop.f32.mrb[0].mxu0
    %v2862 = vadd.f32 %v2734, %v2861
    %v2863 = vpop.f32.mrb[0].mxu0
    %v2864 = vand.u32 %v2243, 4294901760
    %v2865 = vsub.f32 %v2243, %v2864
    %v2866 = vand.u32 %v2865, 4294901760
    %2867 = vmatprep.mubr.f32.mxu0 %v2866
    %v2868 = vand.u32 %v2208, 4294901760
    %v2869 = vsub.f32 %v2208, %v2868
    %v2870 = vand.u32 %v2869, 4294901760
    %2871 = vmatmul.mubr.f32.gmra.mrb[0].mxu0 %v2870
    %v2872 = vpop.f32.mrb[0].mxu0
    %v2873 = vadd.f32 %v2743, %v2872
    %v2874 = vpop.f32.mrb[0].mxu0
    %v2875 = vand.u32 %v2246, 4294901760
    %v2876 = vsub.f32 %v2246, %v2875
    %v2877 = vand.u32 %v2876, 4294901760
    %2878 = vmatprep.mubr.f32.mxu0 %v2877
    %v2879 = vand.u32 %v2210, 4294901760
    %v2880 = vsub.f32 %v2210, %v2879
    %v2881 = vand.u32 %v2880, 4294901760
    %2882 = vmatmul.mubr.f32.gmra.mrb[0].mxu0 %v2881
    %v2883 = vpop.f32.mrb[0].mxu0
    %v2884 = vadd.f32 %v2752, %v2883
    %v2885 = vpop.f32.mrb[0].mxu0
    %2886 = vdwg.mxu0
    %2887 = vmatprep.subr.mxu0 0.0
    %v2888 = vand.u32 %v2212, 4294901760
    %v2889 = vsub.f32 %v2212, %v2888
    %v2890 = vand.u32 %v2889, 4294901760
    %2891 = vmatpush1.msra.mxu0 %v2890
    %2892 = vmatprep.subr.mxu0 0.0
    %v2893 = vand.u32 %v2213, 4294901760
    %v2894 = vsub.f32 %v2213, %v2893
    %v2895 = vand.u32 %v2894, 4294901760
    %2896 = vmatpush1.msra.mxu0 %v2895
    %2897 = vmatprep.subr.mxu0 0.0
    %v2898 = vand.u32 %v2214, 4294901760
    %v2899 = vsub.f32 %v2214, %v2898
    %v2900 = vand.u32 %v2899, 4294901760
    %2901 = vmatpush1.msra.mxu0 %v2900
    %2902 = vmatprep.subr.mxu0 0.0
    %v2903 = vand.u32 %v2215, 4294901760
    %v2904 = vsub.f32 %v2215, %v2903
    %v2905 = vand.u32 %v2904, 4294901760
    %2906 = vmatpush1.msra.mxu0 %v2905
    %2907 = vmatprep.subr.mxu0 0.0
    %v2908 = vand.u32 %v2216, 4294901760
    %v2909 = vsub.f32 %v2216, %v2908
    %v2910 = vand.u32 %v2909, 4294901760
    %2911 = vmatpush1.msra.mxu0 %v2910
    %2912 = vmatprep.subr.mxu0 0.0
    %v2913 = vand.u32 %v2217, 4294901760
    %v2914 = vsub.f32 %v2217, %v2913
    %v2915 = vand.u32 %v2914, 4294901760
    %2916 = vmatpush1.msra.mxu0 %v2915
    %2917 = vmatprep.subr.mxu0 0.0
    %v2918 = vand.u32 %v2218, 4294901760
    %v2919 = vsub.f32 %v2218, %v2918
    %v2920 = vand.u32 %v2919, 4294901760
    %2921 = vmatpush1.msra.mxu0 %v2920
    %2922 = vmatprep.subr.mxu0 0.0
    %v2923 = vand.u32 %v2219, 4294901760
    %v2924 = vsub.f32 %v2219, %v2923
    %v2925 = vand.u32 %v2924, 4294901760
    %2926 = vmatpush1.msra.mxu0 %v2925
    %2927 = vmatprep.subr.mxu0 0.0
    %v2928 = vand.u32 %v2220, 4294901760
    %v2929 = vsub.f32 %v2220, %v2928
    %v2930 = vand.u32 %v2929, 4294901760
    %2931 = vmatpush1.msra.mxu0 %v2930
    %2932 = vmatprep.subr.mxu0 0.0
    %v2933 = vand.u32 %v2221, 4294901760
    %v2934 = vsub.f32 %v2221, %v2933
    %v2935 = vand.u32 %v2934, 4294901760
    %2936 = vmatpush1.msra.mxu0 %v2935
    %2937 = vmatprep.subr.mxu0 0.0
    %v2938 = vand.u32 %v2222, 4294901760
    %v2939 = vsub.f32 %v2222, %v2938
    %v2940 = vand.u32 %v2939, 4294901760
    %2941 = vmatpush1.msra.mxu0 %v2940
    %2942 = vmatprep.subr.mxu0 0.0
    %v2943 = vand.u32 %v2223, 4294901760
    %v2944 = vsub.f32 %v2223, %v2943
    %v2945 = vand.u32 %v2944, 4294901760
    %2946 = vmatpush1.msra.mxu0 %v2945
    %2947 = vmatprep.subr.mxu0 0.0
    %v2948 = vand.u32 %v2224, 4294901760
    %v2949 = vsub.f32 %v2224, %v2948
    %v2950 = vand.u32 %v2949, 4294901760
    %2951 = vmatpush1.msra.mxu0 %v2950
    %2952 = vmatprep.subr.mxu0 0.0
    %v2953 = vand.u32 %v2225, 4294901760
    %v2954 = vsub.f32 %v2225, %v2953
    %v2955 = vand.u32 %v2954, 4294901760
    %2956 = vmatpush1.msra.mxu0 %v2955
    %2957 = vmatprep.subr.mxu0 0.0
    %v2958 = vand.u32 %v2226, 4294901760
    %v2959 = vsub.f32 %v2226, %v2958
    %v2960 = vand.u32 %v2959, 4294901760
    %2961 = vmatpush1.msra.mxu0 %v2960
    %2962 = vmatprep.subr.mxu0 0.0
    %v2963 = vand.u32 %v2227, 4294901760
    %v2964 = vsub.f32 %v2227, %v2963
    %v2965 = vand.u32 %v2964, 4294901760
    %2966 = vmatpush1.msra.mxu0 %v2965
    %2967 = vmatprep.subr.mxu0 0.0
    %v2968 = vand.u32 %v2228, 4294901760
    %v2969 = vsub.f32 %v2228, %v2968
    %v2970 = vand.u32 %v2969, 4294901760
    %2971 = vmatpush1.msra.mxu0 %v2970
    %2972 = vmatprep.subr.mxu0 0.0
    %v2973 = vand.u32 %v2229, 4294901760
    %v2974 = vsub.f32 %v2229, %v2973
    %v2975 = vand.u32 %v2974, 4294901760
    %2976 = vmatpush1.msra.mxu0 %v2975
    %2977 = vmatprep.subr.mxu0 0.0
    %v2978 = vand.u32 %v2230, 4294901760
    %v2979 = vsub.f32 %v2230, %v2978
    %v2980 = vand.u32 %v2979, 4294901760
    %2981 = vmatpush1.msra.mxu0 %v2980
    %2982 = vmatprep.subr.mxu0 0.0
    %v2983 = vand.u32 %v2231, 4294901760
    %v2984 = vsub.f32 %v2231, %v2983
    %v2985 = vand.u32 %v2984, 4294901760
    %2986 = vmatpush1.msra.mxu0 %v2985
    %2987 = vmatprep.subr.mxu0 0.0
    %v2988 = vand.u32 %v2232, 4294901760
    %v2989 = vsub.f32 %v2232, %v2988
    %v2990 = vand.u32 %v2989, 4294901760
    %2991 = vmatpush1.msra.mxu0 %v2990
    %2992 = vmatprep.subr.mxu0 0.0
    %v2993 = vand.u32 %v2233, 4294901760
    %v2994 = vsub.f32 %v2233, %v2993
    %v2995 = vand.u32 %v2994, 4294901760
    %2996 = vmatpush1.msra.mxu0 %v2995
    %2997 = vmatprep.subr.mxu0 0.0
    %v2998 = vand.u32 %v2250, 4294901760
    %v2999 = vsub.f32 %v2250, %v2998
    %v3000 = vand.u32 %v2999, 4294901760
    %3001 = vmatpush1.msra.mxu0 %v3000
    %3002 = vmatprep.subr.mxu0 0.0
    %3003 = vmatpush1.msra.mxu0 0.0
    %3004 = vmatprep.subr.mxu0 0.0
    %3005 = vmatpush1.msra.mxu0 0.0
    %3006 = vmatprep.subr.mxu0 0.0
    %3007 = vmatpush1.msra.mxu0 0.0
    %3008 = vmatprep.subr.mxu0 0.0
    %3009 = vmatpush1.msra.mxu0 0.0
    %3010 = vmatprep.subr.mxu0 0.0
    %3011 = vmatpush1.msra.mxu0 0.0
    %3012 = vmatprep.subr.mxu0 0.0
    %3013 = vmatpush1.msra.mxu0 0.0
    %3014 = vmatprep.subr.mxu0 0.0
    %3015 = vmatpush1.msra.mxu0 0.0
    %3016 = vmatprep.subr.mxu0 0.0
    %3017 = vmatpush1.msra.mxu0 0.0
    %3018 = vmatprep.subr.mxu0 0.0
    %3019 = vmatpush1.msra.mxu0 0.0
    %v3020 = vand.u32 %v2237, 4294901760
    %3021 = vmatprep.mubr.f32.mxu0 %v3020
    %v3022 = vand.u32 %v2204, 4294901760
    %3023 = vmatmul.mubr.f32.gmra.mrb[0].mxu0 %v3022
    %v3024 = vpop.f32.mrb[0].mxu0
    %v3025 = vadd.f32 %v2851, %v3024
    %v3026 = vpop.f32.mrb[0].mxu0
    %v3027 = vand.u32 %v2240, 4294901760
    %3028 = vmatprep.mubr.f32.mxu0 %v3027
    %v3029 = vand.u32 %v2206, 4294901760
    %3030 = vmatmul.mubr.f32.gmra.mrb[0].mxu0 %v3029
    %v3031 = vpop.f32.mrb[0].mxu0
    %v3032 = vadd.f32 %v2862, %v3031
    %v3033 = vpop.f32.mrb[0].mxu0
    %v3034 = vand.u32 %v2243, 4294901760
    %3035 = vmatprep.mubr.f32.mxu0 %v3034
    %v3036 = vand.u32 %v2208, 4294901760
    %3037 = vmatmul.mubr.f32.gmra.mrb[0].mxu0 %v3036
    %v3038 = vpop.f32.mrb[0].mxu0
    %v3039 = vadd.f32 %v2873, %v3038
    %v3040 = vpop.f32.mrb[0].mxu0
    %v3041 = vand.u32 %v2246, 4294901760
    %3042 = vmatprep.mubr.f32.mxu0 %v3041
    %v3043 = vand.u32 %v2210, 4294901760
    %3044 = vmatmul.mubr.f32.gmra.mrb[0].mxu0 %v3043
    %v3045 = vpop.f32.mrb[0].mxu0
    %v3046 = vadd.f32 %v2884, %v3045
    %v3047 = vpop.f32.mrb[0].mxu0
    %3048 = vdwg.mxu0
    %3049 = vmatprep.subr.mxu0 0.0
    %v3050 = vand.u32 %v2212, 4294901760
    %3051 = vmatpush1.msra.mxu0 %v3050
    %3052 = vmatprep.subr.mxu0 0.0
    %v3053 = vand.u32 %v2213, 4294901760
    %3054 = vmatpush1.msra.mxu0 %v3053
    %3055 = vmatprep.subr.mxu0 0.0
    %v3056 = vand.u32 %v2214, 4294901760
    %3057 = vmatpush1.msra.mxu0 %v3056
    %3058 = vmatprep.subr.mxu0 0.0
    %v3059 = vand.u32 %v2215, 4294901760
    %3060 = vmatpush1.msra.mxu0 %v3059
    %3061 = vmatprep.subr.mxu0 0.0
    %v3062 = vand.u32 %v2216, 4294901760
    %3063 = vmatpush1.msra.mxu0 %v3062
    %3064 = vmatprep.subr.mxu0 0.0
    %v3065 = vand.u32 %v2217, 4294901760
    %3066 = vmatpush1.msra.mxu0 %v3065
    %3067 = vmatprep.subr.mxu0 0.0
    %v3068 = vand.u32 %v2218, 4294901760
    %3069 = vmatpush1.msra.mxu0 %v3068
    %3070 = vmatprep.subr.mxu0 0.0
    %v3071 = vand.u32 %v2219, 4294901760
    %3072 = vmatpush1.msra.mxu0 %v3071
    %3073 = vmatprep.subr.mxu0 0.0
    %v3074 = vand.u32 %v2220, 4294901760
    %3075 = vmatpush1.msra.mxu0 %v3074
    %3076 = vmatprep.subr.mxu0 0.0
    %v3077 = vand.u32 %v2221, 4294901760
    %3078 = vmatpush1.msra.mxu0 %v3077
    %3079 = vmatprep.subr.mxu0 0.0
    %v3080 = vand.u32 %v2222, 4294901760
    %3081 = vmatpush1.msra.mxu0 %v3080
    %3082 = vmatprep.subr.mxu0 0.0
    %v3083 = vand.u32 %v2223, 4294901760
    %3084 = vmatpush1.msra.mxu0 %v3083
    %3085 = vmatprep.subr.mxu0 0.0
    %v3086 = vand.u32 %v2224, 4294901760
    %3087 = vmatpush1.msra.mxu0 %v3086
    %3088 = vmatprep.subr.mxu0 0.0
    %v3089 = vand.u32 %v2225, 4294901760
    %3090 = vmatpush1.msra.mxu0 %v3089
    %3091 = vmatprep.subr.mxu0 0.0
    %v3092 = vand.u32 %v2226, 4294901760
    %3093 = vmatpush1.msra.mxu0 %v3092
    %3094 = vmatprep.subr.mxu0 0.0
    %v3095 = vand.u32 %v2227, 4294901760
    %3096 = vmatpush1.msra.mxu0 %v3095
    %3097 = vmatprep.subr.mxu0 0.0
    %v3098 = vand.u32 %v2228, 4294901760
    %3099 = vmatpush1.msra.mxu0 %v3098
    %3100 = vmatprep.subr.mxu0 0.0
    %v3101 = vand.u32 %v2229, 4294901760
    %3102 = vmatpush1.msra.mxu0 %v3101
    %3103 = vmatprep.subr.mxu0 0.0
    %v3104 = vand.u32 %v2230, 4294901760
    %3105 = vmatpush1.msra.mxu0 %v3104
    %3106 = vmatprep.subr.mxu0 0.0
    %v3107 = vand.u32 %v2231, 4294901760
    %3108 = vmatpush1.msra.mxu0 %v3107
    %3109 = vmatprep.subr.mxu0 0.0
    %v3110 = vand.u32 %v2232, 4294901760
    %3111 = vmatpush1.msra.mxu0 %v3110
    %3112 = vmatprep.subr.mxu0 0.0
    %v3113 = vand.u32 %v2233, 4294901760
    %3114 = vmatpush1.msra.mxu0 %v3113
    %3115 = vmatprep.subr.mxu0 0.0
    %v3116 = vand.u32 %v2250, 4294901760
    %3117 = vmatpush1.msra.mxu0 %v3116
    %3118 = vmatprep.subr.mxu0 0.0
    %3119 = vmatpush1.msra.mxu0 0.0
    %3120 = vmatprep.subr.mxu0 0.0
    %3121 = vmatpush1.msra.mxu0 0.0
    %3122 = vmatprep.subr.mxu0 0.0
    %3123 = vmatpush1.msra.mxu0 0.0
    %3124 = vmatprep.subr.mxu0 0.0
    %3125 = vmatpush1.msra.mxu0 0.0
    %3126 = vmatprep.subr.mxu0 0.0
    %3127 = vmatpush1.msra.mxu0 0.0
    %3128 = vmatprep.subr.mxu0 0.0
    %3129 = vmatpush1.msra.mxu0 0.0
    %3130 = vmatprep.subr.mxu0 0.0
    %3131 = vmatpush1.msra.mxu0 0.0
    %3132 = vmatprep.subr.mxu0 0.0
    %3133 = vmatpush1.msra.mxu0 0.0
    %3134 = vmatprep.subr.mxu0 0.0
    %3135 = vmatpush1.msra.mxu0 0.0
    %v3136 = vand.u32 %v2237, 4294901760
    %3137 = vmatprep.mubr.f32.mxu0 %v3136
    %v3138 = vand.u32 %v2204, 4294901760
    %3139 = vmatmul.mubr.f32.gmra.mrb[0].mxu0 %v3138
    %v3140 = vpop.f32.mrb[0].mxu0
    %v3141 = vadd.f32 %v3025, %v3140
    %v3142 = vpop.f32.mrb[0].mxu0
    %v3143 = vand.u32 %v2240, 4294901760
    %3144 = vmatprep.mubr.f32.mxu0 %v3143
    %v3145 = vand.u32 %v2206, 4294901760
    %3146 = vmatmul.mubr.f32.gmra.mrb[0].mxu0 %v3145
    %v3147 = vpop.f32.mrb[0].mxu0
    %v3148 = vadd.f32 %v3032, %v3147
    %v3149 = vpop.f32.mrb[0].mxu0
    %v3150 = vand.u32 %v2243, 4294901760
    %3151 = vmatprep.mubr.f32.mxu0 %v3150
    %v3152 = vand.u32 %v2208, 4294901760
    %3153 = vmatmul.mubr.f32.gmra.mrb[0].mxu0 %v3152
    %v3154 = vpop.f32.mrb[0].mxu0
    %v3155 = vadd.f32 %v3039, %v3154
    %v3156 = vpop.f32.mrb[0].mxu0
    %v3157 = vand.u32 %v2246, 4294901760
    %3158 = vmatprep.mubr.f32.mxu0 %v3157
    %v3159 = vand.u32 %v2210, 4294901760
    %3160 = vmatmul.mubr.f32.gmra.mrb[0].mxu0 %v3159
    %v3161 = vpop.f32.mrb[0].mxu0
    %v3162 = vadd.f32 %v3046, %v3161
    %v3163 = vpop.f32.mrb[0].mxu0
    %3164 = vdwg.mxu0
    %v3165 = vld [vmem:[%s4] sm:$0xff]
    %v3166 = vld [vmem:[%s4 + $0x8] sm:$0xff]
    %v3167 = vld [vmem:[%s4 + $0x10] sm:$0xff]
    %v3168 = vld [vmem:[%s4 + $0x18] sm:$0xff]
    %v3169 = vld [vmem:[%s4 + $0x20] sm:$0xff]
    %v3170 = vld [vmem:[%s4 + $0x28] sm:$0xff]
    %v3171 = vld [vmem:[%s4 + $0x30] sm:$0xff]
    %v3172 = vld [vmem:[%s4 + $0x38] sm:$0xff]
    %v3173 = vld [vmem:[%s4 + $0x40] sm:$0xff]
    %v3174 = vld [vmem:[%s4 + $0x48] sm:$0xff]
    %v3175 = vld [vmem:[%s4 + $0x50] sm:$0xff]
    %v3176 = vld [vmem:[%s4 + $0x58] sm:$0xff]
    %v3177 = vld [vmem:[%s4 + $0x60] sm:$0xff]
    %v3178 = vld [vmem:[%s4 + $0x68] sm:$0xff]
    %v3179 = vld [vmem:[%s4 + $0x70] sm:$0xff]
    %v3180 = vld [vmem:[%s4 + $0x78] sm:$0xff]
    %v3181 = vld [vmem:[%s4 + $0x80] sm:$0xff]
    %v3182 = vld [vmem:[%s4 + $0x88] sm:$0xff]
    %v3183 = vld [vmem:[%s4 + $0x90] sm:$0xff]
    %v3184 = vld [vmem:[%s4 + $0x98] sm:$0xff]
    %v3185 = vld [vmem:[%s4 + $0xa0] sm:$0xff]
    %v3186 = vld [vmem:[%s4 + $0xa8] sm:$0xff]
    %v3187 = vld [vmem:[%s4 + $0xb0] sm:$0xf]
    %v3189 = vsel %vm2248, %v3187, 0
    %3191 = vmatprep.subr.mxu0 0.0
    %v3192 = vand.u32 %v3165, 4294901760
    %3193 = vmatpush1.msra.mxu0 %v3192
    %3194 = vmatprep.subr.mxu0 0.0
    %v3195 = vand.u32 %v3166, 4294901760
    %3196 = vmatpush1.msra.mxu0 %v3195
    %3197 = vmatprep.subr.mxu0 0.0
    %v3198 = vand.u32 %v3167, 4294901760
    %3199 = vmatpush1.msra.mxu0 %v3198
    %3200 = vmatprep.subr.mxu0 0.0
    %v3201 = vand.u32 %v3168, 4294901760
    %3202 = vmatpush1.msra.mxu0 %v3201
    %3203 = vmatprep.subr.mxu0 0.0
    %v3204 = vand.u32 %v3169, 4294901760
    %3205 = vmatpush1.msra.mxu0 %v3204
    %3206 = vmatprep.subr.mxu0 0.0
    %v3207 = vand.u32 %v3170, 4294901760
    %3208 = vmatpush1.msra.mxu0 %v3207
    %3209 = vmatprep.subr.mxu0 0.0
    %v3210 = vand.u32 %v3171, 4294901760
    %3211 = vmatpush1.msra.mxu0 %v3210
    %3212 = vmatprep.subr.mxu0 0.0
    %v3213 = vand.u32 %v3172, 4294901760
    %3214 = vmatpush1.msra.mxu0 %v3213
    %3215 = vmatprep.subr.mxu0 0.0
    %v3216 = vand.u32 %v3173, 4294901760
    %3217 = vmatpush1.msra.mxu0 %v3216
    %3218 = vmatprep.subr.mxu0 0.0
    %v3219 = vand.u32 %v3174, 4294901760
    %3220 = vmatpush1.msra.mxu0 %v3219
    %3221 = vmatprep.subr.mxu0 0.0
    %v3222 = vand.u32 %v3175, 4294901760
    %3223 = vmatpush1.msra.mxu0 %v3222
    %3224 = vmatprep.subr.mxu0 0.0
    %v3225 = vand.u32 %v3176, 4294901760
    %3226 = vmatpush1.msra.mxu0 %v3225
    %3227 = vmatprep.subr.mxu0 0.0
    %v3228 = vand.u32 %v3177, 4294901760
    %3229 = vmatpush1.msra.mxu0 %v3228
    %3230 = vmatprep.subr.mxu0 0.0
    %v3231 = vand.u32 %v3178, 4294901760
    %3232 = vmatpush1.msra.mxu0 %v3231
    %3233 = vmatprep.subr.mxu0 0.0
    %v3234 = vand.u32 %v3179, 4294901760
    %3235 = vmatpush1.msra.mxu0 %v3234
    %3236 = vmatprep.subr.mxu0 0.0
    %v3237 = vand.u32 %v3180, 4294901760
    %3238 = vmatpush1.msra.mxu0 %v3237
    %3239 = vmatprep.subr.mxu0 0.0
    %v3240 = vand.u32 %v3181, 4294901760
    %3241 = vmatpush1.msra.mxu0 %v3240
    %3242 = vmatprep.subr.mxu0 0.0
    %v3243 = vand.u32 %v3182, 4294901760
    %3244 = vmatpush1.msra.mxu0 %v3243
    %3245 = vmatprep.subr.mxu0 0.0
    %v3246 = vand.u32 %v3183, 4294901760
    %3247 = vmatpush1.msra.mxu0 %v3246
    %3248 = vmatprep.subr.mxu0 0.0
    %v3249 = vand.u32 %v3184, 4294901760
    %3250 = vmatpush1.msra.mxu0 %v3249
    %3251 = vmatprep.subr.mxu0 0.0
    %v3252 = vand.u32 %v3185, 4294901760
    %3253 = vmatpush1.msra.mxu0 %v3252
    %3254 = vmatprep.subr.mxu0 0.0
    %v3255 = vand.u32 %v3186, 4294901760
    %3256 = vmatpush1.msra.mxu0 %v3255
    %3257 = vmatprep.subr.mxu0 0.0
    %v3258 = vand.u32 %v3189, 4294901760
    %3259 = vmatpush1.msra.mxu0 %v3258
    %3260 = vmatprep.subr.mxu0 0.0
    %3261 = vmatpush1.msra.mxu0 0.0
    %3262 = vmatprep.subr.mxu0 0.0
    %3263 = vmatpush1.msra.mxu0 0.0
    %3264 = vmatprep.subr.mxu0 0.0
    %3265 = vmatpush1.msra.mxu0 0.0
    %3266 = vmatprep.subr.mxu0 0.0
    %3267 = vmatpush1.msra.mxu0 0.0
    %3268 = vmatprep.subr.mxu0 0.0
    %3269 = vmatpush1.msra.mxu0 0.0
    %3270 = vmatprep.subr.mxu0 0.0
    %3271 = vmatpush1.msra.mxu0 0.0
    %3272 = vmatprep.subr.mxu0 0.0
    %3273 = vmatpush1.msra.mxu0 0.0
    %3274 = vmatprep.subr.mxu0 0.0
    %3275 = vmatpush1.msra.mxu0 0.0
    %3276 = vmatprep.subr.mxu0 0.0
    %3277 = vmatpush1.msra.mxu0 0.0
    %v3278 = vand.u32 %v2237, 4294901760
    %v3279 = vsub.f32 %v2237, %v3278
    %v3280 = vand.u32 %v3279, 4294901760
    %v3281 = vsub.f32 %v3279, %v3280
    %v3282 = vand.u32 %v3281, 4294901760
    %3283 = vmatprep.mubr.f32.mxu0 %v3282
    %v3284 = vand.u32 %v2204, 4294901760
    %v3285 = vsub.f32 %v2204, %v3284
    %v3286 = vand.u32 %v3285, 4294901760
    %v3287 = vsub.f32 %v3285, %v3286
    %v3288 = vand.u32 %v3287, 4294901760
    %3289 = vmatmul.mubr.f32.gmra.mrb[0].mxu0 %v3288
    %v3290 = vpop.f32.mrb[0].mxu0
    %v3291 = vadd.f32 0.0, %v3290
    %v3292 = vpop.f32.mrb[0].mxu0
    %v3293 = vand.u32 %v2240, 4294901760
    %v3294 = vsub.f32 %v2240, %v3293
    %v3295 = vand.u32 %v3294, 4294901760
    %v3296 = vsub.f32 %v3294, %v3295
    %v3297 = vand.u32 %v3296, 4294901760
    %3298 = vmatprep.mubr.f32.mxu0 %v3297
    %v3299 = vand.u32 %v2206, 4294901760
    %v3300 = vsub.f32 %v2206, %v3299
    %v3301 = vand.u32 %v3300, 4294901760
    %v3302 = vsub.f32 %v3300, %v3301
    %v3303 = vand.u32 %v3302, 4294901760
    %3304 = vmatmul.mubr.f32.gmra.mrb[0].mxu0 %v3303
    %v3305 = vpop.f32.mrb[0].mxu0
    %v3306 = vadd.f32 0.0, %v3305
    %v3307 = vpop.f32.mrb[0].mxu0
    %v3308 = vand.u32 %v2243, 4294901760
    %v3309 = vsub.f32 %v2243, %v3308
    %v3310 = vand.u32 %v3309, 4294901760
    %v3311 = vsub.f32 %v3309, %v3310
    %v3312 = vand.u32 %v3311, 4294901760
    %3313 = vmatprep.mubr.f32.mxu0 %v3312
    %v3314 = vand.u32 %v2208, 4294901760
    %v3315 = vsub.f32 %v2208, %v3314
    %v3316 = vand.u32 %v3315, 4294901760
    %v3317 = vsub.f32 %v3315, %v3316
    %v3318 = vand.u32 %v3317, 4294901760
    %3319 = vmatmul.mubr.f32.gmra.mrb[0].mxu0 %v3318
    %v3320 = vpop.f32.mrb[0].mxu0
    %v3321 = vadd.f32 0.0, %v3320
    %v3322 = vpop.f32.mrb[0].mxu0
    %v3323 = vand.u32 %v2246, 4294901760
    %v3324 = vsub.f32 %v2246, %v3323
    %v3325 = vand.u32 %v3324, 4294901760
    %v3326 = vsub.f32 %v3324, %v3325
    %v3327 = vand.u32 %v3326, 4294901760
    %3328 = vmatprep.mubr.f32.mxu0 %v3327
    %v3329 = vand.u32 %v2210, 4294901760
    %v3330 = vsub.f32 %v2210, %v3329
    %v3331 = vand.u32 %v3330, 4294901760
    %v3332 = vsub.f32 %v3330, %v3331
    %v3333 = vand.u32 %v3332, 4294901760
    %3334 = vmatmul.mubr.f32.gmra.mrb[0].mxu0 %v3333
    %v3335 = vpop.f32.mrb[0].mxu0
    %v3336 = vadd.f32 0.0, %v3335
    %v3337 = vpop.f32.mrb[0].mxu0
    %3338 = vdwg.mxu0
    %3339 = vmatprep.subr.mxu0 0.0
    %v3340 = vand.u32 %v3165, 4294901760
    %v3341 = vsub.f32 %v3165, %v3340
    %v3342 = vand.u32 %v3341, 4294901760
    %v3343 = vsub.f32 %v3341, %v3342
    %v3344 = vand.u32 %v3343, 4294901760
    %3345 = vmatpush1.msra.mxu0 %v3344
    %3346 = vmatprep.subr.mxu0 0.0
    %v3347 = vand.u32 %v3166, 4294901760
    %v3348 = vsub.f32 %v3166, %v3347
    %v3349 = vand.u32 %v3348, 4294901760
    %v3350 = vsub.f32 %v3348, %v3349
    %v3351 = vand.u32 %v3350, 4294901760
    %3352 = vmatpush1.msra.mxu0 %v3351
    %3353 = vmatprep.subr.mxu0 0.0
    %v3354 = vand.u32 %v3167, 4294901760
    %v3355 = vsub.f32 %v3167, %v3354
    %v3356 = vand.u32 %v3355, 4294901760
    %v3357 = vsub.f32 %v3355, %v3356
    %v3358 = vand.u32 %v3357, 4294901760
    %3359 = vmatpush1.msra.mxu0 %v3358
    %3360 = vmatprep.subr.mxu0 0.0
    %v3361 = vand.u32 %v3168, 4294901760
    %v3362 = vsub.f32 %v3168, %v3361
    %v3363 = vand.u32 %v3362, 4294901760
    %v3364 = vsub.f32 %v3362, %v3363
    %v3365 = vand.u32 %v3364, 4294901760
    %3366 = vmatpush1.msra.mxu0 %v3365
    %3367 = vmatprep.subr.mxu0 0.0
    %v3368 = vand.u32 %v3169, 4294901760
    %v3369 = vsub.f32 %v3169, %v3368
    %v3370 = vand.u32 %v3369, 4294901760
    %v3371 = vsub.f32 %v3369, %v3370
    %v3372 = vand.u32 %v3371, 4294901760
    %3373 = vmatpush1.msra.mxu0 %v3372
    %3374 = vmatprep.subr.mxu0 0.0
    %v3375 = vand.u32 %v3170, 4294901760
    %v3376 = vsub.f32 %v3170, %v3375
    %v3377 = vand.u32 %v3376, 4294901760
    %v3378 = vsub.f32 %v3376, %v3377
    %v3379 = vand.u32 %v3378, 4294901760
    %3380 = vmatpush1.msra.mxu0 %v3379
    %3381 = vmatprep.subr.mxu0 0.0
    %v3382 = vand.u32 %v3171, 4294901760
    %v3383 = vsub.f32 %v3171, %v3382
    %v3384 = vand.u32 %v3383, 4294901760
    %v3385 = vsub.f32 %v3383, %v3384
    %v3386 = vand.u32 %v3385, 4294901760
    %3387 = vmatpush1.msra.mxu0 %v3386
    %3388 = vmatprep.subr.mxu0 0.0
    %v3389 = vand.u32 %v3172, 4294901760
    %v3390 = vsub.f32 %v3172, %v3389
    %v3391 = vand.u32 %v3390, 4294901760
    %v3392 = vsub.f32 %v3390, %v3391
    %v3393 = vand.u32 %v3392, 4294901760
    %3394 = vmatpush1.msra.mxu0 %v3393
    %3395 = vmatprep.subr.mxu0 0.0
    %v3396 = vand.u32 %v3173, 4294901760
    %v3397 = vsub.f32 %v3173, %v3396
    %v3398 = vand.u32 %v3397, 4294901760
    %v3399 = vsub.f32 %v3397, %v3398
    %v3400 = vand.u32 %v3399, 4294901760
    %3401 = vmatpush1.msra.mxu0 %v3400
    %3402 = vmatprep.subr.mxu0 0.0
    %v3403 = vand.u32 %v3174, 4294901760
    %v3404 = vsub.f32 %v3174, %v3403
    %v3405 = vand.u32 %v3404, 4294901760
    %v3406 = vsub.f32 %v3404, %v3405
    %v3407 = vand.u32 %v3406, 4294901760
    %3408 = vmatpush1.msra.mxu0 %v3407
    %3409 = vmatprep.subr.mxu0 0.0
    %v3410 = vand.u32 %v3175, 4294901760
    %v3411 = vsub.f32 %v3175, %v3410
    %v3412 = vand.u32 %v3411, 4294901760
    %v3413 = vsub.f32 %v3411, %v3412
    %v3414 = vand.u32 %v3413, 4294901760
    %3415 = vmatpush1.msra.mxu0 %v3414
    %3416 = vmatprep.subr.mxu0 0.0
    %v3417 = vand.u32 %v3176, 4294901760
    %v3418 = vsub.f32 %v3176, %v3417
    %v3419 = vand.u32 %v3418, 4294901760
    %v3420 = vsub.f32 %v3418, %v3419
    %v3421 = vand.u32 %v3420, 4294901760
    %3422 = vmatpush1.msra.mxu0 %v3421
    %3423 = vmatprep.subr.mxu0 0.0
    %v3424 = vand.u32 %v3177, 4294901760
    %v3425 = vsub.f32 %v3177, %v3424
    %v3426 = vand.u32 %v3425, 4294901760
    %v3427 = vsub.f32 %v3425, %v3426
    %v3428 = vand.u32 %v3427, 4294901760
    %3429 = vmatpush1.msra.mxu0 %v3428
    %3430 = vmatprep.subr.mxu0 0.0
    %v3431 = vand.u32 %v3178, 4294901760
    %v3432 = vsub.f32 %v3178, %v3431
    %v3433 = vand.u32 %v3432, 4294901760
    %v3434 = vsub.f32 %v3432, %v3433
    %v3435 = vand.u32 %v3434, 4294901760
    %3436 = vmatpush1.msra.mxu0 %v3435
    %3437 = vmatprep.subr.mxu0 0.0
    %v3438 = vand.u32 %v3179, 4294901760
    %v3439 = vsub.f32 %v3179, %v3438
    %v3440 = vand.u32 %v3439, 4294901760
    %v3441 = vsub.f32 %v3439, %v3440
    %v3442 = vand.u32 %v3441, 4294901760
    %3443 = vmatpush1.msra.mxu0 %v3442
    %3444 = vmatprep.subr.mxu0 0.0
    %v3445 = vand.u32 %v3180, 4294901760
    %v3446 = vsub.f32 %v3180, %v3445
    %v3447 = vand.u32 %v3446, 4294901760
    %v3448 = vsub.f32 %v3446, %v3447
    %v3449 = vand.u32 %v3448, 4294901760
    %3450 = vmatpush1.msra.mxu0 %v3449
    %3451 = vmatprep.subr.mxu0 0.0
    %v3452 = vand.u32 %v3181, 4294901760
    %v3453 = vsub.f32 %v3181, %v3452
    %v3454 = vand.u32 %v3453, 4294901760
    %v3455 = vsub.f32 %v3453, %v3454
    %v3456 = vand.u32 %v3455, 4294901760
    %3457 = vmatpush1.msra.mxu0 %v3456
    %3458 = vmatprep.subr.mxu0 0.0
    %v3459 = vand.u32 %v3182, 4294901760
    %v3460 = vsub.f32 %v3182, %v3459
    %v3461 = vand.u32 %v3460, 4294901760
    %v3462 = vsub.f32 %v3460, %v3461
    %v3463 = vand.u32 %v3462, 4294901760
    %3464 = vmatpush1.msra.mxu0 %v3463
    %3465 = vmatprep.subr.mxu0 0.0
    %v3466 = vand.u32 %v3183, 4294901760
    %v3467 = vsub.f32 %v3183, %v3466
    %v3468 = vand.u32 %v3467, 4294901760
    %v3469 = vsub.f32 %v3467, %v3468
    %v3470 = vand.u32 %v3469, 4294901760
    %3471 = vmatpush1.msra.mxu0 %v3470
    %3472 = vmatprep.subr.mxu0 0.0
    %v3473 = vand.u32 %v3184, 4294901760
    %v3474 = vsub.f32 %v3184, %v3473
    %v3475 = vand.u32 %v3474, 4294901760
    %v3476 = vsub.f32 %v3474, %v3475
    %v3477 = vand.u32 %v3476, 4294901760
    %3478 = vmatpush1.msra.mxu0 %v3477
    %3479 = vmatprep.subr.mxu0 0.0
    %v3480 = vand.u32 %v3185, 4294901760
    %v3481 = vsub.f32 %v3185, %v3480
    %v3482 = vand.u32 %v3481, 4294901760
    %v3483 = vsub.f32 %v3481, %v3482
    %v3484 = vand.u32 %v3483, 4294901760
    %3485 = vmatpush1.msra.mxu0 %v3484
    %3486 = vmatprep.subr.mxu0 0.0
    %v3487 = vand.u32 %v3186, 4294901760
    %v3488 = vsub.f32 %v3186, %v3487
    %v3489 = vand.u32 %v3488, 4294901760
    %v3490 = vsub.f32 %v3488, %v3489
    %v3491 = vand.u32 %v3490, 4294901760
    %3492 = vmatpush1.msra.mxu0 %v3491
    %3493 = vmatprep.subr.mxu0 0.0
    %v3494 = vand.u32 %v3189, 4294901760
    %v3495 = vsub.f32 %v3189, %v3494
    %v3496 = vand.u32 %v3495, 4294901760
    %v3497 = vsub.f32 %v3495, %v3496
    %v3498 = vand.u32 %v3497, 4294901760
    %3499 = vmatpush1.msra.mxu0 %v3498
    %3500 = vmatprep.subr.mxu0 0.0
    %3501 = vmatpush1.msra.mxu0 0.0
    %3502 = vmatprep.subr.mxu0 0.0
    %3503 = vmatpush1.msra.mxu0 0.0
    %3504 = vmatprep.subr.mxu0 0.0
    %3505 = vmatpush1.msra.mxu0 0.0
    %3506 = vmatprep.subr.mxu0 0.0
    %3507 = vmatpush1.msra.mxu0 0.0
    %3508 = vmatprep.subr.mxu0 0.0
    %3509 = vmatpush1.msra.mxu0 0.0
    %3510 = vmatprep.subr.mxu0 0.0
    %3511 = vmatpush1.msra.mxu0 0.0
    %3512 = vmatprep.subr.mxu0 0.0
    %3513 = vmatpush1.msra.mxu0 0.0
    %3514 = vmatprep.subr.mxu0 0.0
    %3515 = vmatpush1.msra.mxu0 0.0
    %3516 = vmatprep.subr.mxu0 0.0
    %3517 = vmatpush1.msra.mxu0 0.0
    %v3518 = vand.u32 %v2237, 4294901760
    %3519 = vmatprep.mubr.f32.mxu0 %v3518
    %v3520 = vand.u32 %v2204, 4294901760
    %3521 = vmatmul.mubr.f32.gmra.mrb[0].mxu0 %v3520
    %v3522 = vpop.f32.mrb[0].mxu0
    %v3523 = vadd.f32 %v3291, %v3522
    %v3524 = vpop.f32.mrb[0].mxu0
    %v3525 = vand.u32 %v2240, 4294901760
    %3526 = vmatprep.mubr.f32.mxu0 %v3525
    %v3527 = vand.u32 %v2206, 4294901760
    %3528 = vmatmul.mubr.f32.gmra.mrb[0].mxu0 %v3527
    %v3529 = vpop.f32.mrb[0].mxu0
    %v3530 = vadd.f32 %v3306, %v3529
    %v3531 = vpop.f32.mrb[0].mxu0
    %v3532 = vand.u32 %v2243, 4294901760
    %3533 = vmatprep.mubr.f32.mxu0 %v3532
    %v3534 = vand.u32 %v2208, 4294901760
    %3535 = vmatmul.mubr.f32.gmra.mrb[0].mxu0 %v3534
    %v3536 = vpop.f32.mrb[0].mxu0
    %v3537 = vadd.f32 %v3321, %v3536
    %v3538 = vpop.f32.mrb[0].mxu0
    %v3539 = vand.u32 %v2246, 4294901760
    %3540 = vmatprep.mubr.f32.mxu0 %v3539
    %v3541 = vand.u32 %v2210, 4294901760
    %3542 = vmatmul.mubr.f32.gmra.mrb[0].mxu0 %v3541
    %v3543 = vpop.f32.mrb[0].mxu0
    %v3544 = vadd.f32 %v3336, %v3543
    %v3545 = vpop.f32.mrb[0].mxu0
    %3546 = vdwg.mxu0
    %3547 = vmatprep.subr.mxu0 0.0
    %v3548 = vand.u32 %v3165, 4294901760
    %v3549 = vsub.f32 %v3165, %v3548
    %3550 = vmatpush1.msra.mxu0 %v3549
    %3551 = vmatprep.subr.mxu0 0.0
    %v3552 = vand.u32 %v3166, 4294901760
    %v3553 = vsub.f32 %v3166, %v3552
    %3554 = vmatpush1.msra.mxu0 %v3553
    %3555 = vmatprep.subr.mxu0 0.0
    %v3556 = vand.u32 %v3167, 4294901760
    %v3557 = vsub.f32 %v3167, %v3556
    %3558 = vmatpush1.msra.mxu0 %v3557
    %3559 = vmatprep.subr.mxu0 0.0
    %v3560 = vand.u32 %v3168, 4294901760
    %v3561 = vsub.f32 %v3168, %v3560
    %3562 = vmatpush1.msra.mxu0 %v3561
    %3563 = vmatprep.subr.mxu0 0.0
    %v3564 = vand.u32 %v3169, 4294901760
    %v3565 = vsub.f32 %v3169, %v3564
    %3566 = vmatpush1.msra.mxu0 %v3565
    %3567 = vmatprep.subr.mxu0 0.0
    %v3568 = vand.u32 %v3170, 4294901760
    %v3569 = vsub.f32 %v3170, %v3568
    %3570 = vmatpush1.msra.mxu0 %v3569
    %3571 = vmatprep.subr.mxu0 0.0
    %v3572 = vand.u32 %v3171, 4294901760
    %v3573 = vsub.f32 %v3171, %v3572
    %3574 = vmatpush1.msra.mxu0 %v3573
    %3575 = vmatprep.subr.mxu0 0.0
    %v3576 = vand.u32 %v3172, 4294901760
    %v3577 = vsub.f32 %v3172, %v3576
    %3578 = vmatpush1.msra.mxu0 %v3577
    %3579 = vmatprep.subr.mxu0 0.0
    %v3580 = vand.u32 %v3173, 4294901760
    %v3581 = vsub.f32 %v3173, %v3580
    %3582 = vmatpush1.msra.mxu0 %v3581
    %3583 = vmatprep.subr.mxu0 0.0
    %v3584 = vand.u32 %v3174, 4294901760
    %v3585 = vsub.f32 %v3174, %v3584
    %3586 = vmatpush1.msra.mxu0 %v3585
    %3587 = vmatprep.subr.mxu0 0.0
    %v3588 = vand.u32 %v3175, 4294901760
    %v3589 = vsub.f32 %v3175, %v3588
    %3590 = vmatpush1.msra.mxu0 %v3589
    %3591 = vmatprep.subr.mxu0 0.0
    %v3592 = vand.u32 %v3176, 4294901760
    %v3593 = vsub.f32 %v3176, %v3592
    %3594 = vmatpush1.msra.mxu0 %v3593
    %3595 = vmatprep.subr.mxu0 0.0
    %v3596 = vand.u32 %v3177, 4294901760
    %v3597 = vsub.f32 %v3177, %v3596
    %3598 = vmatpush1.msra.mxu0 %v3597
    %3599 = vmatprep.subr.mxu0 0.0
    %v3600 = vand.u32 %v3178, 4294901760
    %v3601 = vsub.f32 %v3178, %v3600
    %3602 = vmatpush1.msra.mxu0 %v3601
    %3603 = vmatprep.subr.mxu0 0.0
    %v3604 = vand.u32 %v3179, 4294901760
    %v3605 = vsub.f32 %v3179, %v3604
    %3606 = vmatpush1.msra.mxu0 %v3605
    %3607 = vmatprep.subr.mxu0 0.0
    %v3608 = vand.u32 %v3180, 4294901760
    %v3609 = vsub.f32 %v3180, %v3608
    %3610 = vmatpush1.msra.mxu0 %v3609
    %3611 = vmatprep.subr.mxu0 0.0
    %v3612 = vand.u32 %v3181, 4294901760
    %v3613 = vsub.f32 %v3181, %v3612
    %3614 = vmatpush1.msra.mxu0 %v3613
    %3615 = vmatprep.subr.mxu0 0.0
    %v3616 = vand.u32 %v3182, 4294901760
    %v3617 = vsub.f32 %v3182, %v3616
    %3618 = vmatpush1.msra.mxu0 %v3617
    %3619 = vmatprep.subr.mxu0 0.0
    %v3620 = vand.u32 %v3183, 4294901760
    %v3621 = vsub.f32 %v3183, %v3620
    %3622 = vmatpush1.msra.mxu0 %v3621
    %3623 = vmatprep.subr.mxu0 0.0
    %v3624 = vand.u32 %v3184, 4294901760
    %v3625 = vsub.f32 %v3184, %v3624
    %3626 = vmatpush1.msra.mxu0 %v3625
    %3627 = vmatprep.subr.mxu0 0.0
    %v3628 = vand.u32 %v3185, 4294901760
    %v3629 = vsub.f32 %v3185, %v3628
    %3630 = vmatpush1.msra.mxu0 %v3629
    %3631 = vmatprep.subr.mxu0 0.0
    %v3632 = vand.u32 %v3186, 4294901760
    %v3633 = vsub.f32 %v3186, %v3632
    %3634 = vmatpush1.msra.mxu0 %v3633
    %3635 = vmatprep.subr.mxu0 0.0
    %v3636 = vand.u32 %v3189, 4294901760
    %v3637 = vsub.f32 %v3189, %v3636
    %3638 = vmatpush1.msra.mxu0 %v3637
    %3639 = vmatprep.subr.mxu0 0.0
    %3640 = vmatpush1.msra.mxu0 0.0
    %3641 = vmatprep.subr.mxu0 0.0
    %3642 = vmatpush1.msra.mxu0 0.0
    %3643 = vmatprep.subr.mxu0 0.0
    %3644 = vmatpush1.msra.mxu0 0.0
    %3645 = vmatprep.subr.mxu0 0.0
    %3646 = vmatpush1.msra.mxu0 0.0
    %3647 = vmatprep.subr.mxu0 0.0
    %3648 = vmatpush1.msra.mxu0 0.0
    %3649 = vmatprep.subr.mxu0 0.0
    %3650 = vmatpush1.msra.mxu0 0.0
    %3651 = vmatprep.subr.mxu0 0.0
    %3652 = vmatpush1.msra.mxu0 0.0
    %3653 = vmatprep.subr.mxu0 0.0
    %3654 = vmatpush1.msra.mxu0 0.0
    %3655 = vmatprep.subr.mxu0 0.0
    %3656 = vmatpush1.msra.mxu0 0.0
    %v3657 = vand.u32 %v2237, 4294901760
    %v3658 = vsub.f32 %v2237, %v3657
    %3659 = vmatprep.mubr.f32.mxu0 %v3658
    %v3660 = vand.u32 %v2204, 4294901760
    %v3661 = vsub.f32 %v2204, %v3660
    %3662 = vmatmul.mubr.f32.gmra.mrb[0].mxu0 %v3661
    %v3663 = vpop.f32.mrb[0].mxu0
    %v3664 = vadd.f32 %v3523, %v3663
    %v3665 = vpop.f32.mrb[0].mxu0
    %v3666 = vand.u32 %v2240, 4294901760
    %v3667 = vsub.f32 %v2240, %v3666
    %3668 = vmatprep.mubr.f32.mxu0 %v3667
    %v3669 = vand.u32 %v2206, 4294901760
    %v3670 = vsub.f32 %v2206, %v3669
    %3671 = vmatmul.mubr.f32.gmra.mrb[0].mxu0 %v3670
    %v3672 = vpop.f32.mrb[0].mxu0
    %v3673 = vadd.f32 %v3530, %v3672
    %v3674 = vpop.f32.mrb[0].mxu0
    %v3675 = vand.u32 %v2243, 4294901760
    %v3676 = vsub.f32 %v2243, %v3675
    %3677 = vmatprep.mubr.f32.mxu0 %v3676
    %v3678 = vand.u32 %v2208, 4294901760
    %v3679 = vsub.f32 %v2208, %v3678
    %3680 = vmatmul.mubr.f32.gmra.mrb[0].mxu0 %v3679
    %v3681 = vpop.f32.mrb[0].mxu0
    %v3682 = vadd.f32 %v3537, %v3681
    %v3683 = vpop.f32.mrb[0].mxu0
    %v3684 = vand.u32 %v2246, 4294901760
    %v3685 = vsub.f32 %v2246, %v3684
    %3686 = vmatprep.mubr.f32.mxu0 %v3685
    %v3687 = vand.u32 %v2210, 4294901760
    %v3688 = vsub.f32 %v2210, %v3687
    %3689 = vmatmul.mubr.f32.gmra.mrb[0].mxu0 %v3688
    %v3690 = vpop.f32.mrb[0].mxu0
    %v3691 = vadd.f32 %v3544, %v3690
    %v3692 = vpop.f32.mrb[0].mxu0
    %3693 = vdwg.mxu0
    %3694 = vmatprep.subr.mxu0 0.0
    %v3695 = vand.u32 %v3165, 4294901760
    %3696 = vmatpush1.msra.mxu0 %v3695
    %3697 = vmatprep.subr.mxu0 0.0
    %v3698 = vand.u32 %v3166, 4294901760
    %3699 = vmatpush1.msra.mxu0 %v3698
    %3700 = vmatprep.subr.mxu0 0.0
    %v3701 = vand.u32 %v3167, 4294901760
    %3702 = vmatpush1.msra.mxu0 %v3701
    %3703 = vmatprep.subr.mxu0 0.0
    %v3704 = vand.u32 %v3168, 4294901760
    %3705 = vmatpush1.msra.mxu0 %v3704
    %3706 = vmatprep.subr.mxu0 0.0
    %v3707 = vand.u32 %v3169, 4294901760
    %3708 = vmatpush1.msra.mxu0 %v3707
    %3709 = vmatprep.subr.mxu0 0.0
    %v3710 = vand.u32 %v3170, 4294901760
    %3711 = vmatpush1.msra.mxu0 %v3710
    %3712 = vmatprep.subr.mxu0 0.0
    %v3713 = vand.u32 %v3171, 4294901760
    %3714 = vmatpush1.msra.mxu0 %v3713
    %3715 = vmatprep.subr.mxu0 0.0
    %v3716 = vand.u32 %v3172, 4294901760
    %3717 = vmatpush1.msra.mxu0 %v3716
    %3718 = vmatprep.subr.mxu0 0.0
    %v3719 = vand.u32 %v3173, 4294901760
    %3720 = vmatpush1.msra.mxu0 %v3719
    %3721 = vmatprep.subr.mxu0 0.0
    %v3722 = vand.u32 %v3174, 4294901760
    %3723 = vmatpush1.msra.mxu0 %v3722
    %3724 = vmatprep.subr.mxu0 0.0
    %v3725 = vand.u32 %v3175, 4294901760
    %3726 = vmatpush1.msra.mxu0 %v3725
    %3727 = vmatprep.subr.mxu0 0.0
    %v3728 = vand.u32 %v3176, 4294901760
    %3729 = vmatpush1.msra.mxu0 %v3728
    %3730 = vmatprep.subr.mxu0 0.0
    %v3731 = vand.u32 %v3177, 4294901760
    %3732 = vmatpush1.msra.mxu0 %v3731
    %3733 = vmatprep.subr.mxu0 0.0
    %v3734 = vand.u32 %v3178, 4294901760
    %3735 = vmatpush1.msra.mxu0 %v3734
    %3736 = vmatprep.subr.mxu0 0.0
    %v3737 = vand.u32 %v3179, 4294901760
    %3738 = vmatpush1.msra.mxu0 %v3737
    %3739 = vmatprep.subr.mxu0 0.0
    %v3740 = vand.u32 %v3180, 4294901760
    %3741 = vmatpush1.msra.mxu0 %v3740
    %3742 = vmatprep.subr.mxu0 0.0
    %v3743 = vand.u32 %v3181, 4294901760
    %3744 = vmatpush1.msra.mxu0 %v3743
    %3745 = vmatprep.subr.mxu0 0.0
    %v3746 = vand.u32 %v3182, 4294901760
    %3747 = vmatpush1.msra.mxu0 %v3746
    %3748 = vmatprep.subr.mxu0 0.0
    %v3749 = vand.u32 %v3183, 4294901760
    %3750 = vmatpush1.msra.mxu0 %v3749
    %3751 = vmatprep.subr.mxu0 0.0
    %v3752 = vand.u32 %v3184, 4294901760
    %3753 = vmatpush1.msra.mxu0 %v3752
    %3754 = vmatprep.subr.mxu0 0.0
    %v3755 = vand.u32 %v3185, 4294901760
    %3756 = vmatpush1.msra.mxu0 %v3755
    %3757 = vmatprep.subr.mxu0 0.0
    %v3758 = vand.u32 %v3186, 4294901760
    %3759 = vmatpush1.msra.mxu0 %v3758
    %3760 = vmatprep.subr.mxu0 0.0
    %v3761 = vand.u32 %v3189, 4294901760
    %3762 = vmatpush1.msra.mxu0 %v3761
    %3763 = vmatprep.subr.mxu0 0.0
    %3764 = vmatpush1.msra.mxu0 0.0
    %3765 = vmatprep.subr.mxu0 0.0
    %3766 = vmatpush1.msra.mxu0 0.0
    %3767 = vmatprep.subr.mxu0 0.0
    %3768 = vmatpush1.msra.mxu0 0.0
    %3769 = vmatprep.subr.mxu0 0.0
    %3770 = vmatpush1.msra.mxu0 0.0
    %3771 = vmatprep.subr.mxu0 0.0
    %3772 = vmatpush1.msra.mxu0 0.0
    %3773 = vmatprep.subr.mxu0 0.0
    %3774 = vmatpush1.msra.mxu0 0.0
    %3775 = vmatprep.subr.mxu0 0.0
    %3776 = vmatpush1.msra.mxu0 0.0
    %3777 = vmatprep.subr.mxu0 0.0
    %3778 = vmatpush1.msra.mxu0 0.0
    %3779 = vmatprep.subr.mxu0 0.0
    %3780 = vmatpush1.msra.mxu0 0.0
    %v3781 = vand.u32 %v2237, 4294901760
    %v3782 = vsub.f32 %v2237, %v3781
    %v3783 = vand.u32 %v3782, 4294901760
    %3784 = vmatprep.mubr.f32.mxu0 %v3783
    %v3785 = vand.u32 %v2204, 4294901760
    %v3786 = vsub.f32 %v2204, %v3785
    %v3787 = vand.u32 %v3786, 4294901760
    %3788 = vmatmul.mubr.f32.gmra.mrb[0].mxu0 %v3787
    %v3789 = vpop.f32.mrb[0].mxu0
    %v3790 = vadd.f32 %v3664, %v3789
    %v3791 = vpop.f32.mrb[0].mxu0
    %v3792 = vand.u32 %v2240, 4294901760
    %v3793 = vsub.f32 %v2240, %v3792
    %v3794 = vand.u32 %v3793, 4294901760
    %3795 = vmatprep.mubr.f32.mxu0 %v3794
    %v3796 = vand.u32 %v2206, 4294901760
    %v3797 = vsub.f32 %v2206, %v3796
    %v3798 = vand.u32 %v3797, 4294901760
    %3799 = vmatmul.mubr.f32.gmra.mrb[0].mxu0 %v3798
    %v3800 = vpop.f32.mrb[0].mxu0
    %v3801 = vadd.f32 %v3673, %v3800
    %v3802 = vpop.f32.mrb[0].mxu0
    %v3803 = vand.u32 %v2243, 4294901760
    %v3804 = vsub.f32 %v2243, %v3803
    %v3805 = vand.u32 %v3804, 4294901760
    %3806 = vmatprep.mubr.f32.mxu0 %v3805
    %v3807 = vand.u32 %v2208, 4294901760
    %v3808 = vsub.f32 %v2208, %v3807
    %v3809 = vand.u32 %v3808, 4294901760
    %3810 = vmatmul.mubr.f32.gmra.mrb[0].mxu0 %v3809
    %v3811 = vpop.f32.mrb[0].mxu0
    %v3812 = vadd.f32 %v3682, %v3811
    %v3813 = vpop.f32.mrb[0].mxu0
    %v3814 = vand.u32 %v2246, 4294901760
    %v3815 = vsub.f32 %v2246, %v3814
    %v3816 = vand.u32 %v3815, 4294901760
    %3817 = vmatprep.mubr.f32.mxu0 %v3816
    %v3818 = vand.u32 %v2210, 4294901760
    %v3819 = vsub.f32 %v2210, %v3818
    %v3820 = vand.u32 %v3819, 4294901760
    %3821 = vmatmul.mubr.f32.gmra.mrb[0].mxu0 %v3820
    %v3822 = vpop.f32.mrb[0].mxu0
    %v3823 = vadd.f32 %v3691, %v3822
    %v3824 = vpop.f32.mrb[0].mxu0
    %3825 = vdwg.mxu0
    %3826 = vmatprep.subr.mxu0 0.0
    %v3827 = vand.u32 %v3165, 4294901760
    %v3828 = vsub.f32 %v3165, %v3827
    %v3829 = vand.u32 %v3828, 4294901760
    %3830 = vmatpush1.msra.mxu0 %v3829
    %3831 = vmatprep.subr.mxu0 0.0
    %v3832 = vand.u32 %v3166, 4294901760
    %v3833 = vsub.f32 %v3166, %v3832
    %v3834 = vand.u32 %v3833, 4294901760
    %3835 = vmatpush1.msra.mxu0 %v3834
    %3836 = vmatprep.subr.mxu0 0.0
    %v3837 = vand.u32 %v3167, 4294901760
    %v3838 = vsub.f32 %v3167, %v3837
    %v3839 = vand.u32 %v3838, 4294901760
    %3840 = vmatpush1.msra.mxu0 %v3839
    %3841 = vmatprep.subr.mxu0 0.0
    %v3842 = vand.u32 %v3168, 4294901760
    %v3843 = vsub.f32 %v3168, %v3842
    %v3844 = vand.u32 %v3843, 4294901760
    %3845 = vmatpush1.msra.mxu0 %v3844
    %3846 = vmatprep.subr.mxu0 0.0
    %v3847 = vand.u32 %v3169, 4294901760
    %v3848 = vsub.f32 %v3169, %v3847
    %v3849 = vand.u32 %v3848, 4294901760
    %3850 = vmatpush1.msra.mxu0 %v3849
    %3851 = vmatprep.subr.mxu0 0.0
    %v3852 = vand.u32 %v3170, 4294901760
    %v3853 = vsub.f32 %v3170, %v3852
    %v3854 = vand.u32 %v3853, 4294901760
    %3855 = vmatpush1.msra.mxu0 %v3854
    %3856 = vmatprep.subr.mxu0 0.0
    %v3857 = vand.u32 %v3171, 4294901760
    %v3858 = vsub.f32 %v3171, %v3857
    %v3859 = vand.u32 %v3858, 4294901760
    %3860 = vmatpush1.msra.mxu0 %v3859
    %3861 = vmatprep.subr.mxu0 0.0
    %v3862 = vand.u32 %v3172, 4294901760
    %v3863 = vsub.f32 %v3172, %v3862
    %v3864 = vand.u32 %v3863, 4294901760
    %3865 = vmatpush1.msra.mxu0 %v3864
    %3866 = vmatprep.subr.mxu0 0.0
    %v3867 = vand.u32 %v3173, 4294901760
    %v3868 = vsub.f32 %v3173, %v3867
    %v3869 = vand.u32 %v3868, 4294901760
    %3870 = vmatpush1.msra.mxu0 %v3869
    %3871 = vmatprep.subr.mxu0 0.0
    %v3872 = vand.u32 %v3174, 4294901760
    %v3873 = vsub.f32 %v3174, %v3872
    %v3874 = vand.u32 %v3873, 4294901760
    %3875 = vmatpush1.msra.mxu0 %v3874
    %3876 = vmatprep.subr.mxu0 0.0
    %v3877 = vand.u32 %v3175, 4294901760
    %v3878 = vsub.f32 %v3175, %v3877
    %v3879 = vand.u32 %v3878, 4294901760
    %3880 = vmatpush1.msra.mxu0 %v3879
    %3881 = vmatprep.subr.mxu0 0.0
    %v3882 = vand.u32 %v3176, 4294901760
    %v3883 = vsub.f32 %v3176, %v3882
    %v3884 = vand.u32 %v3883, 4294901760
    %3885 = vmatpush1.msra.mxu0 %v3884
    %3886 = vmatprep.subr.mxu0 0.0
    %v3887 = vand.u32 %v3177, 4294901760
    %v3888 = vsub.f32 %v3177, %v3887
    %v3889 = vand.u32 %v3888, 4294901760
    %3890 = vmatpush1.msra.mxu0 %v3889
    %3891 = vmatprep.subr.mxu0 0.0
    %v3892 = vand.u32 %v3178, 4294901760
    %v3893 = vsub.f32 %v3178, %v3892
    %v3894 = vand.u32 %v3893, 4294901760
    %3895 = vmatpush1.msra.mxu0 %v3894
    %3896 = vmatprep.subr.mxu0 0.0
    %v3897 = vand.u32 %v3179, 4294901760
    %v3898 = vsub.f32 %v3179, %v3897
    %v3899 = vand.u32 %v3898, 4294901760
    %3900 = vmatpush1.msra.mxu0 %v3899
    %3901 = vmatprep.subr.mxu0 0.0
    %v3902 = vand.u32 %v3180, 4294901760
    %v3903 = vsub.f32 %v3180, %v3902
    %v3904 = vand.u32 %v3903, 4294901760
    %3905 = vmatpush1.msra.mxu0 %v3904
    %3906 = vmatprep.subr.mxu0 0.0
    %v3907 = vand.u32 %v3181, 4294901760
    %v3908 = vsub.f32 %v3181, %v3907
    %v3909 = vand.u32 %v3908, 4294901760
    %3910 = vmatpush1.msra.mxu0 %v3909
    %3911 = vmatprep.subr.mxu0 0.0
    %v3912 = vand.u32 %v3182, 4294901760
    %v3913 = vsub.f32 %v3182, %v3912
    %v3914 = vand.u32 %v3913, 4294901760
    %3915 = vmatpush1.msra.mxu0 %v3914
    %3916 = vmatprep.subr.mxu0 0.0
    %v3917 = vand.u32 %v3183, 4294901760
    %v3918 = vsub.f32 %v3183, %v3917
    %v3919 = vand.u32 %v3918, 4294901760
    %3920 = vmatpush1.msra.mxu0 %v3919
    %3921 = vmatprep.subr.mxu0 0.0
    %v3922 = vand.u32 %v3184, 4294901760
    %v3923 = vsub.f32 %v3184, %v3922
    %v3924 = vand.u32 %v3923, 4294901760
    %3925 = vmatpush1.msra.mxu0 %v3924
    %3926 = vmatprep.subr.mxu0 0.0
    %v3927 = vand.u32 %v3185, 4294901760
    %v3928 = vsub.f32 %v3185, %v3927
    %v3929 = vand.u32 %v3928, 4294901760
    %3930 = vmatpush1.msra.mxu0 %v3929
    %3931 = vmatprep.subr.mxu0 0.0
    %v3932 = vand.u32 %v3186, 4294901760
    %v3933 = vsub.f32 %v3186, %v3932
    %v3934 = vand.u32 %v3933, 4294901760
    %3935 = vmatpush1.msra.mxu0 %v3934
    %3936 = vmatprep.subr.mxu0 0.0
    %v3937 = vand.u32 %v3189, 4294901760
    %v3938 = vsub.f32 %v3189, %v3937
    %v3939 = vand.u32 %v3938, 4294901760
    %3940 = vmatpush1.msra.mxu0 %v3939
    %3941 = vmatprep.subr.mxu0 0.0
    %3942 = vmatpush1.msra.mxu0 0.0
    %3943 = vmatprep.subr.mxu0 0.0
    %3944 = vmatpush1.msra.mxu0 0.0
    %3945 = vmatprep.subr.mxu0 0.0
    %3946 = vmatpush1.msra.mxu0 0.0
    %3947 = vmatprep.subr.mxu0 0.0
    %3948 = vmatpush1.msra.mxu0 0.0
    %3949 = vmatprep.subr.mxu0 0.0
    %3950 = vmatpush1.msra.mxu0 0.0
    %3951 = vmatprep.subr.mxu0 0.0
    %3952 = vmatpush1.msra.mxu0 0.0
    %3953 = vmatprep.subr.mxu0 0.0
    %3954 = vmatpush1.msra.mxu0 0.0
    %3955 = vmatprep.subr.mxu0 0.0
    %3956 = vmatpush1.msra.mxu0 0.0
    %3957 = vmatprep.subr.mxu0 0.0
    %3958 = vmatpush1.msra.mxu0 0.0
    %v3959 = vand.u32 %v2237, 4294901760
    %3960 = vmatprep.mubr.f32.mxu0 %v3959
    %v3961 = vand.u32 %v2204, 4294901760
    %3962 = vmatmul.mubr.f32.gmra.mrb[0].mxu0 %v3961
    %v3963 = vpop.f32.mrb[0].mxu0
    %v3964 = vadd.f32 %v3790, %v3963
    %v3965 = vpop.f32.mrb[0].mxu0
    %v3966 = vand.u32 %v2240, 4294901760
    %3967 = vmatprep.mubr.f32.mxu0 %v3966
    %v3968 = vand.u32 %v2206, 4294901760
    %3969 = vmatmul.mubr.f32.gmra.mrb[0].mxu0 %v3968
    %v3970 = vpop.f32.mrb[0].mxu0
    %v3971 = vadd.f32 %v3801, %v3970
    %v3972 = vpop.f32.mrb[0].mxu0
    %v3973 = vand.u32 %v2243, 4294901760
    %3974 = vmatprep.mubr.f32.mxu0 %v3973
    %v3975 = vand.u32 %v2208, 4294901760
    %3976 = vmatmul.mubr.f32.gmra.mrb[0].mxu0 %v3975
    %v3977 = vpop.f32.mrb[0].mxu0
    %v3978 = vadd.f32 %v3812, %v3977
    %v3979 = vpop.f32.mrb[0].mxu0
    %v3980 = vand.u32 %v2246, 4294901760
    %3981 = vmatprep.mubr.f32.mxu0 %v3980
    %v3982 = vand.u32 %v2210, 4294901760
    %3983 = vmatmul.mubr.f32.gmra.mrb[0].mxu0 %v3982
    %v3984 = vpop.f32.mrb[0].mxu0
    %v3985 = vadd.f32 %v3823, %v3984
    %v3986 = vpop.f32.mrb[0].mxu0
    %3987 = vdwg.mxu0
    %3988 = vmatprep.subr.mxu0 0.0
    %v3989 = vand.u32 %v3165, 4294901760
    %3990 = vmatpush1.msra.mxu0 %v3989
    %3991 = vmatprep.subr.mxu0 0.0
    %v3992 = vand.u32 %v3166, 4294901760
    %3993 = vmatpush1.msra.mxu0 %v3992
    %3994 = vmatprep.subr.mxu0 0.0
    %v3995 = vand.u32 %v3167, 4294901760
    %3996 = vmatpush1.msra.mxu0 %v3995
    %3997 = vmatprep.subr.mxu0 0.0
    %v3998 = vand.u32 %v3168, 4294901760
    %3999 = vmatpush1.msra.mxu0 %v3998
    %4000 = vmatprep.subr.mxu0 0.0
    %v4001 = vand.u32 %v3169, 4294901760
    %4002 = vmatpush1.msra.mxu0 %v4001
    %4003 = vmatprep.subr.mxu0 0.0
    %v4004 = vand.u32 %v3170, 4294901760
    %4005 = vmatpush1.msra.mxu0 %v4004
    %4006 = vmatprep.subr.mxu0 0.0
    %v4007 = vand.u32 %v3171, 4294901760
    %4008 = vmatpush1.msra.mxu0 %v4007
    %4009 = vmatprep.subr.mxu0 0.0
    %v4010 = vand.u32 %v3172, 4294901760
    %4011 = vmatpush1.msra.mxu0 %v4010
    %4012 = vmatprep.subr.mxu0 0.0
    %v4013 = vand.u32 %v3173, 4294901760
    %4014 = vmatpush1.msra.mxu0 %v4013
    %4015 = vmatprep.subr.mxu0 0.0
    %v4016 = vand.u32 %v3174, 4294901760
    %4017 = vmatpush1.msra.mxu0 %v4016
    %4018 = vmatprep.subr.mxu0 0.0
    %v4019 = vand.u32 %v3175, 4294901760
    %4020 = vmatpush1.msra.mxu0 %v4019
    %4021 = vmatprep.subr.mxu0 0.0
    %v4022 = vand.u32 %v3176, 4294901760
    %4023 = vmatpush1.msra.mxu0 %v4022
    %4024 = vmatprep.subr.mxu0 0.0
    %v4025 = vand.u32 %v3177, 4294901760
    %4026 = vmatpush1.msra.mxu0 %v4025
    %4027 = vmatprep.subr.mxu0 0.0
    %v4028 = vand.u32 %v3178, 4294901760
    %4029 = vmatpush1.msra.mxu0 %v4028
    %4030 = vmatprep.subr.mxu0 0.0
    %v4031 = vand.u32 %v3179, 4294901760
    %4032 = vmatpush1.msra.mxu0 %v4031
    %4033 = vmatprep.subr.mxu0 0.0
    %v4034 = vand.u32 %v3180, 4294901760
    %4035 = vmatpush1.msra.mxu0 %v4034
    %4036 = vmatprep.subr.mxu0 0.0
    %v4037 = vand.u32 %v3181, 4294901760
    %4038 = vmatpush1.msra.mxu0 %v4037
    %4039 = vmatprep.subr.mxu0 0.0
    %v4040 = vand.u32 %v3182, 4294901760
    %4041 = vmatpush1.msra.mxu0 %v4040
    %4042 = vmatprep.subr.mxu0 0.0
    %v4043 = vand.u32 %v3183, 4294901760
    %4044 = vmatpush1.msra.mxu0 %v4043
    %4045 = vmatprep.subr.mxu0 0.0
    %v4046 = vand.u32 %v3184, 4294901760
    %4047 = vmatpush1.msra.mxu0 %v4046
    %4048 = vmatprep.subr.mxu0 0.0
    %v4049 = vand.u32 %v3185, 4294901760
    %4050 = vmatpush1.msra.mxu0 %v4049
    %4051 = vmatprep.subr.mxu0 0.0
    %v4052 = vand.u32 %v3186, 4294901760
    %4053 = vmatpush1.msra.mxu0 %v4052
    %4054 = vmatprep.subr.mxu0 0.0
    %v4055 = vand.u32 %v3189, 4294901760
    %4056 = vmatpush1.msra.mxu0 %v4055
    %4057 = vmatprep.subr.mxu0 0.0
    %4058 = vmatpush1.msra.mxu0 0.0
    %4059 = vmatprep.subr.mxu0 0.0
    %4060 = vmatpush1.msra.mxu0 0.0
    %4061 = vmatprep.subr.mxu0 0.0
    %4062 = vmatpush1.msra.mxu0 0.0
    %4063 = vmatprep.subr.mxu0 0.0
    %4064 = vmatpush1.msra.mxu0 0.0
    %4065 = vmatprep.subr.mxu0 0.0
    %4066 = vmatpush1.msra.mxu0 0.0
    %4067 = vmatprep.subr.mxu0 0.0
    %4068 = vmatpush1.msra.mxu0 0.0
    %4069 = vmatprep.subr.mxu0 0.0
    %4070 = vmatpush1.msra.mxu0 0.0
    %4071 = vmatprep.subr.mxu0 0.0
    %4072 = vmatpush1.msra.mxu0 0.0
    %4073 = vmatprep.subr.mxu0 0.0
    %4074 = vmatpush1.msra.mxu0 0.0
    %v4075 = vand.u32 %v2237, 4294901760
    %4076 = vmatprep.mubr.f32.mxu0 %v4075
    %v4077 = vand.u32 %v2204, 4294901760
    %4078 = vmatmul.mubr.f32.gmra.mrb[0].mxu0 %v4077
    %v4079 = vpop.f32.mrb[0].mxu0
    %v4080 = vadd.f32 %v3964, %v4079
    %v4081 = vpop.f32.mrb[0].mxu0
    %v4082 = vand.u32 %v2240, 4294901760
    %4083 = vmatprep.mubr.f32.mxu0 %v4082
    %v4084 = vand.u32 %v2206, 4294901760
    %4085 = vmatmul.mubr.f32.gmra.mrb[0].mxu0 %v4084
    %v4086 = vpop.f32.mrb[0].mxu0
    %v4087 = vadd.f32 %v3971, %v4086
    %v4088 = vpop.f32.mrb[0].mxu0
    %v4089 = vand.u32 %v2243, 4294901760
    %4090 = vmatprep.mubr.f32.mxu0 %v4089
    %v4091 = vand.u32 %v2208, 4294901760
    %4092 = vmatmul.mubr.f32.gmra.mrb[0].mxu0 %v4091
    %v4093 = vpop.f32.mrb[0].mxu0
    %v4094 = vadd.f32 %v3978, %v4093
    %v4095 = vpop.f32.mrb[0].mxu0
    %v4096 = vand.u32 %v2246, 4294901760
    %4097 = vmatprep.mubr.f32.mxu0 %v4096
    %v4098 = vand.u32 %v2210, 4294901760
    %4099 = vmatmul.mubr.f32.gmra.mrb[0].mxu0 %v4098
    %v4100 = vpop.f32.mrb[0].mxu0
    %v4101 = vadd.f32 %v3985, %v4100
    %v4102 = vpop.f32.mrb[0].mxu0
    %4103 = vdwg.mxu0
    %v4104 = vmax.f32 %v3141, %v4080
    %v4105 = vmax.f32 %v3148, %v4087
    %v4106 = vmax.f32 %v3155, %v4094
    %v4107 = vmax.f32 %v3162, %v4101
    %vm4108 = vcmask 736256
    %4109 = vst.msk [vmem:[#allocation2] sm:$0xff] %vm4108, %v4104
    %4110 = vst.msk [vmem:[#allocation2 + $0x8] sm:$0xff] %vm4108, %v4105
    %4111 = vst.msk [vmem:[#allocation2 + $0x10] sm:$0xff] %vm4108, %v4106
    %vm4112 = vcmask 734208
    %4113 = vst.msk [vmem:[#allocation2 + $0x18] sm:$0x3f] %vm4112, %v4107
    %v4114 = vld [vmem:[#allocation2] ss:$2 sm:$0xff]
    %s4115 = scalar_lea.vmem [#allocation2], 16
    %v4116 = vld [vmem:[%s4115] ss:$2 sm:$0x7f]
    %s4117 = scalar_lea.vmem [#allocation2], 1
    %v4118 = vld [vmem:[%s4117] ss:$2 sm:$0xff]
    %s4119 = scalar_lea.vmem [#allocation2], 17
    %v4120 = vld [vmem:[%s4119] ss:$2 sm:$0x7f]
    %v4121 = vmax.f32 %v4114, %v4118
    %v4122 = vmax.f32 %v4116, %v4120
    %v4123 = vld [vmem:[%s5] sm:$0xff]
    %v4124 = vld [vmem:[%s5 + $0x8] sm:$0xff]
    %v4125 = vld [vmem:[%s5 + $0x10] sm:$0xff]
    %v4126 = vld [vmem:[%s5 + $0x18] sm:$0xff]
    %v4127 = vld [vmem:[%s5 + $0x20] sm:$0xff]
    %v4128 = vld [vmem:[%s5 + $0x28] sm:$0xff]
    %v4129 = vld [vmem:[%s5 + $0x30] sm:$0xff]
    %v4130 = vld [vmem:[%s5 + $0x38] sm:$0xff]
    %v4131 = vld [vmem:[%s5 + $0x40] sm:$0xff]
    %v4132 = vld [vmem:[%s5 + $0x48] sm:$0xff]
    %v4133 = vld [vmem:[%s5 + $0x50] sm:$0xff]
    %v4134 = vld [vmem:[%s5 + $0x58] sm:$0xff]
    %v4135 = vld [vmem:[%s5 + $0x60] sm:$0xff]
    %v4136 = vld [vmem:[%s5 + $0x68] sm:$0xff]
    %v4137 = vld [vmem:[%s5 + $0x70] sm:$0xff]
    %v4138 = vld [vmem:[%s5 + $0x78] sm:$0xff]
    %v4139 = vld [vmem:[%s5 + $0x80] sm:$0xff]
    %v4140 = vld [vmem:[%s5 + $0x88] sm:$0xff]
    %v4141 = vld [vmem:[%s5 + $0x90] sm:$0xff]
    %v4142 = vld [vmem:[%s5 + $0x98] sm:$0xff]
    %v4143 = vld [vmem:[%s5 + $0xa0] sm:$0xff]
    %v4144 = vld [vmem:[%s5 + $0xa8] sm:$0xff]
    %v4145 = vld [vmem:[%s5 + $0xb0] sm:$0x3]
    %v4146 = vld [vmem:[%s5 + $0xb8] sm:$0x3]
    %v4148 = vsel %vm4108, %v4121, 0
    %v4151 = vsel %vm4108, %v4122, 0
    %vm4153 = vcmask 1041408
    %v4155 = vsel %vm4153, %v4145, 0
    %v4158 = vsel %vm4153, %v4146, 0
    %v4160 = vand.u32 %v4124, 4294901760
    %4161 = vmatprep.subr.mxu0 %v4160
    %v4162 = vand.u32 %v4123, 4294901760
    %4163 = vmatpush1.msra.mxu0 %v4162
    %v4164 = vand.u32 %v4126, 4294901760
    %4165 = vmatprep.subr.mxu0 %v4164
    %v4166 = vand.u32 %v4125, 4294901760
    %4167 = vmatpush1.msra.mxu0 %v4166
    %v4168 = vand.u32 %v4128, 4294901760
    %4169 = vmatprep.subr.mxu0 %v4168
    %v4170 = vand.u32 %v4127, 4294901760
    %4171 = vmatpush1.msra.mxu0 %v4170
    %v4172 = vand.u32 %v4130, 4294901760
    %4173 = vmatprep.subr.mxu0 %v4172
    %v4174 = vand.u32 %v4129, 4294901760
    %4175 = vmatpush1.msra.mxu0 %v4174
    %v4176 = vand.u32 %v4132, 4294901760
    %4177 = vmatprep.subr.mxu0 %v4176
    %v4178 = vand.u32 %v4131, 4294901760
    %4179 = vmatpush1.msra.mxu0 %v4178
    %v4180 = vand.u32 %v4134, 4294901760
    %4181 = vmatprep.subr.mxu0 %v4180
    %v4182 = vand.u32 %v4133, 4294901760
    %4183 = vmatpush1.msra.mxu0 %v4182
    %v4184 = vand.u32 %v4136, 4294901760
    %4185 = vmatprep.subr.mxu0 %v4184
    %v4186 = vand.u32 %v4135, 4294901760
    %4187 = vmatpush1.msra.mxu0 %v4186
    %v4188 = vand.u32 %v4138, 4294901760
    %4189 = vmatprep.subr.mxu0 %v4188
    %v4190 = vand.u32 %v4137, 4294901760
    %4191 = vmatpush1.msra.mxu0 %v4190
    %v4192 = vand.u32 %v4140, 4294901760
    %4193 = vmatprep.subr.mxu0 %v4192
    %v4194 = vand.u32 %v4139, 4294901760
    %4195 = vmatpush1.msra.mxu0 %v4194
    %v4196 = vand.u32 %v4142, 4294901760
    %4197 = vmatprep.subr.mxu0 %v4196
    %v4198 = vand.u32 %v4141, 4294901760
    %4199 = vmatpush1.msra.mxu0 %v4198
    %v4200 = vand.u32 %v4144, 4294901760
    %4201 = vmatprep.subr.mxu0 %v4200
    %v4202 = vand.u32 %v4143, 4294901760
    %4203 = vmatpush1.msra.mxu0 %v4202
    %v4204 = vand.u32 %v4158, 4294901760
    %4205 = vmatprep.subr.mxu0 %v4204
    %v4206 = vand.u32 %v4155, 4294901760
    %4207 = vmatpush1.msra.mxu0 %v4206
    %4208 = vmatprep.subr.mxu0 0.0
    %4209 = vmatpush1.msra.mxu0 0.0
    %4210 = vmatprep.subr.mxu0 0.0
    %4211 = vmatpush1.msra.mxu0 0.0
    %4212 = vmatprep.subr.mxu0 0.0
    %4213 = vmatpush1.msra.mxu0 0.0
    %4214 = vmatprep.subr.mxu0 0.0
    %4215 = vmatpush1.msra.mxu0 0.0
    %4216 = vmatprep.subr.mxu0 0.0
    %4217 = vmatpush1.msra.mxu0 0.0
    %4218 = vmatprep.subr.mxu0 0.0
    %4219 = vmatpush1.msra.mxu0 0.0
    %4220 = vmatprep.subr.mxu0 0.0
    %4221 = vmatpush1.msra.mxu0 0.0
    %4222 = vmatprep.subr.mxu0 0.0
    %4223 = vmatpush1.msra.mxu0 0.0
    %4224 = vmatprep.subr.mxu0 0.0
    %4225 = vmatpush1.msra.mxu0 0.0
    %4226 = vmatprep.subr.mxu0 0.0
    %4227 = vmatpush1.msra.mxu0 0.0
    %4228 = vmatprep.subr.mxu0 0.0
    %4229 = vmatpush1.msra.mxu0 0.0
    %4230 = vmatprep.subr.mxu0 0.0
    %4231 = vmatpush1.msra.mxu0 0.0
    %4232 = vmatprep.subr.mxu0 0.0
    %4233 = vmatpush1.msra.mxu0 0.0
    %4234 = vmatprep.subr.mxu0 0.0
    %4235 = vmatpush1.msra.mxu0 0.0
    %4236 = vmatprep.subr.mxu0 0.0
    %4237 = vmatpush1.msra.mxu0 0.0
    %4238 = vmatprep.subr.mxu0 0.0
    %4239 = vmatpush1.msra.mxu0 0.0
    %4240 = vmatprep.subr.mxu0 0.0
    %4241 = vmatpush1.msra.mxu0 0.0
    %4242 = vmatprep.subr.mxu0 0.0
    %4243 = vmatpush1.msra.mxu0 0.0
    %4244 = vmatprep.subr.mxu0 0.0
    %4245 = vmatpush1.msra.mxu0 0.0
    %4246 = vmatprep.subr.mxu0 0.0
    %4247 = vmatpush1.msra.mxu0 0.0
    %4248 = vmatprep.mubr.f32.mxu0 0.0
    %v4249 = vand.u32 %v4148, 4294901760
    %v4250 = vsub.f32 %v4148, %v4249
    %v4251 = vand.u32 %v4250, 4294901760
    %v4252 = vsub.f32 %v4250, %v4251
    %v4253 = vand.u32 %v4252, 4294901760
    %4254 = vmatmul.mubr.f32.gmra.mrb[0].mxu0 %v4253
    %v4255 = vpop.f32.mrb[0].mxu0
    %v4256 = vadd.f32 0.0, %v4255
    %v4257 = vpop.f32.mrb[0].mxu0
    %v4258 = vadd.f32 0.0, %v4257
    %4259 = vmatprep.mubr.f32.mxu0 0.0
    %v4260 = vand.u32 %v4151, 4294901760
    %v4261 = vsub.f32 %v4151, %v4260
    %v4262 = vand.u32 %v4261, 4294901760
    %v4263 = vsub.f32 %v4261, %v4262
    %v4264 = vand.u32 %v4263, 4294901760
    %4265 = vmatmul.mubr.f32.gmra.mrb[0].mxu0 %v4264
    %v4266 = vpop.f32.mrb[0].mxu0
    %v4267 = vadd.f32 0.0, %v4266
    %v4268 = vpop.f32.mrb[0].mxu0
    %v4269 = vadd.f32 0.0, %v4268
    %4270 = vdwg.mxu0
    %v4271 = vand.u32 %v4124, 4294901760
    %v4272 = vsub.f32 %v4124, %v4271
    %v4273 = vand.u32 %v4272, 4294901760
    %v4274 = vsub.f32 %v4272, %v4273
    %v4275 = vand.u32 %v4274, 4294901760
    %4276 = vmatprep.subr.mxu0 %v4275
    %v4277 = vand.u32 %v4123, 4294901760
    %v4278 = vsub.f32 %v4123, %v4277
    %v4279 = vand.u32 %v4278, 4294901760
    %v4280 = vsub.f32 %v4278, %v4279
    %v4281 = vand.u32 %v4280, 4294901760
    %4282 = vmatpush1.msra.mxu0 %v4281
    %v4283 = vand.u32 %v4126, 4294901760
    %v4284 = vsub.f32 %v4126, %v4283
    %v4285 = vand.u32 %v4284, 4294901760
    %v4286 = vsub.f32 %v4284, %v4285
    %v4287 = vand.u32 %v4286, 4294901760
    %4288 = vmatprep.subr.mxu0 %v4287
    %v4289 = vand.u32 %v4125, 4294901760
    %v4290 = vsub.f32 %v4125, %v4289
    %v4291 = vand.u32 %v4290, 4294901760
    %v4292 = vsub.f32 %v4290, %v4291
    %v4293 = vand.u32 %v4292, 4294901760
    %4294 = vmatpush1.msra.mxu0 %v4293
    %v4295 = vand.u32 %v4128, 4294901760
    %v4296 = vsub.f32 %v4128, %v4295
    %v4297 = vand.u32 %v4296, 4294901760
    %v4298 = vsub.f32 %v4296, %v4297
    %v4299 = vand.u32 %v4298, 4294901760
    %4300 = vmatprep.subr.mxu0 %v4299
    %v4301 = vand.u32 %v4127, 4294901760
    %v4302 = vsub.f32 %v4127, %v4301
    %v4303 = vand.u32 %v4302, 4294901760
    %v4304 = vsub.f32 %v4302, %v4303
    %v4305 = vand.u32 %v4304, 4294901760
    %4306 = vmatpush1.msra.mxu0 %v4305
    %v4307 = vand.u32 %v4130, 4294901760
    %v4308 = vsub.f32 %v4130, %v4307
    %v4309 = vand.u32 %v4308, 4294901760
    %v4310 = vsub.f32 %v4308, %v4309
    %v4311 = vand.u32 %v4310, 4294901760
    %4312 = vmatprep.subr.mxu0 %v4311
    %v4313 = vand.u32 %v4129, 4294901760
    %v4314 = vsub.f32 %v4129, %v4313
    %v4315 = vand.u32 %v4314, 4294901760
    %v4316 = vsub.f32 %v4314, %v4315
    %v4317 = vand.u32 %v4316, 4294901760
    %4318 = vmatpush1.msra.mxu0 %v4317
    %v4319 = vand.u32 %v4132, 4294901760
    %v4320 = vsub.f32 %v4132, %v4319
    %v4321 = vand.u32 %v4320, 4294901760
    %v4322 = vsub.f32 %v4320, %v4321
    %v4323 = vand.u32 %v4322, 4294901760
    %4324 = vmatprep.subr.mxu0 %v4323
    %v4325 = vand.u32 %v4131, 4294901760
    %v4326 = vsub.f32 %v4131, %v4325
    %v4327 = vand.u32 %v4326, 4294901760
    %v4328 = vsub.f32 %v4326, %v4327
    %v4329 = vand.u32 %v4328, 4294901760
    %4330 = vmatpush1.msra.mxu0 %v4329
    %v4331 = vand.u32 %v4134, 4294901760
    %v4332 = vsub.f32 %v4134, %v4331
    %v4333 = vand.u32 %v4332, 4294901760
    %v4334 = vsub.f32 %v4332, %v4333
    %v4335 = vand.u32 %v4334, 4294901760
    %4336 = vmatprep.subr.mxu0 %v4335
    %v4337 = vand.u32 %v4133, 4294901760
    %v4338 = vsub.f32 %v4133, %v4337
    %v4339 = vand.u32 %v4338, 4294901760
    %v4340 = vsub.f32 %v4338, %v4339
    %v4341 = vand.u32 %v4340, 4294901760
    %4342 = vmatpush1.msra.mxu0 %v4341
    %v4343 = vand.u32 %v4136, 4294901760
    %v4344 = vsub.f32 %v4136, %v4343
    %v4345 = vand.u32 %v4344, 4294901760
    %v4346 = vsub.f32 %v4344, %v4345
    %v4347 = vand.u32 %v4346, 4294901760
    %4348 = vmatprep.subr.mxu0 %v4347
    %v4349 = vand.u32 %v4135, 4294901760
    %v4350 = vsub.f32 %v4135, %v4349
    %v4351 = vand.u32 %v4350, 4294901760
    %v4352 = vsub.f32 %v4350, %v4351
    %v4353 = vand.u32 %v4352, 4294901760
    %4354 = vmatpush1.msra.mxu0 %v4353
    %v4355 = vand.u32 %v4138, 4294901760
    %v4356 = vsub.f32 %v4138, %v4355
    %v4357 = vand.u32 %v4356, 4294901760
    %v4358 = vsub.f32 %v4356, %v4357
    %v4359 = vand.u32 %v4358, 4294901760
    %4360 = vmatprep.subr.mxu0 %v4359
    %v4361 = vand.u32 %v4137, 4294901760
    %v4362 = vsub.f32 %v4137, %v4361
    %v4363 = vand.u32 %v4362, 4294901760
    %v4364 = vsub.f32 %v4362, %v4363
    %v4365 = vand.u32 %v4364, 4294901760
    %4366 = vmatpush1.msra.mxu0 %v4365
    %v4367 = vand.u32 %v4140, 4294901760
    %v4368 = vsub.f32 %v4140, %v4367
    %v4369 = vand.u32 %v4368, 4294901760
    %v4370 = vsub.f32 %v4368, %v4369
    %v4371 = vand.u32 %v4370, 4294901760
    %4372 = vmatprep.subr.mxu0 %v4371
    %v4373 = vand.u32 %v4139, 4294901760
    %v4374 = vsub.f32 %v4139, %v4373
    %v4375 = vand.u32 %v4374, 4294901760
    %v4376 = vsub.f32 %v4374, %v4375
    %v4377 = vand.u32 %v4376, 4294901760
    %4378 = vmatpush1.msra.mxu0 %v4377
    %v4379 = vand.u32 %v4142, 4294901760
    %v4380 = vsub.f32 %v4142, %v4379
    %v4381 = vand.u32 %v4380, 4294901760
    %v4382 = vsub.f32 %v4380, %v4381
    %v4383 = vand.u32 %v4382, 4294901760
    %4384 = vmatprep.subr.mxu0 %v4383
    %v4385 = vand.u32 %v4141, 4294901760
    %v4386 = vsub.f32 %v4141, %v4385
    %v4387 = vand.u32 %v4386, 4294901760
    %v4388 = vsub.f32 %v4386, %v4387
    %v4389 = vand.u32 %v4388, 4294901760
    %4390 = vmatpush1.msra.mxu0 %v4389
    %v4391 = vand.u32 %v4144, 4294901760
    %v4392 = vsub.f32 %v4144, %v4391
    %v4393 = vand.u32 %v4392, 4294901760
    %v4394 = vsub.f32 %v4392, %v4393
    %v4395 = vand.u32 %v4394, 4294901760
    %4396 = vmatprep.subr.mxu0 %v4395
    %v4397 = vand.u32 %v4143, 4294901760
    %v4398 = vsub.f32 %v4143, %v4397
    %v4399 = vand.u32 %v4398, 4294901760
    %v4400 = vsub.f32 %v4398, %v4399
    %v4401 = vand.u32 %v4400, 4294901760
    %4402 = vmatpush1.msra.mxu0 %v4401
    %v4403 = vand.u32 %v4158, 4294901760
    %v4404 = vsub.f32 %v4158, %v4403
    %v4405 = vand.u32 %v4404, 4294901760
    %v4406 = vsub.f32 %v4404, %v4405
    %v4407 = vand.u32 %v4406, 4294901760
    %4408 = vmatprep.subr.mxu0 %v4407
    %v4409 = vand.u32 %v4155, 4294901760
    %v4410 = vsub.f32 %v4155, %v4409
    %v4411 = vand.u32 %v4410, 4294901760
    %v4412 = vsub.f32 %v4410, %v4411
    %v4413 = vand.u32 %v4412, 4294901760
    %4414 = vmatpush1.msra.mxu0 %v4413
    %4415 = vmatprep.subr.mxu0 0.0
    %4416 = vmatpush1.msra.mxu0 0.0
    %4417 = vmatprep.subr.mxu0 0.0
    %4418 = vmatpush1.msra.mxu0 0.0
    %4419 = vmatprep.subr.mxu0 0.0
    %4420 = vmatpush1.msra.mxu0 0.0
    %4421 = vmatprep.subr.mxu0 0.0
    %4422 = vmatpush1.msra.mxu0 0.0
    %4423 = vmatprep.subr.mxu0 0.0
    %4424 = vmatpush1.msra.mxu0 0.0
    %4425 = vmatprep.subr.mxu0 0.0
    %4426 = vmatpush1.msra.mxu0 0.0
    %4427 = vmatprep.subr.mxu0 0.0
    %4428 = vmatpush1.msra.mxu0 0.0
    %4429 = vmatprep.subr.mxu0 0.0
    %4430 = vmatpush1.msra.mxu0 0.0
    %4431 = vmatprep.subr.mxu0 0.0
    %4432 = vmatpush1.msra.mxu0 0.0
    %4433 = vmatprep.subr.mxu0 0.0
    %4434 = vmatpush1.msra.mxu0 0.0
    %4435 = vmatprep.subr.mxu0 0.0
    %4436 = vmatpush1.msra.mxu0 0.0
    %4437 = vmatprep.subr.mxu0 0.0
    %4438 = vmatpush1.msra.mxu0 0.0
    %4439 = vmatprep.subr.mxu0 0.0
    %4440 = vmatpush1.msra.mxu0 0.0
    %4441 = vmatprep.subr.mxu0 0.0
    %4442 = vmatpush1.msra.mxu0 0.0
    %4443 = vmatprep.subr.mxu0 0.0
    %4444 = vmatpush1.msra.mxu0 0.0
    %4445 = vmatprep.subr.mxu0 0.0
    %4446 = vmatpush1.msra.mxu0 0.0
    %4447 = vmatprep.subr.mxu0 0.0
    %4448 = vmatpush1.msra.mxu0 0.0
    %4449 = vmatprep.subr.mxu0 0.0
    %4450 = vmatpush1.msra.mxu0 0.0
    %4451 = vmatprep.subr.mxu0 0.0
    %4452 = vmatpush1.msra.mxu0 0.0
    %4453 = vmatprep.subr.mxu0 0.0
    %4454 = vmatpush1.msra.mxu0 0.0
    %4455 = vmatprep.mubr.f32.mxu0 0.0
    %v4456 = vand.u32 %v4148, 4294901760
    %4457 = vmatmul.mubr.f32.gmra.mrb[0].mxu0 %v4456
    %v4458 = vpop.f32.mrb[0].mxu0
    %v4459 = vadd.f32 %v4256, %v4458
    %v4460 = vpop.f32.mrb[0].mxu0
    %v4461 = vadd.f32 %v4258, %v4460
    %4462 = vmatprep.mubr.f32.mxu0 0.0
    %v4463 = vand.u32 %v4151, 4294901760
    %4464 = vmatmul.mubr.f32.gmra.mrb[0].mxu0 %v4463
    %v4465 = vpop.f32.mrb[0].mxu0
    %v4466 = vadd.f32 %v4267, %v4465
    %v4467 = vpop.f32.mrb[0].mxu0
    %v4468 = vadd.f32 %v4269, %v4467
    %4469 = vdwg.mxu0
    %v4470 = vand.u32 %v4124, 4294901760
    %v4471 = vsub.f32 %v4124, %v4470
    %4472 = vmatprep.subr.mxu0 %v4471
    %v4473 = vand.u32 %v4123, 4294901760
    %v4474 = vsub.f32 %v4123, %v4473
    %4475 = vmatpush1.msra.mxu0 %v4474
    %v4476 = vand.u32 %v4126, 4294901760
    %v4477 = vsub.f32 %v4126, %v4476
    %4478 = vmatprep.subr.mxu0 %v4477
    %v4479 = vand.u32 %v4125, 4294901760
    %v4480 = vsub.f32 %v4125, %v4479
    %4481 = vmatpush1.msra.mxu0 %v4480
    %v4482 = vand.u32 %v4128, 4294901760
    %v4483 = vsub.f32 %v4128, %v4482
    %4484 = vmatprep.subr.mxu0 %v4483
    %v4485 = vand.u32 %v4127, 4294901760
    %v4486 = vsub.f32 %v4127, %v4485
    %4487 = vmatpush1.msra.mxu0 %v4486
    %v4488 = vand.u32 %v4130, 4294901760
    %v4489 = vsub.f32 %v4130, %v4488
    %4490 = vmatprep.subr.mxu0 %v4489
    %v4491 = vand.u32 %v4129, 4294901760
    %v4492 = vsub.f32 %v4129, %v4491
    %4493 = vmatpush1.msra.mxu0 %v4492
    %v4494 = vand.u32 %v4132, 4294901760
    %v4495 = vsub.f32 %v4132, %v4494
    %4496 = vmatprep.subr.mxu0 %v4495
    %v4497 = vand.u32 %v4131, 4294901760
    %v4498 = vsub.f32 %v4131, %v4497
    %4499 = vmatpush1.msra.mxu0 %v4498
    %v4500 = vand.u32 %v4134, 4294901760
    %v4501 = vsub.f32 %v4134, %v4500
    %4502 = vmatprep.subr.mxu0 %v4501
    %v4503 = vand.u32 %v4133, 4294901760
    %v4504 = vsub.f32 %v4133, %v4503
    %4505 = vmatpush1.msra.mxu0 %v4504
    %v4506 = vand.u32 %v4136, 4294901760
    %v4507 = vsub.f32 %v4136, %v4506
    %4508 = vmatprep.subr.mxu0 %v4507
    %v4509 = vand.u32 %v4135, 4294901760
    %v4510 = vsub.f32 %v4135, %v4509
    %4511 = vmatpush1.msra.mxu0 %v4510
    %v4512 = vand.u32 %v4138, 4294901760
    %v4513 = vsub.f32 %v4138, %v4512
    %4514 = vmatprep.subr.mxu0 %v4513
    %v4515 = vand.u32 %v4137, 4294901760
    %v4516 = vsub.f32 %v4137, %v4515
    %4517 = vmatpush1.msra.mxu0 %v4516
    %v4518 = vand.u32 %v4140, 4294901760
    %v4519 = vsub.f32 %v4140, %v4518
    %4520 = vmatprep.subr.mxu0 %v4519
    %v4521 = vand.u32 %v4139, 4294901760
    %v4522 = vsub.f32 %v4139, %v4521
    %4523 = vmatpush1.msra.mxu0 %v4522
    %v4524 = vand.u32 %v4142, 4294901760
    %v4525 = vsub.f32 %v4142, %v4524
    %4526 = vmatprep.subr.mxu0 %v4525
    %v4527 = vand.u32 %v4141, 4294901760
    %v4528 = vsub.f32 %v4141, %v4527
    %4529 = vmatpush1.msra.mxu0 %v4528
    %v4530 = vand.u32 %v4144, 4294901760
    %v4531 = vsub.f32 %v4144, %v4530
    %4532 = vmatprep.subr.mxu0 %v4531
    %v4533 = vand.u32 %v4143, 4294901760
    %v4534 = vsub.f32 %v4143, %v4533
    %4535 = vmatpush1.msra.mxu0 %v4534
    %v4536 = vand.u32 %v4158, 4294901760
    %v4537 = vsub.f32 %v4158, %v4536
    %4538 = vmatprep.subr.mxu0 %v4537
    %v4539 = vand.u32 %v4155, 4294901760
    %v4540 = vsub.f32 %v4155, %v4539
    %4541 = vmatpush1.msra.mxu0 %v4540
    %4542 = vmatprep.subr.mxu0 0.0
    %4543 = vmatpush1.msra.mxu0 0.0
    %4544 = vmatprep.subr.mxu0 0.0
    %4545 = vmatpush1.msra.mxu0 0.0
    %4546 = vmatprep.subr.mxu0 0.0
    %4547 = vmatpush1.msra.mxu0 0.0
    %4548 = vmatprep.subr.mxu0 0.0
    %4549 = vmatpush1.msra.mxu0 0.0
    %4550 = vmatprep.subr.mxu0 0.0
    %4551 = vmatpush1.msra.mxu0 0.0
    %4552 = vmatprep.subr.mxu0 0.0
    %4553 = vmatpush1.msra.mxu0 0.0
    %4554 = vmatprep.subr.mxu0 0.0
    %4555 = vmatpush1.msra.mxu0 0.0
    %4556 = vmatprep.subr.mxu0 0.0
    %4557 = vmatpush1.msra.mxu0 0.0
    %4558 = vmatprep.subr.mxu0 0.0
    %4559 = vmatpush1.msra.mxu0 0.0
    %4560 = vmatprep.subr.mxu0 0.0
    %4561 = vmatpush1.msra.mxu0 0.0
    %4562 = vmatprep.subr.mxu0 0.0
    %4563 = vmatpush1.msra.mxu0 0.0
    %4564 = vmatprep.subr.mxu0 0.0
    %4565 = vmatpush1.msra.mxu0 0.0
    %4566 = vmatprep.subr.mxu0 0.0
    %4567 = vmatpush1.msra.mxu0 0.0
    %4568 = vmatprep.subr.mxu0 0.0
    %4569 = vmatpush1.msra.mxu0 0.0
    %4570 = vmatprep.subr.mxu0 0.0
    %4571 = vmatpush1.msra.mxu0 0.0
    %4572 = vmatprep.subr.mxu0 0.0
    %4573 = vmatpush1.msra.mxu0 0.0
    %4574 = vmatprep.subr.mxu0 0.0
    %4575 = vmatpush1.msra.mxu0 0.0
    %4576 = vmatprep.subr.mxu0 0.0
    %4577 = vmatpush1.msra.mxu0 0.0
    %4578 = vmatprep.subr.mxu0 0.0
    %4579 = vmatpush1.msra.mxu0 0.0
    %4580 = vmatprep.subr.mxu0 0.0
    %4581 = vmatpush1.msra.mxu0 0.0
    %4582 = vmatprep.mubr.f32.mxu0 0.0
    %v4583 = vand.u32 %v4148, 4294901760
    %v4584 = vsub.f32 %v4148, %v4583
    %4585 = vmatmul.mubr.f32.gmra.mrb[0].mxu0 %v4584
    %v4586 = vpop.f32.mrb[0].mxu0
    %v4587 = vadd.f32 %v4459, %v4586
    %v4588 = vpop.f32.mrb[0].mxu0
    %v4589 = vadd.f32 %v4461, %v4588
    %4590 = vmatprep.mubr.f32.mxu0 0.0
    %v4591 = vand.u32 %v4151, 4294901760
    %v4592 = vsub.f32 %v4151, %v4591
    %4593 = vmatmul.mubr.f32.gmra.mrb[0].mxu0 %v4592
    %v4594 = vpop.f32.mrb[0].mxu0
    %v4595 = vadd.f32 %v4466, %v4594
    %v4596 = vpop.f32.mrb[0].mxu0
    %v4597 = vadd.f32 %v4468, %v4596
    %4598 = vdwg.mxu0
    %v4599 = vand.u32 %v4124, 4294901760
    %4600 = vmatprep.subr.mxu0 %v4599
    %v4601 = vand.u32 %v4123, 4294901760
    %4602 = vmatpush1.msra.mxu0 %v4601
    %v4603 = vand.u32 %v4126, 4294901760
    %4604 = vmatprep.subr.mxu0 %v4603
    %v4605 = vand.u32 %v4125, 4294901760
    %4606 = vmatpush1.msra.mxu0 %v4605
    %v4607 = vand.u32 %v4128, 4294901760
    %4608 = vmatprep.subr.mxu0 %v4607
    %v4609 = vand.u32 %v4127, 4294901760
    %4610 = vmatpush1.msra.mxu0 %v4609
    %v4611 = vand.u32 %v4130, 4294901760
    %4612 = vmatprep.subr.mxu0 %v4611
    %v4613 = vand.u32 %v4129, 4294901760
    %4614 = vmatpush1.msra.mxu0 %v4613
    %v4615 = vand.u32 %v4132, 4294901760
    %4616 = vmatprep.subr.mxu0 %v4615
    %v4617 = vand.u32 %v4131, 4294901760
    %4618 = vmatpush1.msra.mxu0 %v4617
    %v4619 = vand.u32 %v4134, 4294901760
    %4620 = vmatprep.subr.mxu0 %v4619
    %v4621 = vand.u32 %v4133, 4294901760
    %4622 = vmatpush1.msra.mxu0 %v4621
    %v4623 = vand.u32 %v4136, 4294901760
    %4624 = vmatprep.subr.mxu0 %v4623
    %v4625 = vand.u32 %v4135, 4294901760
    %4626 = vmatpush1.msra.mxu0 %v4625
    %v4627 = vand.u32 %v4138, 4294901760
    %4628 = vmatprep.subr.mxu0 %v4627
    %v4629 = vand.u32 %v4137, 4294901760
    %4630 = vmatpush1.msra.mxu0 %v4629
    %v4631 = vand.u32 %v4140, 4294901760
    %4632 = vmatprep.subr.mxu0 %v4631
    %v4633 = vand.u32 %v4139, 4294901760
    %4634 = vmatpush1.msra.mxu0 %v4633
    %v4635 = vand.u32 %v4142, 4294901760
    %4636 = vmatprep.subr.mxu0 %v4635
    %v4637 = vand.u32 %v4141, 4294901760
    %4638 = vmatpush1.msra.mxu0 %v4637
    %v4639 = vand.u32 %v4144, 4294901760
    %4640 = vmatprep.subr.mxu0 %v4639
    %v4641 = vand.u32 %v4143, 4294901760
    %4642 = vmatpush1.msra.mxu0 %v4641
    %v4643 = vand.u32 %v4158, 4294901760
    %4644 = vmatprep.subr.mxu0 %v4643
    %v4645 = vand.u32 %v4155, 4294901760
    %4646 = vmatpush1.msra.mxu0 %v4645
    %4647 = vmatprep.subr.mxu0 0.0
    %4648 = vmatpush1.msra.mxu0 0.0
    %4649 = vmatprep.subr.mxu0 0.0
    %4650 = vmatpush1.msra.mxu0 0.0
    %4651 = vmatprep.subr.mxu0 0.0
    %4652 = vmatpush1.msra.mxu0 0.0
    %4653 = vmatprep.subr.mxu0 0.0
    %4654 = vmatpush1.msra.mxu0 0.0
    %4655 = vmatprep.subr.mxu0 0.0
    %4656 = vmatpush1.msra.mxu0 0.0
    %4657 = vmatprep.subr.mxu0 0.0
    %4658 = vmatpush1.msra.mxu0 0.0
    %4659 = vmatprep.subr.mxu0 0.0
    %4660 = vmatpush1.msra.mxu0 0.0
    %4661 = vmatprep.subr.mxu0 0.0
    %4662 = vmatpush1.msra.mxu0 0.0
    %4663 = vmatprep.subr.mxu0 0.0
    %4664 = vmatpush1.msra.mxu0 0.0
    %4665 = vmatprep.subr.mxu0 0.0
    %4666 = vmatpush1.msra.mxu0 0.0
    %4667 = vmatprep.subr.mxu0 0.0
    %4668 = vmatpush1.msra.mxu0 0.0
    %4669 = vmatprep.subr.mxu0 0.0
    %4670 = vmatpush1.msra.mxu0 0.0
    %4671 = vmatprep.subr.mxu0 0.0
    %4672 = vmatpush1.msra.mxu0 0.0
    %4673 = vmatprep.subr.mxu0 0.0
    %4674 = vmatpush1.msra.mxu0 0.0
    %4675 = vmatprep.subr.mxu0 0.0
    %4676 = vmatpush1.msra.mxu0 0.0
    %4677 = vmatprep.subr.mxu0 0.0
    %4678 = vmatpush1.msra.mxu0 0.0
    %4679 = vmatprep.subr.mxu0 0.0
    %4680 = vmatpush1.msra.mxu0 0.0
    %4681 = vmatprep.subr.mxu0 0.0
    %4682 = vmatpush1.msra.mxu0 0.0
    %4683 = vmatprep.subr.mxu0 0.0
    %4684 = vmatpush1.msra.mxu0 0.0
    %4685 = vmatprep.subr.mxu0 0.0
    %4686 = vmatpush1.msra.mxu0 0.0
    %4687 = vmatprep.mubr.f32.mxu0 0.0
    %v4688 = vand.u32 %v4148, 4294901760
    %v4689 = vsub.f32 %v4148, %v4688
    %v4690 = vand.u32 %v4689, 4294901760
    %4691 = vmatmul.mubr.f32.gmra.mrb[0].mxu0 %v4690
    %v4692 = vpop.f32.mrb[0].mxu0
    %v4693 = vadd.f32 %v4587, %v4692
    %v4694 = vpop.f32.mrb[0].mxu0
    %v4695 = vadd.f32 %v4589, %v4694
    %4696 = vmatprep.mubr.f32.mxu0 0.0
    %v4697 = vand.u32 %v4151, 4294901760
    %v4698 = vsub.f32 %v4151, %v4697
    %v4699 = vand.u32 %v4698, 4294901760
    %4700 = vmatmul.mubr.f32.gmra.mrb[0].mxu0 %v4699
    %v4701 = vpop.f32.mrb[0].mxu0
    %v4702 = vadd.f32 %v4595, %v4701
    %v4703 = vpop.f32.mrb[0].mxu0
    %v4704 = vadd.f32 %v4597, %v4703
    %4705 = vdwg.mxu0
    %v4706 = vand.u32 %v4124, 4294901760
    %v4707 = vsub.f32 %v4124, %v4706
    %v4708 = vand.u32 %v4707, 4294901760
    %4709 = vmatprep.subr.mxu0 %v4708
    %v4710 = vand.u32 %v4123, 4294901760
    %v4711 = vsub.f32 %v4123, %v4710
    %v4712 = vand.u32 %v4711, 4294901760
    %4713 = vmatpush1.msra.mxu0 %v4712
    %v4714 = vand.u32 %v4126, 4294901760
    %v4715 = vsub.f32 %v4126, %v4714
    %v4716 = vand.u32 %v4715, 4294901760
    %4717 = vmatprep.subr.mxu0 %v4716
    %v4718 = vand.u32 %v4125, 4294901760
    %v4719 = vsub.f32 %v4125, %v4718
    %v4720 = vand.u32 %v4719, 4294901760
    %4721 = vmatpush1.msra.mxu0 %v4720
    %v4722 = vand.u32 %v4128, 4294901760
    %v4723 = vsub.f32 %v4128, %v4722
    %v4724 = vand.u32 %v4723, 4294901760
    %4725 = vmatprep.subr.mxu0 %v4724
    %v4726 = vand.u32 %v4127, 4294901760
    %v4727 = vsub.f32 %v4127, %v4726
    %v4728 = vand.u32 %v4727, 4294901760
    %4729 = vmatpush1.msra.mxu0 %v4728
    %v4730 = vand.u32 %v4130, 4294901760
    %v4731 = vsub.f32 %v4130, %v4730
    %v4732 = vand.u32 %v4731, 4294901760
    %4733 = vmatprep.subr.mxu0 %v4732
    %v4734 = vand.u32 %v4129, 4294901760
    %v4735 = vsub.f32 %v4129, %v4734
    %v4736 = vand.u32 %v4735, 4294901760
    %4737 = vmatpush1.msra.mxu0 %v4736
    %v4738 = vand.u32 %v4132, 4294901760
    %v4739 = vsub.f32 %v4132, %v4738
    %v4740 = vand.u32 %v4739, 4294901760
    %4741 = vmatprep.subr.mxu0 %v4740
    %v4742 = vand.u32 %v4131, 4294901760
    %v4743 = vsub.f32 %v4131, %v4742
    %v4744 = vand.u32 %v4743, 4294901760
    %4745 = vmatpush1.msra.mxu0 %v4744
    %v4746 = vand.u32 %v4134, 4294901760
    %v4747 = vsub.f32 %v4134, %v4746
    %v4748 = vand.u32 %v4747, 4294901760
    %4749 = vmatprep.subr.mxu0 %v4748
    %v4750 = vand.u32 %v4133, 4294901760
    %v4751 = vsub.f32 %v4133, %v4750
    %v4752 = vand.u32 %v4751, 4294901760
    %4753 = vmatpush1.msra.mxu0 %v4752
    %v4754 = vand.u32 %v4136, 4294901760
    %v4755 = vsub.f32 %v4136, %v4754
    %v4756 = vand.u32 %v4755, 4294901760
    %4757 = vmatprep.subr.mxu0 %v4756
    %v4758 = vand.u32 %v4135, 4294901760
    %v4759 = vsub.f32 %v4135, %v4758
    %v4760 = vand.u32 %v4759, 4294901760
    %4761 = vmatpush1.msra.mxu0 %v4760
    %v4762 = vand.u32 %v4138, 4294901760
    %v4763 = vsub.f32 %v4138, %v4762
    %v4764 = vand.u32 %v4763, 4294901760
    %4765 = vmatprep.subr.mxu0 %v4764
    %v4766 = vand.u32 %v4137, 4294901760
    %v4767 = vsub.f32 %v4137, %v4766
    %v4768 = vand.u32 %v4767, 4294901760
    %4769 = vmatpush1.msra.mxu0 %v4768
    %v4770 = vand.u32 %v4140, 4294901760
    %v4771 = vsub.f32 %v4140, %v4770
    %v4772 = vand.u32 %v4771, 4294901760
    %4773 = vmatprep.subr.mxu0 %v4772
    %v4774 = vand.u32 %v4139, 4294901760
    %v4775 = vsub.f32 %v4139, %v4774
    %v4776 = vand.u32 %v4775, 4294901760
    %4777 = vmatpush1.msra.mxu0 %v4776
    %v4778 = vand.u32 %v4142, 4294901760
    %v4779 = vsub.f32 %v4142, %v4778
    %v4780 = vand.u32 %v4779, 4294901760
    %4781 = vmatprep.subr.mxu0 %v4780
    %v4782 = vand.u32 %v4141, 4294901760
    %v4783 = vsub.f32 %v4141, %v4782
    %v4784 = vand.u32 %v4783, 4294901760
    %4785 = vmatpush1.msra.mxu0 %v4784
    %v4786 = vand.u32 %v4144, 4294901760
    %v4787 = vsub.f32 %v4144, %v4786
    %v4788 = vand.u32 %v4787, 4294901760
    %4789 = vmatprep.subr.mxu0 %v4788
    %v4790 = vand.u32 %v4143, 4294901760
    %v4791 = vsub.f32 %v4143, %v4790
    %v4792 = vand.u32 %v4791, 4294901760
    %4793 = vmatpush1.msra.mxu0 %v4792
    %v4794 = vand.u32 %v4158, 4294901760
    %v4795 = vsub.f32 %v4158, %v4794
    %v4796 = vand.u32 %v4795, 4294901760
    %4797 = vmatprep.subr.mxu0 %v4796
    %v4798 = vand.u32 %v4155, 4294901760
    %v4799 = vsub.f32 %v4155, %v4798
    %v4800 = vand.u32 %v4799, 4294901760
    %4801 = vmatpush1.msra.mxu0 %v4800
    %4802 = vmatprep.subr.mxu0 0.0
    %4803 = vmatpush1.msra.mxu0 0.0
    %4804 = vmatprep.subr.mxu0 0.0
    %4805 = vmatpush1.msra.mxu0 0.0
    %4806 = vmatprep.subr.mxu0 0.0
    %4807 = vmatpush1.msra.mxu0 0.0
    %4808 = vmatprep.subr.mxu0 0.0
    %4809 = vmatpush1.msra.mxu0 0.0
    %4810 = vmatprep.subr.mxu0 0.0
    %4811 = vmatpush1.msra.mxu0 0.0
    %4812 = vmatprep.subr.mxu0 0.0
    %4813 = vmatpush1.msra.mxu0 0.0
    %4814 = vmatprep.subr.mxu0 0.0
    %4815 = vmatpush1.msra.mxu0 0.0
    %4816 = vmatprep.subr.mxu0 0.0
    %4817 = vmatpush1.msra.mxu0 0.0
    %4818 = vmatprep.subr.mxu0 0.0
    %4819 = vmatpush1.msra.mxu0 0.0
    %4820 = vmatprep.subr.mxu0 0.0
    %4821 = vmatpush1.msra.mxu0 0.0
    %4822 = vmatprep.subr.mxu0 0.0
    %4823 = vmatpush1.msra.mxu0 0.0
    %4824 = vmatprep.subr.mxu0 0.0
    %4825 = vmatpush1.msra.mxu0 0.0
    %4826 = vmatprep.subr.mxu0 0.0
    %4827 = vmatpush1.msra.mxu0 0.0
    %4828 = vmatprep.subr.mxu0 0.0
    %4829 = vmatpush1.msra.mxu0 0.0
    %4830 = vmatprep.subr.mxu0 0.0
    %4831 = vmatpush1.msra.mxu0 0.0
    %4832 = vmatprep.subr.mxu0 0.0
    %4833 = vmatpush1.msra.mxu0 0.0
    %4834 = vmatprep.subr.mxu0 0.0
    %4835 = vmatpush1.msra.mxu0 0.0
    %4836 = vmatprep.subr.mxu0 0.0
    %4837 = vmatpush1.msra.mxu0 0.0
    %4838 = vmatprep.subr.mxu0 0.0
    %4839 = vmatpush1.msra.mxu0 0.0
    %4840 = vmatprep.subr.mxu0 0.0
    %4841 = vmatpush1.msra.mxu0 0.0
    %4842 = vmatprep.mubr.f32.mxu0 0.0
    %v4843 = vand.u32 %v4148, 4294901760
    %4844 = vmatmul.mubr.f32.gmra.mrb[0].mxu0 %v4843
    %v4845 = vpop.f32.mrb[0].mxu0
    %v4846 = vadd.f32 %v4693, %v4845
    %v4847 = vpop.f32.mrb[0].mxu0
    %v4848 = vadd.f32 %v4695, %v4847
    %4849 = vmatprep.mubr.f32.mxu0 0.0
    %v4850 = vand.u32 %v4151, 4294901760
    %4851 = vmatmul.mubr.f32.gmra.mrb[0].mxu0 %v4850
    %v4852 = vpop.f32.mrb[0].mxu0
    %v4853 = vadd.f32 %v4702, %v4852
    %v4854 = vpop.f32.mrb[0].mxu0
    %v4855 = vadd.f32 %v4704, %v4854
    %4856 = vdwg.mxu0
    %v4857 = vand.u32 %v4124, 4294901760
    %4858 = vmatprep.subr.mxu0 %v4857
    %v4859 = vand.u32 %v4123, 4294901760
    %4860 = vmatpush1.msra.mxu0 %v4859
    %v4861 = vand.u32 %v4126, 4294901760
    %4862 = vmatprep.subr.mxu0 %v4861
    %v4863 = vand.u32 %v4125, 4294901760
    %4864 = vmatpush1.msra.mxu0 %v4863
    %v4865 = vand.u32 %v4128, 4294901760
    %4866 = vmatprep.subr.mxu0 %v4865
    %v4867 = vand.u32 %v4127, 4294901760
    %4868 = vmatpush1.msra.mxu0 %v4867
    %v4869 = vand.u32 %v4130, 4294901760
    %4870 = vmatprep.subr.mxu0 %v4869
    %v4871 = vand.u32 %v4129, 4294901760
    %4872 = vmatpush1.msra.mxu0 %v4871
    %v4873 = vand.u32 %v4132, 4294901760
    %4874 = vmatprep.subr.mxu0 %v4873
    %v4875 = vand.u32 %v4131, 4294901760
    %4876 = vmatpush1.msra.mxu0 %v4875
    %v4877 = vand.u32 %v4134, 4294901760
    %4878 = vmatprep.subr.mxu0 %v4877
    %v4879 = vand.u32 %v4133, 4294901760
    %4880 = vmatpush1.msra.mxu0 %v4879
    %v4881 = vand.u32 %v4136, 4294901760
    %4882 = vmatprep.subr.mxu0 %v4881
    %v4883 = vand.u32 %v4135, 4294901760
    %4884 = vmatpush1.msra.mxu0 %v4883
    %v4885 = vand.u32 %v4138, 4294901760
    %4886 = vmatprep.subr.mxu0 %v4885
    %v4887 = vand.u32 %v4137, 4294901760
    %4888 = vmatpush1.msra.mxu0 %v4887
    %v4889 = vand.u32 %v4140, 4294901760
    %4890 = vmatprep.subr.mxu0 %v4889
    %v4891 = vand.u32 %v4139, 4294901760
    %4892 = vmatpush1.msra.mxu0 %v4891
    %v4893 = vand.u32 %v4142, 4294901760
    %4894 = vmatprep.subr.mxu0 %v4893
    %v4895 = vand.u32 %v4141, 4294901760
    %4896 = vmatpush1.msra.mxu0 %v4895
    %v4897 = vand.u32 %v4144, 4294901760
    %4898 = vmatprep.subr.mxu0 %v4897
    %v4899 = vand.u32 %v4143, 4294901760
    %4900 = vmatpush1.msra.mxu0 %v4899
    %v4901 = vand.u32 %v4158, 4294901760
    %4902 = vmatprep.subr.mxu0 %v4901
    %v4903 = vand.u32 %v4155, 4294901760
    %4904 = vmatpush1.msra.mxu0 %v4903
    %4905 = vmatprep.subr.mxu0 0.0
    %4906 = vmatpush1.msra.mxu0 0.0
    %4907 = vmatprep.subr.mxu0 0.0
    %4908 = vmatpush1.msra.mxu0 0.0
    %4909 = vmatprep.subr.mxu0 0.0
    %4910 = vmatpush1.msra.mxu0 0.0
    %4911 = vmatprep.subr.mxu0 0.0
    %4912 = vmatpush1.msra.mxu0 0.0
    %4913 = vmatprep.subr.mxu0 0.0
    %4914 = vmatpush1.msra.mxu0 0.0
    %4915 = vmatprep.subr.mxu0 0.0
    %4916 = vmatpush1.msra.mxu0 0.0
    %4917 = vmatprep.subr.mxu0 0.0
    %4918 = vmatpush1.msra.mxu0 0.0
    %4919 = vmatprep.subr.mxu0 0.0
    %4920 = vmatpush1.msra.mxu0 0.0
    %4921 = vmatprep.subr.mxu0 0.0
    %4922 = vmatpush1.msra.mxu0 0.0
    %4923 = vmatprep.subr.mxu0 0.0
    %4924 = vmatpush1.msra.mxu0 0.0
    %4925 = vmatprep.subr.mxu0 0.0
    %4926 = vmatpush1.msra.mxu0 0.0
    %4927 = vmatprep.subr.mxu0 0.0
    %4928 = vmatpush1.msra.mxu0 0.0
    %4929 = vmatprep.subr.mxu0 0.0
    %4930 = vmatpush1.msra.mxu0 0.0
    %4931 = vmatprep.subr.mxu0 0.0
    %4932 = vmatpush1.msra.mxu0 0.0
    %4933 = vmatprep.subr.mxu0 0.0
    %4934 = vmatpush1.msra.mxu0 0.0
    %4935 = vmatprep.subr.mxu0 0.0
    %4936 = vmatpush1.msra.mxu0 0.0
    %4937 = vmatprep.subr.mxu0 0.0
    %4938 = vmatpush1.msra.mxu0 0.0
    %4939 = vmatprep.subr.mxu0 0.0
    %4940 = vmatpush1.msra.mxu0 0.0
    %4941 = vmatprep.subr.mxu0 0.0
    %4942 = vmatpush1.msra.mxu0 0.0
    %4943 = vmatprep.subr.mxu0 0.0
    %4944 = vmatpush1.msra.mxu0 0.0
    %4945 = vmatprep.mubr.f32.mxu0 0.0
    %v4946 = vand.u32 %v4148, 4294901760
    %4947 = vmatmul.mubr.f32.gmra.mrb[0].mxu0 %v4946
    %v4948 = vpop.f32.mrb[0].mxu0
    %v4949 = vadd.f32 %v4846, %v4948
    %v4950 = vpop.f32.mrb[0].mxu0
    %v4951 = vadd.f32 %v4848, %v4950
    %4952 = vmatprep.mubr.f32.mxu0 0.0
    %v4953 = vand.u32 %v4151, 4294901760
    %4954 = vmatmul.mubr.f32.gmra.mrb[0].mxu0 %v4953
    %v4955 = vpop.f32.mrb[0].mxu0
    %v4956 = vadd.f32 %v4853, %v4955
    %v4957 = vpop.f32.mrb[0].mxu0
    %v4958 = vadd.f32 %v4855, %v4957
    %4959 = vdwg.mxu0
    %v4960 = vld [vmem:[%s6] sm:$0xff]
    %v4961 = vld [vmem:[%s6 + $0x8] sm:$0xff]
    %v4962 = vld [vmem:[%s6 + $0x10] sm:$0x7f]
    %v4963 = vld [vmem:[%s6 + $0x18] sm:$0x7f]
    %v4964 = vmul.f32 %v4949, %v4960
    %v4965 = vmul.f32 %v4951, %v4961
    %v4966 = vmul.f32 %v4956, %v4962
    %v4967 = vmul.f32 %v4958, %v4963
    %v4968 = vsel %vm65, %v4966, 0.0
    %v4969 = vadd.f32 %v4964, %v4968
    %v4970 = vrot.slane %v4969, 4
    %v4971 = vadd.f32 %v4969, %v4970
    %v4972 = vrot.slane %v4971, 2
    %v4973 = vadd.f32 %v4971, %v4972
    %v4974 = vrot.slane %v4973, 1
    %v4975 = vadd.f32 %v4973, %v4974
    %vm4976 = vcmask 179200
    %v4977 = vsel %vm4976, %v4965, 0.0
    %vm4978 = vcmask 178176
    %v4979 = vsel %vm4978, %v4967, 0.0
    %v4980 = vadd.f32 %v4977, %v4979
    %v4981 = vrot.slane %v4980, 4
    %v4982 = vadd.f32 %v4980, %v4981
    %v4983 = vrot.slane %v4982, 2
    %v4984 = vadd.f32 %v4982, %v4983
    %v4985 = vrot.slane %v4984, 1
    %v4986 = vadd.f32 %v4984, %v4985
    %v4987 = vld [vmem:[%s7] sm:$0xff]
    %v4988 = vld [vmem:[%s7 + $0x8] sm:$0xff]
    %v4989 = vld [vmem:[%s7 + $0x10] sm:$0xff]
    %v4990 = vld [vmem:[%s7 + $0x18] sm:$0xff]
    %v4991 = vld [vmem:[%s7 + $0x20] sm:$0xff]
    %v4992 = vld [vmem:[%s7 + $0x28] sm:$0xff]
    %v4993 = vld [vmem:[%s7 + $0x30] sm:$0xff]
    %v4994 = vld [vmem:[%s7 + $0x38] sm:$0xff]
    %v4995 = vld [vmem:[%s7 + $0x40] sm:$0xff]
    %v4996 = vld [vmem:[%s7 + $0x48] sm:$0xff]
    %v4997 = vld [vmem:[%s7 + $0x50] sm:$0xff]
    %v4998 = vld [vmem:[%s7 + $0x58] sm:$0xff]
    %v4999 = vld [vmem:[%s7 + $0x60] sm:$0xff]
    %v5000 = vld [vmem:[%s7 + $0x68] sm:$0xff]
    %v5001 = vld [vmem:[%s7 + $0x70] sm:$0xff]
    %v5002 = vld [vmem:[%s7 + $0x78] sm:$0xff]
    %v5003 = vld [vmem:[%s7 + $0x80] sm:$0xff]
    %v5004 = vld [vmem:[%s7 + $0x88] sm:$0xff]
    %v5005 = vld [vmem:[%s7 + $0x90] sm:$0x3f]
    %v5006 = vld [vmem:[%s8] sm:$0x1]
    %v5008 = vsel %vm4976, %v4986, 0
    %v5011 = vsel %vm1470, %v5005, 0
    %5013 = vmatprep.subr.mxu0 0.0
    %v5014 = vand.u32 %v4987, 4294901760
    %5015 = vmatpush1.msra.mxu0 %v5014
    %5016 = vmatprep.subr.mxu0 0.0
    %v5017 = vand.u32 %v4988, 4294901760
    %5018 = vmatpush1.msra.mxu0 %v5017
    %5019 = vmatprep.subr.mxu0 0.0
    %v5020 = vand.u32 %v4989, 4294901760
    %5021 = vmatpush1.msra.mxu0 %v5020
    %5022 = vmatprep.subr.mxu0 0.0
    %v5023 = vand.u32 %v4990, 4294901760
    %5024 = vmatpush1.msra.mxu0 %v5023
    %5025 = vmatprep.subr.mxu0 0.0
    %v5026 = vand.u32 %v4991, 4294901760
    %5027 = vmatpush1.msra.mxu0 %v5026
    %5028 = vmatprep.subr.mxu0 0.0
    %v5029 = vand.u32 %v4992, 4294901760
    %5030 = vmatpush1.msra.mxu0 %v5029
    %5031 = vmatprep.subr.mxu0 0.0
    %v5032 = vand.u32 %v4993, 4294901760
    %5033 = vmatpush1.msra.mxu0 %v5032
    %5034 = vmatprep.subr.mxu0 0.0
    %v5035 = vand.u32 %v4994, 4294901760
    %5036 = vmatpush1.msra.mxu0 %v5035
    %5037 = vmatprep.subr.mxu0 0.0
    %v5038 = vand.u32 %v4995, 4294901760
    %5039 = vmatpush1.msra.mxu0 %v5038
    %5040 = vmatprep.subr.mxu0 0.0
    %v5041 = vand.u32 %v4996, 4294901760
    %5042 = vmatpush1.msra.mxu0 %v5041
    %5043 = vmatprep.subr.mxu0 0.0
    %v5044 = vand.u32 %v4997, 4294901760
    %5045 = vmatpush1.msra.mxu0 %v5044
    %5046 = vmatprep.subr.mxu0 0.0
    %v5047 = vand.u32 %v4998, 4294901760
    %5048 = vmatpush1.msra.mxu0 %v5047
    %5049 = vmatprep.subr.mxu0 0.0
    %v5050 = vand.u32 %v4999, 4294901760
    %5051 = vmatpush1.msra.mxu0 %v5050
    %5052 = vmatprep.subr.mxu0 0.0
    %v5053 = vand.u32 %v5000, 4294901760
    %5054 = vmatpush1.msra.mxu0 %v5053
    %5055 = vmatprep.subr.mxu0 0.0
    %v5056 = vand.u32 %v5001, 4294901760
    %5057 = vmatpush1.msra.mxu0 %v5056
    %5058 = vmatprep.subr.mxu0 0.0
    %v5059 = vand.u32 %v5002, 4294901760
    %5060 = vmatpush1.msra.mxu0 %v5059
    %5061 = vmatprep.subr.mxu0 0.0
    %v5062 = vand.u32 %v5003, 4294901760
    %5063 = vmatpush1.msra.mxu0 %v5062
    %5064 = vmatprep.subr.mxu0 0.0
    %v5065 = vand.u32 %v5004, 4294901760
    %5066 = vmatpush1.msra.mxu0 %v5065
    %5067 = vmatprep.subr.mxu0 0.0
    %v5068 = vand.u32 %v5011, 4294901760
    %5069 = vmatpush1.msra.mxu0 %v5068
    %5070 = vmatprep.subr.mxu0 0.0
    %5071 = vmatpush1.msra.mxu0 0.0
    %5072 = vmatprep.subr.mxu0 0.0
    %5073 = vmatpush1.msra.mxu0 0.0
    %5074 = vmatprep.subr.mxu0 0.0
    %5075 = vmatpush1.msra.mxu0 0.0
    %5076 = vmatprep.subr.mxu0 0.0
    %5077 = vmatpush1.msra.mxu0 0.0
    %5078 = vmatprep.subr.mxu0 0.0
    %5079 = vmatpush1.msra.mxu0 0.0
    %5080 = vmatprep.subr.mxu0 0.0
    %5081 = vmatpush1.msra.mxu0 0.0
    %5082 = vmatprep.subr.mxu0 0.0
    %5083 = vmatpush1.msra.mxu0 0.0
    %5084 = vmatprep.subr.mxu0 0.0
    %5085 = vmatpush1.msra.mxu0 0.0
    %5086 = vmatprep.subr.mxu0 0.0
    %5087 = vmatpush1.msra.mxu0 0.0
    %5088 = vmatprep.subr.mxu0 0.0
    %5089 = vmatpush1.msra.mxu0 0.0
    %5090 = vmatprep.subr.mxu0 0.0
    %5091 = vmatpush1.msra.mxu0 0.0
    %5092 = vmatprep.subr.mxu0 0.0
    %5093 = vmatpush1.msra.mxu0 0.0
    %5094 = vmatprep.subr.mxu0 0.0
    %5095 = vmatpush1.msra.mxu0 0.0
    %v5096 = vand.u32 %v5008, 4294901760
    %v5097 = vsub.f32 %v5008, %v5096
    %v5098 = vand.u32 %v5097, 4294901760
    %v5099 = vsub.f32 %v5097, %v5098
    %v5100 = vand.u32 %v5099, 4294901760
    %5101 = vmatprep.mubr.f32.mxu0 %v5100
    %v5102 = vand.u32 %v4975, 4294901760
    %v5103 = vsub.f32 %v4975, %v5102
    %v5104 = vand.u32 %v5103, 4294901760
    %v5105 = vsub.f32 %v5103, %v5104
    %v5106 = vand.u32 %v5105, 4294901760
    %5107 = vmatmul.mubr.f32.gmra.mrb[0].mxu0 %v5106
    %v5108 = vpop.f32.mrb[0].mxu0
    %v5109 = vadd.f32 %v5006, %v5108
    %v5110 = vpop.f32.mrb[0].mxu0
    %5111 = vdwg.mxu0
    %5112 = vmatprep.subr.mxu0 0.0
    %v5113 = vand.u32 %v4987, 4294901760
    %v5114 = vsub.f32 %v4987, %v5113
    %v5115 = vand.u32 %v5114, 4294901760
    %v5116 = vsub.f32 %v5114, %v5115
    %v5117 = vand.u32 %v5116, 4294901760
    %5118 = vmatpush1.msra.mxu0 %v5117
    %5119 = vmatprep.subr.mxu0 0.0
    %v5120 = vand.u32 %v4988, 4294901760
    %v5121 = vsub.f32 %v4988, %v5120
    %v5122 = vand.u32 %v5121, 4294901760
    %v5123 = vsub.f32 %v5121, %v5122
    %v5124 = vand.u32 %v5123, 4294901760
    %5125 = vmatpush1.msra.mxu0 %v5124
    %5126 = vmatprep.subr.mxu0 0.0
    %v5127 = vand.u32 %v4989, 4294901760
    %v5128 = vsub.f32 %v4989, %v5127
    %v5129 = vand.u32 %v5128, 4294901760
    %v5130 = vsub.f32 %v5128, %v5129
    %v5131 = vand.u32 %v5130, 4294901760
    %5132 = vmatpush1.msra.mxu0 %v5131
    %5133 = vmatprep.subr.mxu0 0.0
    %v5134 = vand.u32 %v4990, 4294901760
    %v5135 = vsub.f32 %v4990, %v5134
    %v5136 = vand.u32 %v5135, 4294901760
    %v5137 = vsub.f32 %v5135, %v5136
    %v5138 = vand.u32 %v5137, 4294901760
    %5139 = vmatpush1.msra.mxu0 %v5138
    %5140 = vmatprep.subr.mxu0 0.0
    %v5141 = vand.u32 %v4991, 4294901760
    %v5142 = vsub.f32 %v4991, %v5141
    %v5143 = vand.u32 %v5142, 4294901760
    %v5144 = vsub.f32 %v5142, %v5143
    %v5145 = vand.u32 %v5144, 4294901760
    %5146 = vmatpush1.msra.mxu0 %v5145
    %5147 = vmatprep.subr.mxu0 0.0
    %v5148 = vand.u32 %v4992, 4294901760
    %v5149 = vsub.f32 %v4992, %v5148
    %v5150 = vand.u32 %v5149, 4294901760
    %v5151 = vsub.f32 %v5149, %v5150
    %v5152 = vand.u32 %v5151, 4294901760
    %5153 = vmatpush1.msra.mxu0 %v5152
    %5154 = vmatprep.subr.mxu0 0.0
    %v5155 = vand.u32 %v4993, 4294901760
    %v5156 = vsub.f32 %v4993, %v5155
    %v5157 = vand.u32 %v5156, 4294901760
    %v5158 = vsub.f32 %v5156, %v5157
    %v5159 = vand.u32 %v5158, 4294901760
    %5160 = vmatpush1.msra.mxu0 %v5159
    %5161 = vmatprep.subr.mxu0 0.0
    %v5162 = vand.u32 %v4994, 4294901760
    %v5163 = vsub.f32 %v4994, %v5162
    %v5164 = vand.u32 %v5163, 4294901760
    %v5165 = vsub.f32 %v5163, %v5164
    %v5166 = vand.u32 %v5165, 4294901760
    %5167 = vmatpush1.msra.mxu0 %v5166
    %5168 = vmatprep.subr.mxu0 0.0
    %v5169 = vand.u32 %v4995, 4294901760
    %v5170 = vsub.f32 %v4995, %v5169
    %v5171 = vand.u32 %v5170, 4294901760
    %v5172 = vsub.f32 %v5170, %v5171
    %v5173 = vand.u32 %v5172, 4294901760
    %5174 = vmatpush1.msra.mxu0 %v5173
    %5175 = vmatprep.subr.mxu0 0.0
    %v5176 = vand.u32 %v4996, 4294901760
    %v5177 = vsub.f32 %v4996, %v5176
    %v5178 = vand.u32 %v5177, 4294901760
    %v5179 = vsub.f32 %v5177, %v5178
    %v5180 = vand.u32 %v5179, 4294901760
    %5181 = vmatpush1.msra.mxu0 %v5180
    %5182 = vmatprep.subr.mxu0 0.0
    %v5183 = vand.u32 %v4997, 4294901760
    %v5184 = vsub.f32 %v4997, %v5183
    %v5185 = vand.u32 %v5184, 4294901760
    %v5186 = vsub.f32 %v5184, %v5185
    %v5187 = vand.u32 %v5186, 4294901760
    %5188 = vmatpush1.msra.mxu0 %v5187
    %5189 = vmatprep.subr.mxu0 0.0
    %v5190 = vand.u32 %v4998, 4294901760
    %v5191 = vsub.f32 %v4998, %v5190
    %v5192 = vand.u32 %v5191, 4294901760
    %v5193 = vsub.f32 %v5191, %v5192
    %v5194 = vand.u32 %v5193, 4294901760
    %5195 = vmatpush1.msra.mxu0 %v5194
    %5196 = vmatprep.subr.mxu0 0.0
    %v5197 = vand.u32 %v4999, 4294901760
    %v5198 = vsub.f32 %v4999, %v5197
    %v5199 = vand.u32 %v5198, 4294901760
    %v5200 = vsub.f32 %v5198, %v5199
    %v5201 = vand.u32 %v5200, 4294901760
    %5202 = vmatpush1.msra.mxu0 %v5201
    %5203 = vmatprep.subr.mxu0 0.0
    %v5204 = vand.u32 %v5000, 4294901760
    %v5205 = vsub.f32 %v5000, %v5204
    %v5206 = vand.u32 %v5205, 4294901760
    %v5207 = vsub.f32 %v5205, %v5206
    %v5208 = vand.u32 %v5207, 4294901760
    %5209 = vmatpush1.msra.mxu0 %v5208
    %5210 = vmatprep.subr.mxu0 0.0
    %v5211 = vand.u32 %v5001, 4294901760
    %v5212 = vsub.f32 %v5001, %v5211
    %v5213 = vand.u32 %v5212, 4294901760
    %v5214 = vsub.f32 %v5212, %v5213
    %v5215 = vand.u32 %v5214, 4294901760
    %5216 = vmatpush1.msra.mxu0 %v5215
    %5217 = vmatprep.subr.mxu0 0.0
    %v5218 = vand.u32 %v5002, 4294901760
    %v5219 = vsub.f32 %v5002, %v5218
    %v5220 = vand.u32 %v5219, 4294901760
    %v5221 = vsub.f32 %v5219, %v5220
    %v5222 = vand.u32 %v5221, 4294901760
    %5223 = vmatpush1.msra.mxu0 %v5222
    %5224 = vmatprep.subr.mxu0 0.0
    %v5225 = vand.u32 %v5003, 4294901760
    %v5226 = vsub.f32 %v5003, %v5225
    %v5227 = vand.u32 %v5226, 4294901760
    %v5228 = vsub.f32 %v5226, %v5227
    %v5229 = vand.u32 %v5228, 4294901760
    %5230 = vmatpush1.msra.mxu0 %v5229
    %5231 = vmatprep.subr.mxu0 0.0
    %v5232 = vand.u32 %v5004, 4294901760
    %v5233 = vsub.f32 %v5004, %v5232
    %v5234 = vand.u32 %v5233, 4294901760
    %v5235 = vsub.f32 %v5233, %v5234
    %v5236 = vand.u32 %v5235, 4294901760
    %5237 = vmatpush1.msra.mxu0 %v5236
    %5238 = vmatprep.subr.mxu0 0.0
    %v5239 = vand.u32 %v5011, 4294901760
    %v5240 = vsub.f32 %v5011, %v5239
    %v5241 = vand.u32 %v5240, 4294901760
    %v5242 = vsub.f32 %v5240, %v5241
    %v5243 = vand.u32 %v5242, 4294901760
    %5244 = vmatpush1.msra.mxu0 %v5243
    %5245 = vmatprep.subr.mxu0 0.0
    %5246 = vmatpush1.msra.mxu0 0.0
    %5247 = vmatprep.subr.mxu0 0.0
    %5248 = vmatpush1.msra.mxu0 0.0
    %5249 = vmatprep.subr.mxu0 0.0
    %5250 = vmatpush1.msra.mxu0 0.0
    %5251 = vmatprep.subr.mxu0 0.0
    %5252 = vmatpush1.msra.mxu0 0.0
    %5253 = vmatprep.subr.mxu0 0.0
    %5254 = vmatpush1.msra.mxu0 0.0
    %5255 = vmatprep.subr.mxu0 0.0
    %5256 = vmatpush1.msra.mxu0 0.0
    %5257 = vmatprep.subr.mxu0 0.0
    %5258 = vmatpush1.msra.mxu0 0.0
    %5259 = vmatprep.subr.mxu0 0.0
    %5260 = vmatpush1.msra.mxu0 0.0
    %5261 = vmatprep.subr.mxu0 0.0
    %5262 = vmatpush1.msra.mxu0 0.0
    %5263 = vmatprep.subr.mxu0 0.0
    %5264 = vmatpush1.msra.mxu0 0.0
    %5265 = vmatprep.subr.mxu0 0.0
    %5266 = vmatpush1.msra.mxu0 0.0
    %5267 = vmatprep.subr.mxu0 0.0
    %5268 = vmatpush1.msra.mxu0 0.0
    %5269 = vmatprep.subr.mxu0 0.0
    %5270 = vmatpush1.msra.mxu0 0.0
    %v5271 = vand.u32 %v5008, 4294901760
    %5272 = vmatprep.mubr.f32.mxu0 %v5271
    %v5273 = vand.u32 %v4975, 4294901760
    %5274 = vmatmul.mubr.f32.gmra.mrb[0].mxu0 %v5273
    %v5275 = vpop.f32.mrb[0].mxu0
    %v5276 = vadd.f32 %v5109, %v5275
    %v5277 = vpop.f32.mrb[0].mxu0
    %5278 = vdwg.mxu0
    %5279 = vmatprep.subr.mxu0 0.0
    %v5280 = vand.u32 %v4987, 4294901760
    %v5281 = vsub.f32 %v4987, %v5280
    %5282 = vmatpush1.msra.mxu0 %v5281
    %5283 = vmatprep.subr.mxu0 0.0
    %v5284 = vand.u32 %v4988, 4294901760
    %v5285 = vsub.f32 %v4988, %v5284
    %5286 = vmatpush1.msra.mxu0 %v5285
    %5287 = vmatprep.subr.mxu0 0.0
    %v5288 = vand.u32 %v4989, 4294901760
    %v5289 = vsub.f32 %v4989, %v5288
    %5290 = vmatpush1.msra.mxu0 %v5289
    %5291 = vmatprep.subr.mxu0 0.0
    %v5292 = vand.u32 %v4990, 4294901760
    %v5293 = vsub.f32 %v4990, %v5292
    %5294 = vmatpush1.msra.mxu0 %v5293
    %5295 = vmatprep.subr.mxu0 0.0
    %v5296 = vand.u32 %v4991, 4294901760
    %v5297 = vsub.f32 %v4991, %v5296
    %5298 = vmatpush1.msra.mxu0 %v5297
    %5299 = vmatprep.subr.mxu0 0.0
    %v5300 = vand.u32 %v4992, 4294901760
    %v5301 = vsub.f32 %v4992, %v5300
    %5302 = vmatpush1.msra.mxu0 %v5301
    %5303 = vmatprep.subr.mxu0 0.0
    %v5304 = vand.u32 %v4993, 4294901760
    %v5305 = vsub.f32 %v4993, %v5304
    %5306 = vmatpush1.msra.mxu0 %v5305
    %5307 = vmatprep.subr.mxu0 0.0
    %v5308 = vand.u32 %v4994, 4294901760
    %v5309 = vsub.f32 %v4994, %v5308
    %5310 = vmatpush1.msra.mxu0 %v5309
    %5311 = vmatprep.subr.mxu0 0.0
    %v5312 = vand.u32 %v4995, 4294901760
    %v5313 = vsub.f32 %v4995, %v5312
    %5314 = vmatpush1.msra.mxu0 %v5313
    %5315 = vmatprep.subr.mxu0 0.0
    %v5316 = vand.u32 %v4996, 4294901760
    %v5317 = vsub.f32 %v4996, %v5316
    %5318 = vmatpush1.msra.mxu0 %v5317
    %5319 = vmatprep.subr.mxu0 0.0
    %v5320 = vand.u32 %v4997, 4294901760
    %v5321 = vsub.f32 %v4997, %v5320
    %5322 = vmatpush1.msra.mxu0 %v5321
    %5323 = vmatprep.subr.mxu0 0.0
    %v5324 = vand.u32 %v4998, 4294901760
    %v5325 = vsub.f32 %v4998, %v5324
    %5326 = vmatpush1.msra.mxu0 %v5325
    %5327 = vmatprep.subr.mxu0 0.0
    %v5328 = vand.u32 %v4999, 4294901760
    %v5329 = vsub.f32 %v4999, %v5328
    %5330 = vmatpush1.msra.mxu0 %v5329
    %5331 = vmatprep.subr.mxu0 0.0
    %v5332 = vand.u32 %v5000, 4294901760
    %v5333 = vsub.f32 %v5000, %v5332
    %5334 = vmatpush1.msra.mxu0 %v5333
    %5335 = vmatprep.subr.mxu0 0.0
    %v5336 = vand.u32 %v5001, 4294901760
    %v5337 = vsub.f32 %v5001, %v5336
    %5338 = vmatpush1.msra.mxu0 %v5337
    %5339 = vmatprep.subr.mxu0 0.0
    %v5340 = vand.u32 %v5002, 4294901760
    %v5341 = vsub.f32 %v5002, %v5340
    %5342 = vmatpush1.msra.mxu0 %v5341
    %5343 = vmatprep.subr.mxu0 0.0
    %v5344 = vand.u32 %v5003, 4294901760
    %v5345 = vsub.f32 %v5003, %v5344
    %5346 = vmatpush1.msra.mxu0 %v5345
    %5347 = vmatprep.subr.mxu0 0.0
    %v5348 = vand.u32 %v5004, 4294901760
    %v5349 = vsub.f32 %v5004, %v5348
    %5350 = vmatpush1.msra.mxu0 %v5349
    %5351 = vmatprep.subr.mxu0 0.0
    %v5352 = vand.u32 %v5011, 4294901760
    %v5353 = vsub.f32 %v5011, %v5352
    %5354 = vmatpush1.msra.mxu0 %v5353
    %5355 = vmatprep.subr.mxu0 0.0
    %5356 = vmatpush1.msra.mxu0 0.0
    %5357 = vmatprep.subr.mxu0 0.0
    %5358 = vmatpush1.msra.mxu0 0.0
    %5359 = vmatprep.subr.mxu0 0.0
    %5360 = vmatpush1.msra.mxu0 0.0
    %5361 = vmatprep.subr.mxu0 0.0
    %5362 = vmatpush1.msra.mxu0 0.0
    %5363 = vmatprep.subr.mxu0 0.0
    %5364 = vmatpush1.msra.mxu0 0.0
    %5365 = vmatprep.subr.mxu0 0.0
    %5366 = vmatpush1.msra.mxu0 0.0
    %5367 = vmatprep.subr.mxu0 0.0
    %5368 = vmatpush1.msra.mxu0 0.0
    %5369 = vmatprep.subr.mxu0 0.0
    %5370 = vmatpush1.msra.mxu0 0.0
    %5371 = vmatprep.subr.mxu0 0.0
    %5372 = vmatpush1.msra.mxu0 0.0
    %5373 = vmatprep.subr.mxu0 0.0
    %5374 = vmatpush1.msra.mxu0 0.0
    %5375 = vmatprep.subr.mxu0 0.0
    %5376 = vmatpush1.msra.mxu0 0.0
    %5377 = vmatprep.subr.mxu0 0.0
    %5378 = vmatpush1.msra.mxu0 0.0
    %5379 = vmatprep.subr.mxu0 0.0
    %5380 = vmatpush1.msra.mxu0 0.0
    %v5381 = vand.u32 %v5008, 4294901760
    %v5382 = vsub.f32 %v5008, %v5381
    %5383 = vmatprep.mubr.f32.mxu0 %v5382
    %v5384 = vand.u32 %v4975, 4294901760
    %v5385 = vsub.f32 %v4975, %v5384
    %5386 = vmatmul.mubr.f32.gmra.mrb[0].mxu0 %v5385
    %v5387 = vpop.f32.mrb[0].mxu0
    %v5388 = vadd.f32 %v5276, %v5387
    %v5389 = vpop.f32.mrb[0].mxu0
    %5390 = vdwg.mxu0
    %5391 = vmatprep.subr.mxu0 0.0
    %v5392 = vand.u32 %v4987, 4294901760
    %5393 = vmatpush1.msra.mxu0 %v5392
    %5394 = vmatprep.subr.mxu0 0.0
    %v5395 = vand.u32 %v4988, 4294901760
    %5396 = vmatpush1.msra.mxu0 %v5395
    %5397 = vmatprep.subr.mxu0 0.0
    %v5398 = vand.u32 %v4989, 4294901760
    %5399 = vmatpush1.msra.mxu0 %v5398
    %5400 = vmatprep.subr.mxu0 0.0
    %v5401 = vand.u32 %v4990, 4294901760
    %5402 = vmatpush1.msra.mxu0 %v5401
    %5403 = vmatprep.subr.mxu0 0.0
    %v5404 = vand.u32 %v4991, 4294901760
    %5405 = vmatpush1.msra.mxu0 %v5404
    %5406 = vmatprep.subr.mxu0 0.0
    %v5407 = vand.u32 %v4992, 4294901760
    %5408 = vmatpush1.msra.mxu0 %v5407
    %5409 = vmatprep.subr.mxu0 0.0
    %v5410 = vand.u32 %v4993, 4294901760
    %5411 = vmatpush1.msra.mxu0 %v5410
    %5412 = vmatprep.subr.mxu0 0.0
    %v5413 = vand.u32 %v4994, 4294901760
    %5414 = vmatpush1.msra.mxu0 %v5413
    %5415 = vmatprep.subr.mxu0 0.0
    %v5416 = vand.u32 %v4995, 4294901760
    %5417 = vmatpush1.msra.mxu0 %v5416
    %5418 = vmatprep.subr.mxu0 0.0
    %v5419 = vand.u32 %v4996, 4294901760
    %5420 = vmatpush1.msra.mxu0 %v5419
    %5421 = vmatprep.subr.mxu0 0.0
    %v5422 = vand.u32 %v4997, 4294901760
    %5423 = vmatpush1.msra.mxu0 %v5422
    %5424 = vmatprep.subr.mxu0 0.0
    %v5425 = vand.u32 %v4998, 4294901760
    %5426 = vmatpush1.msra.mxu0 %v5425
    %5427 = vmatprep.subr.mxu0 0.0
    %v5428 = vand.u32 %v4999, 4294901760
    %5429 = vmatpush1.msra.mxu0 %v5428
    %5430 = vmatprep.subr.mxu0 0.0
    %v5431 = vand.u32 %v5000, 4294901760
    %5432 = vmatpush1.msra.mxu0 %v5431
    %5433 = vmatprep.subr.mxu0 0.0
    %v5434 = vand.u32 %v5001, 4294901760
    %5435 = vmatpush1.msra.mxu0 %v5434
    %5436 = vmatprep.subr.mxu0 0.0
    %v5437 = vand.u32 %v5002, 4294901760
    %5438 = vmatpush1.msra.mxu0 %v5437
    %5439 = vmatprep.subr.mxu0 0.0
    %v5440 = vand.u32 %v5003, 4294901760
    %5441 = vmatpush1.msra.mxu0 %v5440
    %5442 = vmatprep.subr.mxu0 0.0
    %v5443 = vand.u32 %v5004, 4294901760
    %5444 = vmatpush1.msra.mxu0 %v5443
    %5445 = vmatprep.subr.mxu0 0.0
    %v5446 = vand.u32 %v5011, 4294901760
    %5447 = vmatpush1.msra.mxu0 %v5446
    %5448 = vmatprep.subr.mxu0 0.0
    %5449 = vmatpush1.msra.mxu0 0.0
    %5450 = vmatprep.subr.mxu0 0.0
    %5451 = vmatpush1.msra.mxu0 0.0
    %5452 = vmatprep.subr.mxu0 0.0
    %5453 = vmatpush1.msra.mxu0 0.0
    %5454 = vmatprep.subr.mxu0 0.0
    %5455 = vmatpush1.msra.mxu0 0.0
    %5456 = vmatprep.subr.mxu0 0.0
    %5457 = vmatpush1.msra.mxu0 0.0
    %5458 = vmatprep.subr.mxu0 0.0
    %5459 = vmatpush1.msra.mxu0 0.0
    %5460 = vmatprep.subr.mxu0 0.0
    %5461 = vmatpush1.msra.mxu0 0.0
    %5462 = vmatprep.subr.mxu0 0.0
    %5463 = vmatpush1.msra.mxu0 0.0
    %5464 = vmatprep.subr.mxu0 0.0
    %5465 = vmatpush1.msra.mxu0 0.0
    %5466 = vmatprep.subr.mxu0 0.0
    %5467 = vmatpush1.msra.mxu0 0.0
    %5468 = vmatprep.subr.mxu0 0.0
    %5469 = vmatpush1.msra.mxu0 0.0
    %5470 = vmatprep.subr.mxu0 0.0
    %5471 = vmatpush1.msra.mxu0 0.0
    %5472 = vmatprep.subr.mxu0 0.0
    %5473 = vmatpush1.msra.mxu0 0.0
    %v5474 = vand.u32 %v5008, 4294901760
    %v5475 = vsub.f32 %v5008, %v5474
    %v5476 = vand.u32 %v5475, 4294901760
    %5477 = vmatprep.mubr.f32.mxu0 %v5476
    %v5478 = vand.u32 %v4975, 4294901760
    %v5479 = vsub.f32 %v4975, %v5478
    %v5480 = vand.u32 %v5479, 4294901760
    %5481 = vmatmul.mubr.f32.gmra.mrb[0].mxu0 %v5480
    %v5482 = vpop.f32.mrb[0].mxu0
    %v5483 = vadd.f32 %v5388, %v5482
    %v5484 = vpop.f32.mrb[0].mxu0
    %5485 = vdwg.mxu0
    %5486 = vmatprep.subr.mxu0 0.0
    %v5487 = vand.u32 %v4987, 4294901760
    %v5488 = vsub.f32 %v4987, %v5487
    %v5489 = vand.u32 %v5488, 4294901760
    %5490 = vmatpush1.msra.mxu0 %v5489
    %5491 = vmatprep.subr.mxu0 0.0
    %v5492 = vand.u32 %v4988, 4294901760
    %v5493 = vsub.f32 %v4988, %v5492
    %v5494 = vand.u32 %v5493, 4294901760
    %5495 = vmatpush1.msra.mxu0 %v5494
    %5496 = vmatprep.subr.mxu0 0.0
    %v5497 = vand.u32 %v4989, 4294901760
    %v5498 = vsub.f32 %v4989, %v5497
    %v5499 = vand.u32 %v5498, 4294901760
    %5500 = vmatpush1.msra.mxu0 %v5499
    %5501 = vmatprep.subr.mxu0 0.0
    %v5502 = vand.u32 %v4990, 4294901760
    %v5503 = vsub.f32 %v4990, %v5502
    %v5504 = vand.u32 %v5503, 4294901760
    %5505 = vmatpush1.msra.mxu0 %v5504
    %5506 = vmatprep.subr.mxu0 0.0
    %v5507 = vand.u32 %v4991, 4294901760
    %v5508 = vsub.f32 %v4991, %v5507
    %v5509 = vand.u32 %v5508, 4294901760
    %5510 = vmatpush1.msra.mxu0 %v5509
    %5511 = vmatprep.subr.mxu0 0.0
    %v5512 = vand.u32 %v4992, 4294901760
    %v5513 = vsub.f32 %v4992, %v5512
    %v5514 = vand.u32 %v5513, 4294901760
    %5515 = vmatpush1.msra.mxu0 %v5514
    %5516 = vmatprep.subr.mxu0 0.0
    %v5517 = vand.u32 %v4993, 4294901760
    %v5518 = vsub.f32 %v4993, %v5517
    %v5519 = vand.u32 %v5518, 4294901760
    %5520 = vmatpush1.msra.mxu0 %v5519
    %5521 = vmatprep.subr.mxu0 0.0
    %v5522 = vand.u32 %v4994, 4294901760
    %v5523 = vsub.f32 %v4994, %v5522
    %v5524 = vand.u32 %v5523, 4294901760
    %5525 = vmatpush1.msra.mxu0 %v5524
    %5526 = vmatprep.subr.mxu0 0.0
    %v5527 = vand.u32 %v4995, 4294901760
    %v5528 = vsub.f32 %v4995, %v5527
    %v5529 = vand.u32 %v5528, 4294901760
    %5530 = vmatpush1.msra.mxu0 %v5529
    %5531 = vmatprep.subr.mxu0 0.0
    %v5532 = vand.u32 %v4996, 4294901760
    %v5533 = vsub.f32 %v4996, %v5532
    %v5534 = vand.u32 %v5533, 4294901760
    %5535 = vmatpush1.msra.mxu0 %v5534
    %5536 = vmatprep.subr.mxu0 0.0
    %v5537 = vand.u32 %v4997, 4294901760
    %v5538 = vsub.f32 %v4997, %v5537
    %v5539 = vand.u32 %v5538, 4294901760
    %5540 = vmatpush1.msra.mxu0 %v5539
    %5541 = vmatprep.subr.mxu0 0.0
    %v5542 = vand.u32 %v4998, 4294901760
    %v5543 = vsub.f32 %v4998, %v5542
    %v5544 = vand.u32 %v5543, 4294901760
    %5545 = vmatpush1.msra.mxu0 %v5544
    %5546 = vmatprep.subr.mxu0 0.0
    %v5547 = vand.u32 %v4999, 4294901760
    %v5548 = vsub.f32 %v4999, %v5547
    %v5549 = vand.u32 %v5548, 4294901760
    %5550 = vmatpush1.msra.mxu0 %v5549
    %5551 = vmatprep.subr.mxu0 0.0
    %v5552 = vand.u32 %v5000, 4294901760
    %v5553 = vsub.f32 %v5000, %v5552
    %v5554 = vand.u32 %v5553, 4294901760
    %5555 = vmatpush1.msra.mxu0 %v5554
    %5556 = vmatprep.subr.mxu0 0.0
    %v5557 = vand.u32 %v5001, 4294901760
    %v5558 = vsub.f32 %v5001, %v5557
    %v5559 = vand.u32 %v5558, 4294901760
    %5560 = vmatpush1.msra.mxu0 %v5559
    %5561 = vmatprep.subr.mxu0 0.0
    %v5562 = vand.u32 %v5002, 4294901760
    %v5563 = vsub.f32 %v5002, %v5562
    %v5564 = vand.u32 %v5563, 4294901760
    %5565 = vmatpush1.msra.mxu0 %v5564
    %5566 = vmatprep.subr.mxu0 0.0
    %v5567 = vand.u32 %v5003, 4294901760
    %v5568 = vsub.f32 %v5003, %v5567
    %v5569 = vand.u32 %v5568, 4294901760
    %5570 = vmatpush1.msra.mxu0 %v5569
    %5571 = vmatprep.subr.mxu0 0.0
    %v5572 = vand.u32 %v5004, 4294901760
    %v5573 = vsub.f32 %v5004, %v5572
    %v5574 = vand.u32 %v5573, 4294901760
    %5575 = vmatpush1.msra.mxu0 %v5574
    %5576 = vmatprep.subr.mxu0 0.0
    %v5577 = vand.u32 %v5011, 4294901760
    %v5578 = vsub.f32 %v5011, %v5577
    %v5579 = vand.u32 %v5578, 4294901760
    %5580 = vmatpush1.msra.mxu0 %v5579
    %5581 = vmatprep.subr.mxu0 0.0
    %5582 = vmatpush1.msra.mxu0 0.0
    %5583 = vmatprep.subr.mxu0 0.0
    %5584 = vmatpush1.msra.mxu0 0.0
    %5585 = vmatprep.subr.mxu0 0.0
    %5586 = vmatpush1.msra.mxu0 0.0
    %5587 = vmatprep.subr.mxu0 0.0
    %5588 = vmatpush1.msra.mxu0 0.0
    %5589 = vmatprep.subr.mxu0 0.0
    %5590 = vmatpush1.msra.mxu0 0.0
    %5591 = vmatprep.subr.mxu0 0.0
    %5592 = vmatpush1.msra.mxu0 0.0
    %5593 = vmatprep.subr.mxu0 0.0
    %5594 = vmatpush1.msra.mxu0 0.0
    %5595 = vmatprep.subr.mxu0 0.0
    %5596 = vmatpush1.msra.mxu0 0.0
    %5597 = vmatprep.subr.mxu0 0.0
    %5598 = vmatpush1.msra.mxu0 0.0
    %5599 = vmatprep.subr.mxu0 0.0
    %5600 = vmatpush1.msra.mxu0 0.0
    %5601 = vmatprep.subr.mxu0 0.0
    %5602 = vmatpush1.msra.mxu0 0.0
    %5603 = vmatprep.subr.mxu0 0.0
    %5604 = vmatpush1.msra.mxu0 0.0
    %5605 = vmatprep.subr.mxu0 0.0
    %5606 = vmatpush1.msra.mxu0 0.0
    %v5607 = vand.u32 %v5008, 4294901760
    %5608 = vmatprep.mubr.f32.mxu0 %v5607
    %v5609 = vand.u32 %v4975, 4294901760
    %5610 = vmatmul.mubr.f32.gmra.mrb[0].mxu0 %v5609
    %v5611 = vpop.f32.mrb[0].mxu0
    %v5612 = vadd.f32 %v5483, %v5611
    %v5613 = vpop.f32.mrb[0].mxu0
    %5614 = vdwg.mxu0
    %5615 = vmatprep.subr.mxu0 0.0
    %v5616 = vand.u32 %v4987, 4294901760
    %5617 = vmatpush1.msra.mxu0 %v5616
    %5618 = vmatprep.subr.mxu0 0.0
    %v5619 = vand.u32 %v4988, 4294901760
    %5620 = vmatpush1.msra.mxu0 %v5619
    %5621 = vmatprep.subr.mxu0 0.0
    %v5622 = vand.u32 %v4989, 4294901760
    %5623 = vmatpush1.msra.mxu0 %v5622
    %5624 = vmatprep.subr.mxu0 0.0
    %v5625 = vand.u32 %v4990, 4294901760
    %5626 = vmatpush1.msra.mxu0 %v5625
    %5627 = vmatprep.subr.mxu0 0.0
    %v5628 = vand.u32 %v4991, 4294901760
    %5629 = vmatpush1.msra.mxu0 %v5628
    %5630 = vmatprep.subr.mxu0 0.0
    %v5631 = vand.u32 %v4992, 4294901760
    %5632 = vmatpush1.msra.mxu0 %v5631
    %5633 = vmatprep.subr.mxu0 0.0
    %v5634 = vand.u32 %v4993, 4294901760
    %5635 = vmatpush1.msra.mxu0 %v5634
    %5636 = vmatprep.subr.mxu0 0.0
    %v5637 = vand.u32 %v4994, 4294901760
    %5638 = vmatpush1.msra.mxu0 %v5637
    %5639 = vmatprep.subr.mxu0 0.0
    %v5640 = vand.u32 %v4995, 4294901760
    %5641 = vmatpush1.msra.mxu0 %v5640
    %5642 = vmatprep.subr.mxu0 0.0
    %v5643 = vand.u32 %v4996, 4294901760
    %5644 = vmatpush1.msra.mxu0 %v5643
    %5645 = vmatprep.subr.mxu0 0.0
    %v5646 = vand.u32 %v4997, 4294901760
    %5647 = vmatpush1.msra.mxu0 %v5646
    %5648 = vmatprep.subr.mxu0 0.0
    %v5649 = vand.u32 %v4998, 4294901760
    %5650 = vmatpush1.msra.mxu0 %v5649
    %5651 = vmatprep.subr.mxu0 0.0
    %v5652 = vand.u32 %v4999, 4294901760
    %5653 = vmatpush1.msra.mxu0 %v5652
    %5654 = vmatprep.subr.mxu0 0.0
    %v5655 = vand.u32 %v5000, 4294901760
    %5656 = vmatpush1.msra.mxu0 %v5655
    %5657 = vmatprep.subr.mxu0 0.0
    %v5658 = vand.u32 %v5001, 4294901760
    %5659 = vmatpush1.msra.mxu0 %v5658
    %5660 = vmatprep.subr.mxu0 0.0
    %v5661 = vand.u32 %v5002, 4294901760
    %5662 = vmatpush1.msra.mxu0 %v5661
    %5663 = vmatprep.subr.mxu0 0.0
    %v5664 = vand.u32 %v5003, 4294901760
    %5665 = vmatpush1.msra.mxu0 %v5664
    %5666 = vmatprep.subr.mxu0 0.0
    %v5667 = vand.u32 %v5004, 4294901760
    %5668 = vmatpush1.msra.mxu0 %v5667
    %5669 = vmatprep.subr.mxu0 0.0
    %v5670 = vand.u32 %v5011, 4294901760
    %5671 = vmatpush1.msra.mxu0 %v5670
    %5672 = vmatprep.subr.mxu0 0.0
    %5673 = vmatpush1.msra.mxu0 0.0
    %5674 = vmatprep.subr.mxu0 0.0
    %5675 = vmatpush1.msra.mxu0 0.0
    %5676 = vmatprep.subr.mxu0 0.0
    %5677 = vmatpush1.msra.mxu0 0.0
    %5678 = vmatprep.subr.mxu0 0.0
    %5679 = vmatpush1.msra.mxu0 0.0
    %5680 = vmatprep.subr.mxu0 0.0
    %5681 = vmatpush1.msra.mxu0 0.0
    %5682 = vmatprep.subr.mxu0 0.0
    %5683 = vmatpush1.msra.mxu0 0.0
    %5684 = vmatprep.subr.mxu0 0.0
    %5685 = vmatpush1.msra.mxu0 0.0
    %5686 = vmatprep.subr.mxu0 0.0
    %5687 = vmatpush1.msra.mxu0 0.0
    %5688 = vmatprep.subr.mxu0 0.0
    %5689 = vmatpush1.msra.mxu0 0.0
    %5690 = vmatprep.subr.mxu0 0.0
    %5691 = vmatpush1.msra.mxu0 0.0
    %5692 = vmatprep.subr.mxu0 0.0
    %5693 = vmatpush1.msra.mxu0 0.0
    %5694 = vmatprep.subr.mxu0 0.0
    %5695 = vmatpush1.msra.mxu0 0.0
    %5696 = vmatprep.subr.mxu0 0.0
    %5697 = vmatpush1.msra.mxu0 0.0
    %v5698 = vand.u32 %v5008, 4294901760
    %5699 = vmatprep.mubr.f32.mxu0 %v5698
    %v5700 = vand.u32 %v4975, 4294901760
    %5701 = vmatmul.mubr.f32.gmra.mrb[0].mxu0 %v5700
    %v5702 = vpop.f32.mrb[0].mxu0
    %v5703 = vadd.f32 %v5612, %v5702
    %v5704 = vpop.f32.mrb[0].mxu0
    %5705 = vdwg.mxu0
    %vm5706 = vcmask 73728
    %5707 = vst.msk [vmem:[#allocation3] sm:$0x1] %vm5706, %v5703
    // Predicated region
    $region38: #{net_forward.1} parent=1 // pred_check
      _
    $region39: #{net_forward.1} parent=1 // pred_check_branch
      %5709 = sbr.rel (0) target = $region41
    $region40: #{net_forward.1} parent=1 // pred_region
      %s5711 = ssub.s32 16, 16
      %5712 = vsyncadd [#allocation4], %s5711
      %s5714 = sshll.u32 [#allocation3], 4
      %s5715 = int_to_ptr.vmem [resolvable:$true] %s5714
      %5717 = dma.vmem_to_hbm [thread:$0]  %s5715, 16, %s9, [#allocation4]
    $region41: #{net_forward.1} parent=1 // pred_fallthru
      _
    // Predicated region
    $region42: #{net_forward.1} parent=1 // pred_check
      _
    $region43: #{net_forward.1} parent=1 // pred_check_branch
      %5719 = sbr.rel (0) target = $region45
    $region44: #{net_forward.1} parent=1 // pred_region
      %5720 = dma.done [#allocation4], 16
    $region45: #{net_forward.1} parent=1 // pred_fallthru
      _
    %5721 = vsyncpa [#allocation4], 1

</llo_original>
